<compile_context>
chip_gen: v5e
topology: v5e:2x2
jax: 0.10.0
libtpu: 0.0.40
codegen_flags: <defaults>
</compile_context>

<pallas_src>
import functools

import jax
import jax.numpy as jnp
from jax.experimental import pallas as pl
from jax.experimental.pallas import tpu as pltpu

# The halo scratch places the image interior at sublane offset _PAD_W so interior
# stores stay 8-sublane aligned; the 3 kw taps then load at offsets _PAD_W-1+kw.
_PAD_W = 8


def _conv_block_kernel(x_ref, w1_ref, b1_ref, w2_ref, b2_ref, out_ref,
                       xpad_ref, hpad_ref):
    """Fused (conv3x3 + folded-BN + ReLU) x 2 for one batch element.

    x_ref   : (1, H, W, Cin)               input tile (compute dtype)
    w1_ref  : (9*Cin, Cout)                conv1 weights, BN1 scale folded (compute dtype)
    b1_ref  : (1, Cout)                    folded BN1 bias (f32)
    w2_ref  : (9*Cout, Cout)               conv2 weights, BN2 scale folded (compute dtype)
    b2_ref  : (1, Cout)                    folded BN2 bias (f32)
    out_ref : (1, H, W, Cout)              output tile (f32)
    xpad_ref: VMEM (H+2, W+2*_PAD_W, Cin)  f32 zero-filled halo scratch (input)
    hpad_ref: VMEM (H+2, W+2*_PAD_W, Cout) f32 halo scratch (intermediate)
    """
    H = out_ref.shape[1]
    W = out_ref.shape[2]

    def conv3x3_bias_relu(src_ref, w_ref, b_ref):
        # im2col: concatenate the 9 shifted taps along channels and contract
        # against the (9*C, Cout) weight matrix in ONE MXU matmul.
        patch = jnp.concatenate(
            [src_ref[pl.ds(kh, H), pl.ds(_PAD_W - 1 + kw, W), :]
             for kh in range(3) for kw in range(3)],
            axis=-1)                                              # (H, W, 9*C) f32
        acc = jax.lax.dot_general(
            patch.astype(w_ref.dtype), w_ref[...],
            dimension_numbers=(((2,), (0,)), ((), ())),
            preferred_element_type=jnp.float32)                   # (H, W, Cout) f32
        return jnp.maximum(acc + b_ref[...], 0.0)                 # +bias, ReLU (f32)

    # Stage 0: build the zero-padded input halo entirely in VMEM (no HBM pad).
    xpad_ref[...] = jnp.zeros_like(xpad_ref)
    xpad_ref[pl.ds(1, H), pl.ds(_PAD_W, W), :] = x_ref[0].astype(jnp.float32)

    # Stage 1: conv1 + bn1 + relu; intermediate stays resident in VMEM.
    h = conv3x3_bias_relu(xpad_ref, w1_ref, b1_ref)
    hpad_ref[...] = jnp.zeros_like(hpad_ref)
    hpad_ref[pl.ds(1, H), pl.ds(_PAD_W, W), :] = h

    # Stage 2: conv2 + bn2 + relu.
    y = conv3x3_bias_relu(hpad_ref, w2_ref, b2_ref)
    out_ref[0] = y.astype(out_ref.dtype)


def fold_bn_into_conv(w_hwio, gamma, beta, mean, var, eps=1e-5):
    """Fold eval-mode BatchNorm into the preceding (bias-free) conv."""
    scale = gamma / jnp.sqrt(var + eps)                 # (Cout,)
    w_folded = w_hwio * scale[None, None, None, :]      # scale the Cout axis
    bias = beta - mean * scale
    return w_folded, bias


def conv_block_pallas(x_nhwc, w1f, b1, w2f, b2, *, compute_dtype=jnp.bfloat16):
    """Fused double conv. x_nhwc: (N, H, W, Cin) -> (N, H, W, Cout) f32."""
    N, H, W, Cin = x_nhwc.shape
    Cout = w1f.shape[-1]

    x = x_nhwc.astype(compute_dtype)                         # halve HBM read in bf16
    w1r = w1f.reshape(9 * Cin, Cout).astype(compute_dtype)   # (kh, kw, ci) flattened
    w2r = w2f.reshape(9 * Cout, Cout).astype(compute_dtype)
    b1r = b1.reshape(1, Cout).astype(jnp.float32)
    b2r = b2.reshape(1, Cout).astype(jnp.float32)

    pw = W + 2 * _PAD_W
    return pl.pallas_call(
        _conv_block_kernel,
        out_shape=jax.ShapeDtypeStruct((N, H, W, Cout), jnp.float32),
        grid_spec=pltpu.PrefetchScalarGridSpec(
            num_scalar_prefetch=0,
            grid=(N,),
            in_specs=[
                pl.BlockSpec((1, H, W, Cin), lambda n: (n, 0, 0, 0)),
                pl.BlockSpec((9 * Cin, Cout), lambda n: (0, 0)),
                pl.BlockSpec((1, Cout), lambda n: (0, 0)),
                pl.BlockSpec((9 * Cout, Cout), lambda n: (0, 0)),
                pl.BlockSpec((1, Cout), lambda n: (0, 0)),
            ],
            out_specs=pl.BlockSpec((1, H, W, Cout), lambda n: (n, 0, 0, 0)),
            scratch_shapes=[
                pltpu.VMEM((H + 2, pw, Cin), jnp.float32),    # padded input halo
                pltpu.VMEM((H + 2, pw, Cout), jnp.float32),   # padded intermediate
            ],
        ),
        compiler_params=pltpu.CompilerParams(
            dimension_semantics=("parallel",),        # N steps -> megacore on v7x
            vmem_limit_bytes=32 * 1024 * 1024,        # safe on v5e/v6e/v7x
        ),
    )(x, w1r, b1r, w2r, b2r)


def conv_block_forward(x_nchw, params, *, compute_dtype=jnp.bfloat16):
    """ConvBlock forward. x_nchw: (N, Cin, H, W) -> (N, Cout, H, W)."""
    # NCHW <-> NHWC transposes kept only to honor the PyTorch-facing layout; drop
    # them (keep NHWC end-to-end) if the surrounding model is JAX-native.
    x = jnp.transpose(x_nchw, (0, 2, 3, 1))
    w1f, b1 = fold_bn_into_conv(params["w1"], params["gamma1"], params["beta1"],
                                params["mean1"], params["var1"])
    w2f, b2 = fold_bn_into_conv(params["w2"], params["gamma2"], params["beta2"],
                                params["mean2"], params["var2"])
    y = conv_block_pallas(x, w1f, b1, w2f, b2, compute_dtype=compute_dtype)
    return jnp.transpose(y, (0, 3, 1, 2))


def _reference_forward(x_nchw, params):
    """Pure-JAX reference (lax conv) for correctness checking."""
    def one(x, w_hwio, gamma, beta, mean, var):
        xn = jnp.transpose(x, (0, 2, 3, 1))
        y = jax.lax.conv_general_dilated(
            xn, w_hwio, window_strides=(1, 1), padding="SAME",
            dimension_numbers=("NHWC", "HWIO", "NHWC"))
        scale = gamma / jnp.sqrt(var + 1e-5)
        bias = beta - mean * scale
        y = jnp.maximum(y * scale + bias, 0.0)
        return jnp.transpose(y, (0, 3, 1, 2))

    h = one(x_nchw, params["w1"], params["gamma1"], params["beta1"],
            params["mean1"], params["var1"])
    return one(h, params["w2"], params["gamma2"], params["beta2"],
               params["mean2"], params["var2"])


def make_params(key, input_ch, output_ch):
    ks = jax.random.split(key, 8)
    # Conv weights stored HWIO; equivalent to PyTorch (Cout, Cin, 3, 3) permuted.
    w1 = 0.1 * jax.random.normal(ks[0], (3, 3, input_ch, output_ch), jnp.float32)
    w2 = 0.1 * jax.random.normal(ks[1], (3, 3, output_ch, output_ch), jnp.float32)
    return {
        "w1": w1,
        "gamma1": 1.0 + 0.1 * jax.random.normal(ks[2], (output_ch,), jnp.float32),
        "beta1": 0.1 * jax.random.normal(ks[3], (output_ch,), jnp.float32),
        "mean1": 0.05 * jax.random.normal(ks[4], (output_ch,), jnp.float32),
        "var1": 1.0 + 0.1 * jax.random.uniform(ks[5], (output_ch,), jnp.float32),
        "w2": w2,
        "gamma2": 1.0 + 0.1 * jax.random.normal(ks[6], (output_ch,), jnp.float32),
        "beta2": 0.1 * jax.random.normal(ks[7], (output_ch,), jnp.float32),
        "mean2": jnp.zeros((output_ch,), jnp.float32),
        "var2": jnp.ones((output_ch,), jnp.float32),
    }


if __name__ == "__main__":
    key = jax.random.PRNGKey(0)
    k_x, k_p = jax.random.split(key)

    N, Cin, Cout, H, W = 2, 4, 8, 16, 16
    x = jax.random.normal(k_x, (N, Cin, H, W), jnp.float32)
    params = make_params(k_p, Cin, Cout)

    ref = _reference_forward(x, params)

    # Exact path: f32 MXU operands.
    fwd_f32 = jax.jit(functools.partial(conv_block_forward,
                                        compute_dtype=jnp.float32))
    out_f32 = jax.block_until_ready(fwd_f32(x, params))
    assert out_f32.shape == (N, Cout, H, W)
    assert jnp.allclose(out_f32, ref, atol=1e-4, rtol=1e-4), "f32 mismatch vs reference"

    # Production path: bf16 MXU operands, f32 accumulation + epilogue (v6e/v7x).
    fwd_bf16 = jax.jit(functools.partial(conv_block_forward,
                                         compute_dtype=jnp.bfloat16))
    out_bf16 = jax.block_until_ready(fwd_bf16(x, params))
    assert jnp.allclose(out_bf16, ref, atol=5e-2, rtol=5e-2), "bf16 mismatch vs reference"

    print("KERNEL_OK")
</pallas_src>

<mosaic_0001>
module attributes {stable_mosaic.version = 11 : i64} {
  func.func @_conv_block_kernel(%arg0: i32, %arg1: memref<1x16x16x4xf32, #tpu.memory_space<vmem>>, %arg2: memref<36x8xf32, #tpu.memory_space<vmem>>, %arg3: memref<1x8xf32, #tpu.memory_space<vmem>>, %arg4: memref<72x8xf32, #tpu.memory_space<vmem>>, %arg5: memref<1x8xf32, #tpu.memory_space<vmem>>, %arg6: memref<1x16x16x8xf32, #tpu.memory_space<vmem>>, %arg7: memref<18x32x4xf32, #tpu.memory_space<vmem>>, %arg8: memref<18x32x8xf32, #tpu.memory_space<vmem>>) attributes {dimension_semantics = [#tpu.dimension_semantics<parallel>], iteration_bounds = array<i64: 2>, scalar_prefetch = 0 : i64, scratch_operands = 2 : i64, tpu.core_type = #tpu.core_type<tc>, window_params = [{transform_indices = @transform_0, window_bounds = array<i64: 1, 16, 16, 4>}, {pipeline_mode = #tpu.pipeline_mode<synchronous>, transform_indices = @transform_1, window_bounds = array<i64: 36, 8>}, {pipeline_mode = #tpu.pipeline_mode<synchronous>, transform_indices = @transform_2, window_bounds = array<i64: 1, 8>}, {pipeline_mode = #tpu.pipeline_mode<synchronous>, transform_indices = @transform_3, window_bounds = array<i64: 72, 8>}, {pipeline_mode = #tpu.pipeline_mode<synchronous>, transform_indices = @transform_4, window_bounds = array<i64: 1, 8>}, {transform_indices = @transform_5, window_bounds = array<i64: 1, 16, 16, 8>}]} {
    %cst = arith.constant 0.000000e+00 : f32
    %0 = vector.broadcast %cst : f32 to vector<18x32x4xf32>
    %c0 = arith.constant 0 : index
    %c0_0 = arith.constant 0 : index
    %c0_1 = arith.constant 0 : index
    %1 = vector.load %arg7[%c0, %c0_0, %c0_1] : memref<18x32x4xf32, #tpu.memory_space<vmem>>, vector<18x32x4xf32>
    tpu.vector_store %arg7[%c0, %c0_0, %c0_1], %0 {strides = array<i32>} : memref<18x32x4xf32, #tpu.memory_space<vmem>>, vector<18x32x4xf32>,
    %c0_2 = arith.constant 0 : index
    %c0_3 = arith.constant 0 : index
    %c0_4 = arith.constant 0 : index
    %c0_5 = arith.constant 0 : index
    %2 = vector.load %arg1[%c0_2, %c0_3, %c0_4, %c0_5] : memref<1x16x16x4xf32, #tpu.memory_space<vmem>>, vector<1x16x16x4xf32>
    %3 = vector.shape_cast %2 : vector<1x16x16x4xf32> to vector<16x16x4xf32>
    %c1 = arith.constant 1 : index
    %c8 = arith.constant 8 : index
    %c0_6 = arith.constant 0 : index
    %4 = vector.load %arg7[%c1, %c8, %c0_6] : memref<18x32x4xf32, #tpu.memory_space<vmem>>, vector<16x16x4xf32>
    tpu.vector_store %arg7[%c1, %c8, %c0_6], %3 {strides = array<i32>} : memref<18x32x4xf32, #tpu.memory_space<vmem>>, vector<16x16x4xf32>,
    %c0_7 = arith.constant 0 : index
    %c7 = arith.constant 7 : index
    %c0_8 = arith.constant 0 : index
    %5 = vector.load %arg7[%c0_7, %c7, %c0_8] : memref<18x32x4xf32, #tpu.memory_space<vmem>>, vector<16x16x4xf32>
    %c0_9 = arith.constant 0 : index
    %c8_10 = arith.constant 8 : index
    %c0_11 = arith.constant 0 : index
    %6 = vector.load %arg7[%c0_9, %c8_10, %c0_11] : memref<18x32x4xf32, #tpu.memory_space<vmem>>, vector<16x16x4xf32>
    %c0_12 = arith.constant 0 : index
    %c9 = arith.constant 9 : index
    %c0_13 = arith.constant 0 : index
    %7 = vector.load %arg7[%c0_12, %c9, %c0_13] : memref<18x32x4xf32, #tpu.memory_space<vmem>>, vector<16x16x4xf32>
    %c1_14 = arith.constant 1 : index
    %c7_15 = arith.constant 7 : index
    %c0_16 = arith.constant 0 : index
    %8 = vector.load %arg7[%c1_14, %c7_15, %c0_16] : memref<18x32x4xf32, #tpu.memory_space<vmem>>, vector<16x16x4xf32>
    %c1_17 = arith.constant 1 : index
    %c8_18 = arith.constant 8 : index
    %c0_19 = arith.constant 0 : index
    %9 = vector.load %arg7[%c1_17, %c8_18, %c0_19] : memref<18x32x4xf32, #tpu.memory_space<vmem>>, vector<16x16x4xf32>
    %c1_20 = arith.constant 1 : index
    %c9_21 = arith.constant 9 : index
    %c0_22 = arith.constant 0 : index
    %10 = vector.load %arg7[%c1_20, %c9_21, %c0_22] : memref<18x32x4xf32, #tpu.memory_space<vmem>>, vector<16x16x4xf32>
    %c2 = arith.constant 2 : index
    %c7_23 = arith.constant 7 : index
    %c0_24 = arith.constant 0 : index
    %11 = vector.load %arg7[%c2, %c7_23, %c0_24] : memref<18x32x4xf32, #tpu.memory_space<vmem>>, vector<16x16x4xf32>
    %c2_25 = arith.constant 2 : index
    %c8_26 = arith.constant 8 : index
    %c0_27 = arith.constant 0 : index
    %12 = vector.load %arg7[%c2_25, %c8_26, %c0_27] : memref<18x32x4xf32, #tpu.memory_space<vmem>>, vector<16x16x4xf32>
    %c2_28 = arith.constant 2 : index
    %c9_29 = arith.constant 9 : index
    %c0_30 = arith.constant 0 : index
    %13 = vector.load %arg7[%c2_28, %c9_29, %c0_30] : memref<18x32x4xf32, #tpu.memory_space<vmem>>, vector<16x16x4xf32>
    %14 = tpu.concatenate %5, %6, %7, %8, %9, %10, %11, %12, %13 in 2 : vector<16x16x4xf32>, vector<16x16x4xf32>, vector<16x16x4xf32>, vector<16x16x4xf32>, vector<16x16x4xf32>, vector<16x16x4xf32>, vector<16x16x4xf32>, vector<16x16x4xf32>, vector<16x16x4xf32> -> vector<16x16x36xf32>
    %c0_31 = arith.constant 0 : index
    %c0_32 = arith.constant 0 : index
    %15 = vector.load %arg2[%c0_31, %c0_32] : memref<36x8xf32, #tpu.memory_space<vmem>>, vector<36x8xf32>
    %cst_33 = arith.constant dense<0.000000e+00> : vector<16x16x8xf32>
    %16 = tpu.matmul %14, %15, %cst_33 {dimension_numbers = #tpu.dot_dimension_numbers<[2], [0], [0, 1], [1], [0, 0, 0, 1, 1, 1], [], []>} : vector<16x16x36xf32>, vector<36x8xf32>, vector<16x16x8xf32> -> vector<16x16x8xf32>
    %c0_34 = arith.constant 0 : index
    %c0_35 = arith.constant 0 : index
    %17 = vector.load %arg3[%c0_34, %c0_35] : memref<1x8xf32, #tpu.memory_space<vmem>>, vector<1x8xf32>
    %18 = vector.shape_cast %17 : vector<1x8xf32> to vector<1x1x8xf32>
    %19 = vector.broadcast %18 : vector<1x1x8xf32> to vector<16x16x8xf32>
    %20 = arith.addf %16, %19 : vector<16x16x8xf32>
    %cst_36 = arith.constant 0.000000e+00 : f32
    %21 = vector.broadcast %cst_36 : f32 to vector<16x16x8xf32>
    %22 = arith.maximumf %20, %21 : vector<16x16x8xf32>
    %cst_37 = arith.constant 0.000000e+00 : f32
    %23 = vector.broadcast %cst_37 : f32 to vector<18x32x8xf32>
    %c0_38 = arith.constant 0 : index
    %c0_39 = arith.constant 0 : index
    %c0_40 = arith.constant 0 : index
    %24 = vector.load %arg8[%c0_38, %c0_39, %c0_40] : memref<18x32x8xf32, #tpu.memory_space<vmem>>, vector<18x32x8xf32>
    tpu.vector_store %arg8[%c0_38, %c0_39, %c0_40], %23 {strides = array<i32>} : memref<18x32x8xf32, #tpu.memory_space<vmem>>, vector<18x32x8xf32>,
    %c1_41 = arith.constant 1 : index
    %c8_42 = arith.constant 8 : index
    %c0_43 = arith.constant 0 : index
    %25 = vector.load %arg8[%c1_41, %c8_42, %c0_43] : memref<18x32x8xf32, #tpu.memory_space<vmem>>, vector<16x16x8xf32>
    tpu.vector_store %arg8[%c1_41, %c8_42, %c0_43], %22 {strides = array<i32>} : memref<18x32x8xf32, #tpu.memory_space<vmem>>, vector<16x16x8xf32>,
    %c0_44 = arith.constant 0 : index
    %c7_45 = arith.constant 7 : index
    %c0_46 = arith.constant 0 : index
    %26 = vector.load %arg8[%c0_44, %c7_45, %c0_46] : memref<18x32x8xf32, #tpu.memory_space<vmem>>, vector<16x16x8xf32>
    %c0_47 = arith.constant 0 : index
    %c8_48 = arith.constant 8 : index
    %c0_49 = arith.constant 0 : index
    %27 = vector.load %arg8[%c0_47, %c8_48, %c0_49] : memref<18x32x8xf32, #tpu.memory_space<vmem>>, vector<16x16x8xf32>
    %c0_50 = arith.constant 0 : index
    %c9_51 = arith.constant 9 : index
    %c0_52 = arith.constant 0 : index
    %28 = vector.load %arg8[%c0_50, %c9_51, %c0_52] : memref<18x32x8xf32, #tpu.memory_space<vmem>>, vector<16x16x8xf32>
    %c1_53 = arith.constant 1 : index
    %c7_54 = arith.constant 7 : index
    %c0_55 = arith.constant 0 : index
    %29 = vector.load %arg8[%c1_53, %c7_54, %c0_55] : memref<18x32x8xf32, #tpu.memory_space<vmem>>, vector<16x16x8xf32>
    %c1_56 = arith.constant 1 : index
    %c8_57 = arith.constant 8 : index
    %c0_58 = arith.constant 0 : index
    %30 = vector.load %arg8[%c1_56, %c8_57, %c0_58] : memref<18x32x8xf32, #tpu.memory_space<vmem>>, vector<16x16x8xf32>
    %c1_59 = arith.constant 1 : index
    %c9_60 = arith.constant 9 : index
    %c0_61 = arith.constant 0 : index
    %31 = vector.load %arg8[%c1_59, %c9_60, %c0_61] : memref<18x32x8xf32, #tpu.memory_space<vmem>>, vector<16x16x8xf32>
    %c2_62 = arith.constant 2 : index
    %c7_63 = arith.constant 7 : index
    %c0_64 = arith.constant 0 : index
    %32 = vector.load %arg8[%c2_62, %c7_63, %c0_64] : memref<18x32x8xf32, #tpu.memory_space<vmem>>, vector<16x16x8xf32>
    %c2_65 = arith.constant 2 : index
    %c8_66 = arith.constant 8 : index
    %c0_67 = arith.constant 0 : index
    %33 = vector.load %arg8[%c2_65, %c8_66, %c0_67] : memref<18x32x8xf32, #tpu.memory_space<vmem>>, vector<16x16x8xf32>
    %c2_68 = arith.constant 2 : index
    %c9_69 = arith.constant 9 : index
    %c0_70 = arith.constant 0 : index
    %34 = vector.load %arg8[%c2_68, %c9_69, %c0_70] : memref<18x32x8xf32, #tpu.memory_space<vmem>>, vector<16x16x8xf32>
    %35 = tpu.concatenate %26, %27, %28, %29, %30, %31, %32, %33, %34 in 2 : vector<16x16x8xf32>, vector<16x16x8xf32>, vector<16x16x8xf32>, vector<16x16x8xf32>, vector<16x16x8xf32>, vector<16x16x8xf32>, vector<16x16x8xf32>, vector<16x16x8xf32>, vector<16x16x8xf32> -> vector<16x16x72xf32>
    %c0_71 = arith.constant 0 : index
    %c0_72 = arith.constant 0 : index
    %36 = vector.load %arg4[%c0_71, %c0_72] : memref<72x8xf32, #tpu.memory_space<vmem>>, vector<72x8xf32>
    %cst_73 = arith.constant dense<0.000000e+00> : vector<16x16x8xf32>
    %37 = tpu.matmul %35, %36, %cst_73 {dimension_numbers = #tpu.dot_dimension_numbers<[2], [0], [0, 1], [1], [0, 0, 0, 1, 1, 1], [], []>} : vector<16x16x72xf32>, vector<72x8xf32>, vector<16x16x8xf32> -> vector<16x16x8xf32>
    %c0_74 = arith.constant 0 : index
    %c0_75 = arith.constant 0 : index
    %38 = vector.load %arg5[%c0_74, %c0_75] : memref<1x8xf32, #tpu.memory_space<vmem>>, vector<1x8xf32>
    %39 = vector.shape_cast %38 : vector<1x8xf32> to vector<1x1x8xf32>
    %40 = vector.broadcast %39 : vector<1x1x8xf32> to vector<16x16x8xf32>
    %41 = arith.addf %37, %40 : vector<16x16x8xf32>
    %cst_76 = arith.constant 0.000000e+00 : f32
    %42 = vector.broadcast %cst_76 : f32 to vector<16x16x8xf32>
    %43 = arith.maximumf %41, %42 : vector<16x16x8xf32>
    %c0_77 = arith.constant 0 : index
    %c0_78 = arith.constant 0 : index
    %c0_79 = arith.constant 0 : index
    %c0_80 = arith.constant 0 : index
    %44 = vector.load %arg6[%c0_77, %c0_78, %c0_79, %c0_80] : memref<1x16x16x8xf32, #tpu.memory_space<vmem>>, vector<1x16x16x8xf32>
    %45 = vector.shape_cast %44 : vector<1x16x16x8xf32> to vector<16x16x8xf32>
    %46 = vector.shape_cast %43 : vector<16x16x8xf32> to vector<1x16x16x8xf32>
    tpu.vector_store %arg6[%c0_77, %c0_78, %c0_79, %c0_80], %46 {strides = array<i32>} : memref<1x16x16x8xf32, #tpu.memory_space<vmem>>, vector<1x16x16x8xf32>,
    return
  }
  func.func @transform_0(%arg0: i32) -> (i32, i32, i32, i32) {
    %c0_i32 = arith.constant 0 : i32
    %c0_i32_0 = arith.constant 0 : i32
    %c0_i32_1 = arith.constant 0 : i32
    %c0_i32_2 = arith.constant 0 : i32
    return %arg0, %c0_i32, %c0_i32_0, %c0_i32_1 : i32, i32, i32, i32
  }
  func.func @transform_1(%arg0: i32) -> (i32, i32) {
    %c0_i32 = arith.constant 0 : i32
    %c0_i32_0 = arith.constant 0 : i32
    %c0_i32_1 = arith.constant 0 : i32
    return %c0_i32, %c0_i32_0 : i32, i32
  }
  func.func @transform_2(%arg0: i32) -> (i32, i32) {
    %c0_i32 = arith.constant 0 : i32
    %c0_i32_0 = arith.constant 0 : i32
    %c0_i32_1 = arith.constant 0 : i32
    return %c0_i32, %c0_i32_0 : i32, i32
  }
  func.func @transform_3(%arg0: i32) -> (i32, i32) {
    %c0_i32 = arith.constant 0 : i32
    %c0_i32_0 = arith.constant 0 : i32
    %c0_i32_1 = arith.constant 0 : i32
    return %c0_i32, %c0_i32_0 : i32, i32
  }
  func.func @transform_4(%arg0: i32) -> (i32, i32) {
    %c0_i32 = arith.constant 0 : i32
    %c0_i32_0 = arith.constant 0 : i32
    %c0_i32_1 = arith.constant 0 : i32
    return %c0_i32, %c0_i32_0 : i32, i32
  }
  func.func @transform_5(%arg0: i32) -> (i32, i32, i32, i32) {
    %c0_i32 = arith.constant 0 : i32
    %c0_i32_0 = arith.constant 0 : i32
    %c0_i32_1 = arith.constant 0 : i32
    %c0_i32_2 = arith.constant 0 : i32
    return %arg0, %c0_i32, %c0_i32_0, %c0_i32_1 : i32, i32, i32, i32
  }
}

</mosaic_0001>

<llo_original>
// kernel: conv_block_forward.1
$region0: #{conv_block_forward.1}
  #allocation0 [shape = 'u32[]', space=smem, size = 0x4, offset = 0x4, fixed_abs, tag = 'smem constant byte address 0x4 - core index']
  #allocation1 [shape = 'u32[72,128]{1,0:T(1,128)}', space=vmem, size = 0x9000, scoped, tag = 'internal scratch']
  #allocation2 [shape = 'f32[18,32,4]{2,1,0:T(8,128)}', space=vmem, size = 0x48000, scoped, tag = 'scratch operand']
  #allocation3 [shape = 'f32[18,32,8]{2,1,0:T(8,128)}', space=vmem, size = 0x48000, scoped, tag = 'scratch operand']
  %s0 = inlined_call_operand.vmem [shape: f32[2,16,16,4], index: 0, kind: input, shape index: {}]
  %s1 = inlined_call_operand.vmem [shape: f32[36,8], index: 1, kind: input, shape index: {}]
  %s2 = inlined_call_operand.vmem [shape: f32[1,8], index: 2, kind: input, shape index: {}]
  %s3 = inlined_call_operand.vmem [shape: f32[72,8], index: 3, kind: input, shape index: {}]
  %s4 = inlined_call_operand.vmem [shape: f32[1,8], index: 4, kind: input, shape index: {}]
  %s5 = inlined_call_operand.vmem [shape: f32[2,16,16,8], index: 5, kind: output, shape index: {}]
  %s6 = sld [smem:[#allocation0]]
  $region53: #{conv_block_forward.1} parent=0
    _
  %s8 = ssub.s32 1, %s6
  %s9 = scalar_select 0, %s8, %s6
  loop: start=0, step=1, limit=4
  $region2: #{conv_block_forward.1} parent=0 // loop_pre_header
    _
  $region3: #{conv_block_forward.1} parent=0 // loop_header
    %s11 = sphi 0, %s15
    %p12 = scmp.ge.s32.totalorder %s11, 4
    %s21 = sphi 0, %s23
    %s24 = sphi 0, %s21
    %s25 = sphi 0, %s24
    %s41 = sphi 0, %s25
    %s45 = sphi 0, %s45
    %s47 = sphi 0, %s45
    %s48 = sphi 0, %s47
    %s62 = sphi 0, %s48
    %s66 = sphi 0, %s66
    %s68 = sphi 0, %s66
    %s69 = sphi 0, %s68
    %s83 = sphi 0, %s69
    %s87 = sphi 0, %s87
    %s89 = sphi 0, %s87
    %s90 = sphi 0, %s89
    %s104 = sphi 0, %s90
    %s108 = sphi 0, %s108
    %s110 = sphi 0, %s108
    %s111 = sphi 0, %s110
    %s125 = sphi 0, %s111
    %s131 = sphi 0, %s133
    %s134 = sphi 0, %s131
    %s135 = sphi 0, %s134
    %s151 = sphi 0, %s135
  $region4: #{conv_block_forward.1} parent=0 // loop_header_branch
    %14 = sbr.rel (%p12) target = $region8
  $region5: #{conv_block_forward.1} parent=0 // loop_body
    %s16 = ssub.s32 %s11, 1
    %s17 = ssub.s32 %s11, 2
    %s18 = sadd.s32 %s11, 1
    %s19 = ssub.s32 %s11, %s18
    %p20 = scmp.eq.s32.totalorder %s19, 0
    %s22 = sadd.s32 %s21, 1
    %s23 = scalar_select %p20, %s21, %s22
    %p26 = pneg %p20
    %p27 = scmp.eq.s32.totalorder %s11, 1
    %p28 = por %p26, %p27
    %p29 = scmp.ne.s32.totalorder %s21, %s24
    %p30 = scmp.eq.s32.totalorder %s11, 0
    %p31 = por %p29, %p30
    %p32 = scmp.ne.s32.totalorder %s21, %s24
    %p33 = scmp.eq.s32.totalorder %s16, 1
    %p34 = por %p32, %p33
    %p35 = scmp.ne.s32.totalorder %s24, %s25
    %p36 = scmp.eq.s32.totalorder %s16, 0
    %p37 = por %p35, %p36
    %p38 = scmp.ne.s32.totalorder %s24, %s25
    %p39 = scmp.eq.s32.totalorder %s17, 1
    %p40 = por %p38, %p39
    %p42 = scmp.ne.s32.totalorder %s25, %s41
    %p43 = scmp.eq.s32.totalorder %s17, 0
    %p44 = por %p42, %p43
    %s46 = sadd.s32 %s45, 1
    %p49 = scmp.eq.s32.totalorder %s11, 1
    %p50 = scmp.ne.s32.totalorder %s45, %s47
    %p51 = scmp.eq.s32.totalorder %s11, 0
    %p52 = por %p50, %p51
    %p53 = scmp.ne.s32.totalorder %s45, %s47
    %p54 = scmp.eq.s32.totalorder %s16, 1
    %p55 = por %p53, %p54
    %p56 = scmp.ne.s32.totalorder %s47, %s48
    %p57 = scmp.eq.s32.totalorder %s16, 0
    %p58 = por %p56, %p57
    %p59 = scmp.ne.s32.totalorder %s47, %s48
    %p60 = scmp.eq.s32.totalorder %s17, 1
    %p61 = por %p59, %p60
    %p63 = scmp.ne.s32.totalorder %s48, %s62
    %p64 = scmp.eq.s32.totalorder %s17, 0
    %p65 = por %p63, %p64
    %s67 = sadd.s32 %s66, 1
    %p70 = scmp.eq.s32.totalorder %s11, 1
    %p71 = scmp.ne.s32.totalorder %s66, %s68
    %p72 = scmp.eq.s32.totalorder %s11, 0
    %p73 = por %p71, %p72
    %p74 = scmp.ne.s32.totalorder %s66, %s68
    %p75 = scmp.eq.s32.totalorder %s16, 1
    %p76 = por %p74, %p75
    %p77 = scmp.ne.s32.totalorder %s68, %s69
    %p78 = scmp.eq.s32.totalorder %s16, 0
    %p79 = por %p77, %p78
    %p80 = scmp.ne.s32.totalorder %s68, %s69
    %p81 = scmp.eq.s32.totalorder %s17, 1
    %p82 = por %p80, %p81
    %p84 = scmp.ne.s32.totalorder %s69, %s83
    %p85 = scmp.eq.s32.totalorder %s17, 0
    %p86 = por %p84, %p85
    %s88 = sadd.s32 %s87, 1
    %p91 = scmp.eq.s32.totalorder %s11, 1
    %p92 = scmp.ne.s32.totalorder %s87, %s89
    %p93 = scmp.eq.s32.totalorder %s11, 0
    %p94 = por %p92, %p93
    %p95 = scmp.ne.s32.totalorder %s87, %s89
    %p96 = scmp.eq.s32.totalorder %s16, 1
    %p97 = por %p95, %p96
    %p98 = scmp.ne.s32.totalorder %s89, %s90
    %p99 = scmp.eq.s32.totalorder %s16, 0
    %p100 = por %p98, %p99
    %p101 = scmp.ne.s32.totalorder %s89, %s90
    %p102 = scmp.eq.s32.totalorder %s17, 1
    %p103 = por %p101, %p102
    %p105 = scmp.ne.s32.totalorder %s90, %s104
    %p106 = scmp.eq.s32.totalorder %s17, 0
    %p107 = por %p105, %p106
    %s109 = sadd.s32 %s108, 1
    %p112 = scmp.eq.s32.totalorder %s11, 1
    %p113 = scmp.ne.s32.totalorder %s108, %s110
    %p114 = scmp.eq.s32.totalorder %s11, 0
    %p115 = por %p113, %p114
    %p116 = scmp.ne.s32.totalorder %s108, %s110
    %p117 = scmp.eq.s32.totalorder %s16, 1
    %p118 = por %p116, %p117
    %p119 = scmp.ne.s32.totalorder %s110, %s111
    %p120 = scmp.eq.s32.totalorder %s16, 0
    %p121 = por %p119, %p120
    %p122 = scmp.ne.s32.totalorder %s110, %s111
    %p123 = scmp.eq.s32.totalorder %s17, 1
    %p124 = por %p122, %p123
    %p126 = scmp.ne.s32.totalorder %s111, %s125
    %p127 = scmp.eq.s32.totalorder %s17, 0
    %p128 = por %p126, %p127
    %s129 = ssub.s32 %s11, %s18
    %p130 = scmp.eq.s32.totalorder %s129, 0
    %s132 = sadd.s32 %s131, 1
    %s133 = scalar_select %p130, %s131, %s132
    %p136 = pneg %p130
    %p137 = scmp.eq.s32.totalorder %s11, 1
    %p138 = por %p136, %p137
    %p139 = scmp.ne.s32.totalorder %s131, %s134
    %p140 = scmp.eq.s32.totalorder %s11, 0
    %p141 = por %p139, %p140
    %p142 = scmp.ne.s32.totalorder %s131, %s134
    %p143 = scmp.eq.s32.totalorder %s16, 1
    %p144 = por %p142, %p143
    %p145 = scmp.ne.s32.totalorder %s134, %s135
    %p146 = scmp.eq.s32.totalorder %s16, 0
    %p147 = por %p145, %p146
    %p148 = scmp.ne.s32.totalorder %s134, %s135
    %p149 = scmp.eq.s32.totalorder %s17, 1
    %p150 = por %p148, %p149
    %p152 = scmp.ne.s32.totalorder %s135, %s151
    %p153 = scmp.eq.s32.totalorder %s17, 0
    %p154 = por %p152, %p153
    %p155 = scmp.le.s32.totalorder 1, %s11
    %p156 = scmp.lt.s32.totalorder %s11, 3
    %p157 = pnand %p155, %p156
    %p158 = pneg %p157
    // Predicated region
    $region9: #{conv_block_forward.1} parent=5 // pred_check
      _
    $region10: #{conv_block_forward.1} parent=5 // pred_check_branch
      %160 = sbr.rel (%p157) target = $region12
    $region11: #{conv_block_forward.1} parent=5 // pred_region
      %s161 = ssub.s32 %s11, 1
      // Predicated region
      $region13: #{conv_block_forward.1} parent=11 // pred_check
        %p162 = pneg %p58
      $region14: #{conv_block_forward.1} parent=11 // pred_check_branch
        %164 = sbr.rel (%p162) target = $region16
      $region15: #{conv_block_forward.1} parent=11 // pred_region
        _
      $region16: #{conv_block_forward.1} parent=11 // pred_fallthru
        _
      // Predicated region
      $region17: #{conv_block_forward.1} parent=11 // pred_check
        %p165 = pneg %p79
      $region18: #{conv_block_forward.1} parent=11 // pred_check_branch
        %167 = sbr.rel (%p165) target = $region20
      $region19: #{conv_block_forward.1} parent=11 // pred_region
        _
      $region20: #{conv_block_forward.1} parent=11 // pred_fallthru
        _
      // Predicated region
      $region21: #{conv_block_forward.1} parent=11 // pred_check
        %p168 = pneg %p100
      $region22: #{conv_block_forward.1} parent=11 // pred_check_branch
        %170 = sbr.rel (%p168) target = $region24
      $region23: #{conv_block_forward.1} parent=11 // pred_region
        _
      $region24: #{conv_block_forward.1} parent=11 // pred_fallthru
        _
      // Predicated region
      $region25: #{conv_block_forward.1} parent=11 // pred_check
        %p171 = pneg %p121
      $region26: #{conv_block_forward.1} parent=11 // pred_check_branch
        %173 = sbr.rel (%p171) target = $region28
      $region27: #{conv_block_forward.1} parent=11 // pred_region
        _
      $region28: #{conv_block_forward.1} parent=11 // pred_fallthru
        _
    $region12: #{conv_block_forward.1} parent=5 // pred_fallthru
      _
    %p174 = scmp.lt.s32.totalorder %s11, 2
    // Predicated region
    $region29: #{conv_block_forward.1} parent=5 // pred_check
      %p175 = pneg %p174
    $region30: #{conv_block_forward.1} parent=5 // pred_check_branch
      %177 = sbr.rel (%p175) target = $region32
    $region31: #{conv_block_forward.1} parent=5 // pred_region
      // Predicated region
      $region33: #{conv_block_forward.1} parent=31 // pred_check
        %p178 = pneg %p31
      $region34: #{conv_block_forward.1} parent=31 // pred_check_branch
        %180 = sbr.rel (%p178) target = $region36
      $region35: #{conv_block_forward.1} parent=31 // pred_region
        %p181 = scmp.lt.s32.totalorder %s11, 1
        %s182 = scalar_select %p181, %s11, 1
        %s183 = smul.addr %s182, 32
        %s184 = smul.addr %s183, 8
        %s185 = scalar_lea.vmem %s0, %s184
      $region36: #{conv_block_forward.1} parent=31 // pred_fallthru
        _
    $region32: #{conv_block_forward.1} parent=5 // pred_fallthru
      _
    %p186 = scmp.le.s32.totalorder 1, %s11
    %p187 = scmp.lt.s32.totalorder %s11, 3
    %p188 = pnand %p186, %p187
    %p189 = pneg %p188
    // Predicated region
    $region37: #{conv_block_forward.1} parent=5 // pred_check
      _
    $region38: #{conv_block_forward.1} parent=5 // pred_check_branch
      %191 = sbr.rel (%p188) target = $region40
    $region39: #{conv_block_forward.1} parent=5 // pred_region
      %s192 = ssub.s32 %s11, 1
      %p193 = scmp.lt.s32.totalorder %s16, 1
      %s194 = scalar_select %p193, %s16, 1
      %s195 = smul.addr %s194, 32
      %s196 = smul.addr %s195, 8
      %s197 = scalar_lea.vmem %s0, %s196
      %p198 = pneg %p37
      %p199 = pneg %p34
      %p200 = pneg %p58
      %p201 = pneg %p55
      %p202 = pneg %p79
      %p203 = pneg %p76
      %p204 = pneg %p100
      %p205 = pneg %p97
      %p206 = pneg %p121
      %p207 = pneg %p118
      %p208 = pneg %p147
      %p209 = pneg %p144
      %p210 = scmp.lt.s32.totalorder %s16, 1
      %s211 = scalar_select %p210, %s16, 1
      %s212 = smul.addr %s211, 32
      %s213 = smul.addr %s212, 8
      %s214 = scalar_lea.vmem %s5, %s213
      %p215 = scmp.lt.s32.totalorder %s16, 1
      %s216 = scalar_select %p215, %s16, 1
      %s217 = smul.addr %s216, 32
      %s218 = smul.addr %s217, 8
      %s219 = scalar_lea.vmem %s0, %s218
      %p220 = scmp.lt.s32.totalorder %s16, 1
      %s221 = scalar_select %p220, %s16, 1
      %s222 = smul.addr %s221, 32
      %s223 = smul.addr %s222, 8
      %s224 = scalar_lea.vmem %s5, %s223
      %vm225 = vcmask 31744
      %226 = vst.msk [vmem:[#allocation2] sm:$0xff] %vm225, 0.0
      %227 = vst.msk [vmem:[#allocation2 + $0x8] sm:$0xff] %vm225, 0.0
      %228 = vst.msk [vmem:[#allocation2 + $0x10] sm:$0xff] %vm225, 0.0
      %229 = vst.msk [vmem:[#allocation2 + $0x18] sm:$0xff] %vm225, 0.0
      %230 = vst.msk [vmem:[#allocation2 + $0x20] sm:$0xff] %vm225, 0.0
      %231 = vst.msk [vmem:[#allocation2 + $0x28] sm:$0xff] %vm225, 0.0
      %232 = vst.msk [vmem:[#allocation2 + $0x30] sm:$0xff] %vm225, 0.0
      %233 = vst.msk [vmem:[#allocation2 + $0x38] sm:$0xff] %vm225, 0.0
      %234 = vst.msk [vmem:[#allocation2 + $0x40] sm:$0xff] %vm225, 0.0
      %235 = vst.msk [vmem:[#allocation2 + $0x48] sm:$0xff] %vm225, 0.0
      %236 = vst.msk [vmem:[#allocation2 + $0x50] sm:$0xff] %vm225, 0.0
      %237 = vst.msk [vmem:[#allocation2 + $0x58] sm:$0xff] %vm225, 0.0
      %238 = vst.msk [vmem:[#allocation2 + $0x60] sm:$0xff] %vm225, 0.0
      %239 = vst.msk [vmem:[#allocation2 + $0x68] sm:$0xff] %vm225, 0.0
      %240 = vst.msk [vmem:[#allocation2 + $0x70] sm:$0xff] %vm225, 0.0
      %241 = vst.msk [vmem:[#allocation2 + $0x78] sm:$0xff] %vm225, 0.0
      %242 = vst.msk [vmem:[#allocation2 + $0x80] sm:$0xff] %vm225, 0.0
      %243 = vst.msk [vmem:[#allocation2 + $0x88] sm:$0xff] %vm225, 0.0
      %244 = vst.msk [vmem:[#allocation2 + $0x90] sm:$0xff] %vm225, 0.0
      %245 = vst.msk [vmem:[#allocation2 + $0x98] sm:$0xff] %vm225, 0.0
      %246 = vst.msk [vmem:[#allocation2 + $0xa0] sm:$0xff] %vm225, 0.0
      %247 = vst.msk [vmem:[#allocation2 + $0xa8] sm:$0xff] %vm225, 0.0
      %248 = vst.msk [vmem:[#allocation2 + $0xb0] sm:$0xff] %vm225, 0.0
      %249 = vst.msk [vmem:[#allocation2 + $0xb8] sm:$0xff] %vm225, 0.0
      %250 = vst.msk [vmem:[#allocation2 + $0xc0] sm:$0xff] %vm225, 0.0
      %251 = vst.msk [vmem:[#allocation2 + $0xc8] sm:$0xff] %vm225, 0.0
      %252 = vst.msk [vmem:[#allocation2 + $0xd0] sm:$0xff] %vm225, 0.0
      %253 = vst.msk [vmem:[#allocation2 + $0xd8] sm:$0xff] %vm225, 0.0
      %254 = vst.msk [vmem:[#allocation2 + $0xe0] sm:$0xff] %vm225, 0.0
      %255 = vst.msk [vmem:[#allocation2 + $0xe8] sm:$0xff] %vm225, 0.0
      %256 = vst.msk [vmem:[#allocation2 + $0xf0] sm:$0xff] %vm225, 0.0
      %257 = vst.msk [vmem:[#allocation2 + $0xf8] sm:$0xff] %vm225, 0.0
      %258 = vst.msk [vmem:[#allocation2 + $0x100] sm:$0xff] %vm225, 0.0
      %259 = vst.msk [vmem:[#allocation2 + $0x108] sm:$0xff] %vm225, 0.0
      %260 = vst.msk [vmem:[#allocation2 + $0x110] sm:$0xff] %vm225, 0.0
      %261 = vst.msk [vmem:[#allocation2 + $0x118] sm:$0xff] %vm225, 0.0
      %262 = vst.msk [vmem:[#allocation2 + $0x120] sm:$0xff] %vm225, 0.0
      %263 = vst.msk [vmem:[#allocation2 + $0x128] sm:$0xff] %vm225, 0.0
      %264 = vst.msk [vmem:[#allocation2 + $0x130] sm:$0xff] %vm225, 0.0
      %265 = vst.msk [vmem:[#allocation2 + $0x138] sm:$0xff] %vm225, 0.0
      %266 = vst.msk [vmem:[#allocation2 + $0x140] sm:$0xff] %vm225, 0.0
      %267 = vst.msk [vmem:[#allocation2 + $0x148] sm:$0xff] %vm225, 0.0
      %268 = vst.msk [vmem:[#allocation2 + $0x150] sm:$0xff] %vm225, 0.0
      %269 = vst.msk [vmem:[#allocation2 + $0x158] sm:$0xff] %vm225, 0.0
      %270 = vst.msk [vmem:[#allocation2 + $0x160] sm:$0xff] %vm225, 0.0
      %271 = vst.msk [vmem:[#allocation2 + $0x168] sm:$0xff] %vm225, 0.0
      %272 = vst.msk [vmem:[#allocation2 + $0x170] sm:$0xff] %vm225, 0.0
      %273 = vst.msk [vmem:[#allocation2 + $0x178] sm:$0xff] %vm225, 0.0
      %274 = vst.msk [vmem:[#allocation2 + $0x180] sm:$0xff] %vm225, 0.0
      %275 = vst.msk [vmem:[#allocation2 + $0x188] sm:$0xff] %vm225, 0.0
      %276 = vst.msk [vmem:[#allocation2 + $0x190] sm:$0xff] %vm225, 0.0
      %277 = vst.msk [vmem:[#allocation2 + $0x198] sm:$0xff] %vm225, 0.0
      %278 = vst.msk [vmem:[#allocation2 + $0x1a0] sm:$0xff] %vm225, 0.0
      %279 = vst.msk [vmem:[#allocation2 + $0x1a8] sm:$0xff] %vm225, 0.0
      %280 = vst.msk [vmem:[#allocation2 + $0x1b0] sm:$0xff] %vm225, 0.0
      %281 = vst.msk [vmem:[#allocation2 + $0x1b8] sm:$0xff] %vm225, 0.0
      %282 = vst.msk [vmem:[#allocation2 + $0x1c0] sm:$0xff] %vm225, 0.0
      %283 = vst.msk [vmem:[#allocation2 + $0x1c8] sm:$0xff] %vm225, 0.0
      %284 = vst.msk [vmem:[#allocation2 + $0x1d0] sm:$0xff] %vm225, 0.0
      %285 = vst.msk [vmem:[#allocation2 + $0x1d8] sm:$0xff] %vm225, 0.0
      %286 = vst.msk [vmem:[#allocation2 + $0x1e0] sm:$0xff] %vm225, 0.0
      %287 = vst.msk [vmem:[#allocation2 + $0x1e8] sm:$0xff] %vm225, 0.0
      %288 = vst.msk [vmem:[#allocation2 + $0x1f0] sm:$0xff] %vm225, 0.0
      %289 = vst.msk [vmem:[#allocation2 + $0x1f8] sm:$0xff] %vm225, 0.0
      %290 = vst.msk [vmem:[#allocation2 + $0x200] sm:$0xff] %vm225, 0.0
      %291 = vst.msk [vmem:[#allocation2 + $0x208] sm:$0xff] %vm225, 0.0
      %292 = vst.msk [vmem:[#allocation2 + $0x210] sm:$0xff] %vm225, 0.0
      %293 = vst.msk [vmem:[#allocation2 + $0x218] sm:$0xff] %vm225, 0.0
      %294 = vst.msk [vmem:[#allocation2 + $0x220] sm:$0xff] %vm225, 0.0
      %295 = vst.msk [vmem:[#allocation2 + $0x228] sm:$0xff] %vm225, 0.0
      %296 = vst.msk [vmem:[#allocation2 + $0x230] sm:$0xff] %vm225, 0.0
      %297 = vst.msk [vmem:[#allocation2 + $0x238] sm:$0xff] %vm225, 0.0
      %v298 = vld [vmem:[%s219] sm:$0xff]
      %v299 = vld [vmem:[%s219 + $0x8] sm:$0xff]
      %v300 = vld [vmem:[%s219 + $0x10] sm:$0xff]
      %v301 = vld [vmem:[%s219 + $0x18] sm:$0xff]
      %v302 = vld [vmem:[%s219 + $0x20] sm:$0xff]
      %v303 = vld [vmem:[%s219 + $0x28] sm:$0xff]
      %v304 = vld [vmem:[%s219 + $0x30] sm:$0xff]
      %v305 = vld [vmem:[%s219 + $0x38] sm:$0xff]
      %v306 = vld [vmem:[%s219 + $0x40] sm:$0xff]
      %v307 = vld [vmem:[%s219 + $0x48] sm:$0xff]
      %v308 = vld [vmem:[%s219 + $0x50] sm:$0xff]
      %v309 = vld [vmem:[%s219 + $0x58] sm:$0xff]
      %v310 = vld [vmem:[%s219 + $0x60] sm:$0xff]
      %v311 = vld [vmem:[%s219 + $0x68] sm:$0xff]
      %v312 = vld [vmem:[%s219 + $0x70] sm:$0xff]
      %v313 = vld [vmem:[%s219 + $0x78] sm:$0xff]
      %v314 = vld [vmem:[%s219 + $0x80] sm:$0xff]
      %v315 = vld [vmem:[%s219 + $0x88] sm:$0xff]
      %v316 = vld [vmem:[%s219 + $0x90] sm:$0xff]
      %v317 = vld [vmem:[%s219 + $0x98] sm:$0xff]
      %v318 = vld [vmem:[%s219 + $0xa0] sm:$0xff]
      %v319 = vld [vmem:[%s219 + $0xa8] sm:$0xff]
      %v320 = vld [vmem:[%s219 + $0xb0] sm:$0xff]
      %v321 = vld [vmem:[%s219 + $0xb8] sm:$0xff]
      %v322 = vld [vmem:[%s219 + $0xc0] sm:$0xff]
      %v323 = vld [vmem:[%s219 + $0xc8] sm:$0xff]
      %v324 = vld [vmem:[%s219 + $0xd0] sm:$0xff]
      %v325 = vld [vmem:[%s219 + $0xd8] sm:$0xff]
      %v326 = vld [vmem:[%s219 + $0xe0] sm:$0xff]
      %v327 = vld [vmem:[%s219 + $0xe8] sm:$0xff]
      %v328 = vld [vmem:[%s219 + $0xf0] sm:$0xff]
      %v329 = vld [vmem:[%s219 + $0xf8] sm:$0xff]
      %s330 = scalar_lea.vmem [#allocation2], 32
      %331 = vst.msk [vmem:[%s330 + $0x8] sm:$0xff] %vm225, %v298
      %332 = vst.msk [vmem:[%s330 + $0x10] sm:$0xff] %vm225, %v299
      %333 = vst.msk [vmem:[%s330 + $0x28] sm:$0xff] %vm225, %v300
      %334 = vst.msk [vmem:[%s330 + $0x30] sm:$0xff] %vm225, %v301
      %335 = vst.msk [vmem:[%s330 + $0x48] sm:$0xff] %vm225, %v302
      %336 = vst.msk [vmem:[%s330 + $0x50] sm:$0xff] %vm225, %v303
      %337 = vst.msk [vmem:[%s330 + $0x68] sm:$0xff] %vm225, %v304
      %338 = vst.msk [vmem:[%s330 + $0x70] sm:$0xff] %vm225, %v305
      %339 = vst.msk [vmem:[%s330 + $0x88] sm:$0xff] %vm225, %v306
      %340 = vst.msk [vmem:[%s330 + $0x90] sm:$0xff] %vm225, %v307
      %341 = vst.msk [vmem:[%s330 + $0xa8] sm:$0xff] %vm225, %v308
      %342 = vst.msk [vmem:[%s330 + $0xb0] sm:$0xff] %vm225, %v309
      %343 = vst.msk [vmem:[%s330 + $0xc8] sm:$0xff] %vm225, %v310
      %344 = vst.msk [vmem:[%s330 + $0xd0] sm:$0xff] %vm225, %v311
      %345 = vst.msk [vmem:[%s330 + $0xe8] sm:$0xff] %vm225, %v312
      %346 = vst.msk [vmem:[%s330 + $0xf0] sm:$0xff] %vm225, %v313
      %347 = vst.msk [vmem:[%s330 + $0x108] sm:$0xff] %vm225, %v314
      %348 = vst.msk [vmem:[%s330 + $0x110] sm:$0xff] %vm225, %v315
      %349 = vst.msk [vmem:[%s330 + $0x128] sm:$0xff] %vm225, %v316
      %350 = vst.msk [vmem:[%s330 + $0x130] sm:$0xff] %vm225, %v317
      %351 = vst.msk [vmem:[%s330 + $0x148] sm:$0xff] %vm225, %v318
      %352 = vst.msk [vmem:[%s330 + $0x150] sm:$0xff] %vm225, %v319
      %353 = vst.msk [vmem:[%s330 + $0x168] sm:$0xff] %vm225, %v320
      %354 = vst.msk [vmem:[%s330 + $0x170] sm:$0xff] %vm225, %v321
      %355 = vst.msk [vmem:[%s330 + $0x188] sm:$0xff] %vm225, %v322
      %356 = vst.msk [vmem:[%s330 + $0x190] sm:$0xff] %vm225, %v323
      %357 = vst.msk [vmem:[%s330 + $0x1a8] sm:$0xff] %vm225, %v324
      %358 = vst.msk [vmem:[%s330 + $0x1b0] sm:$0xff] %vm225, %v325
      %359 = vst.msk [vmem:[%s330 + $0x1c8] sm:$0xff] %vm225, %v326
      %360 = vst.msk [vmem:[%s330 + $0x1d0] sm:$0xff] %vm225, %v327
      %361 = vst.msk [vmem:[%s330 + $0x1e8] sm:$0xff] %vm225, %v328
      %362 = vst.msk [vmem:[%s330 + $0x1f0] sm:$0xff] %vm225, %v329
      %v363 = vld [vmem:[#allocation2 + $0x7] sm:$0xff]
      %v364 = vld [vmem:[#allocation2 + $0xf] sm:$0xff]
      %v365 = vld [vmem:[#allocation2 + $0x27] sm:$0xff]
      %v366 = vld [vmem:[#allocation2 + $0x2f] sm:$0xff]
      %v367 = vld [vmem:[#allocation2 + $0x47] sm:$0xff]
      %v368 = vld [vmem:[#allocation2 + $0x4f] sm:$0xff]
      %v369 = vld [vmem:[#allocation2 + $0x67] sm:$0xff]
      %v370 = vld [vmem:[#allocation2 + $0x6f] sm:$0xff]
      %v371 = vld [vmem:[#allocation2 + $0x87] sm:$0xff]
      %v372 = vld [vmem:[#allocation2 + $0x8f] sm:$0xff]
      %v373 = vld [vmem:[#allocation2 + $0xa7] sm:$0xff]
      %v374 = vld [vmem:[#allocation2 + $0xaf] sm:$0xff]
      %v375 = vld [vmem:[#allocation2 + $0xc7] sm:$0xff]
      %v376 = vld [vmem:[#allocation2 + $0xcf] sm:$0xff]
      %v377 = vld [vmem:[#allocation2 + $0xe7] sm:$0xff]
      %v378 = vld [vmem:[#allocation2 + $0xef] sm:$0xff]
      %v379 = vld [vmem:[#allocation2 + $0x107] sm:$0xff]
      %v380 = vld [vmem:[#allocation2 + $0x10f] sm:$0xff]
      %v381 = vld [vmem:[#allocation2 + $0x127] sm:$0xff]
      %v382 = vld [vmem:[#allocation2 + $0x12f] sm:$0xff]
      %v383 = vld [vmem:[#allocation2 + $0x147] sm:$0xff]
      %v384 = vld [vmem:[#allocation2 + $0x14f] sm:$0xff]
      %v385 = vld [vmem:[#allocation2 + $0x167] sm:$0xff]
      %v386 = vld [vmem:[#allocation2 + $0x16f] sm:$0xff]
      %v387 = vld [vmem:[#allocation2 + $0x187] sm:$0xff]
      %v388 = vld [vmem:[#allocation2 + $0x18f] sm:$0xff]
      %v389 = vld [vmem:[#allocation2 + $0x1a7] sm:$0xff]
      %v390 = vld [vmem:[#allocation2 + $0x1af] sm:$0xff]
      %v391 = vld [vmem:[#allocation2 + $0x1c7] sm:$0xff]
      %v392 = vld [vmem:[#allocation2 + $0x1cf] sm:$0xff]
      %v393 = vld [vmem:[#allocation2 + $0x1e7] sm:$0xff]
      %v394 = vld [vmem:[#allocation2 + $0x1ef] sm:$0xff]
      %v395 = vld [vmem:[#allocation2 + $0x8] sm:$0xff]
      %v396 = vld [vmem:[#allocation2 + $0x10] sm:$0xff]
      %v397 = vld [vmem:[#allocation2 + $0x28] sm:$0xff]
      %v398 = vld [vmem:[#allocation2 + $0x30] sm:$0xff]
      %v399 = vld [vmem:[#allocation2 + $0x48] sm:$0xff]
      %v400 = vld [vmem:[#allocation2 + $0x50] sm:$0xff]
      %v401 = vld [vmem:[#allocation2 + $0x68] sm:$0xff]
      %v402 = vld [vmem:[#allocation2 + $0x70] sm:$0xff]
      %v403 = vld [vmem:[#allocation2 + $0x88] sm:$0xff]
      %v404 = vld [vmem:[#allocation2 + $0x90] sm:$0xff]
      %v405 = vld [vmem:[#allocation2 + $0xa8] sm:$0xff]
      %v406 = vld [vmem:[#allocation2 + $0xb0] sm:$0xff]
      %v407 = vld [vmem:[#allocation2 + $0xc8] sm:$0xff]
      %v408 = vld [vmem:[#allocation2 + $0xd0] sm:$0xff]
      %v409 = vld [vmem:[#allocation2 + $0xe8] sm:$0xff]
      %v410 = vld [vmem:[#allocation2 + $0xf0] sm:$0xff]
      %v411 = vld [vmem:[#allocation2 + $0x108] sm:$0xff]
      %v412 = vld [vmem:[#allocation2 + $0x110] sm:$0xff]
      %v413 = vld [vmem:[#allocation2 + $0x128] sm:$0xff]
      %v414 = vld [vmem:[#allocation2 + $0x130] sm:$0xff]
      %v415 = vld [vmem:[#allocation2 + $0x148] sm:$0xff]
      %v416 = vld [vmem:[#allocation2 + $0x150] sm:$0xff]
      %v417 = vld [vmem:[#allocation2 + $0x168] sm:$0xff]
      %v418 = vld [vmem:[#allocation2 + $0x170] sm:$0xff]
      %v419 = vld [vmem:[#allocation2 + $0x188] sm:$0xff]
      %v420 = vld [vmem:[#allocation2 + $0x190] sm:$0xff]
      %v421 = vld [vmem:[#allocation2 + $0x1a8] sm:$0xff]
      %v422 = vld [vmem:[#allocation2 + $0x1b0] sm:$0xff]
      %v423 = vld [vmem:[#allocation2 + $0x1c8] sm:$0xff]
      %v424 = vld [vmem:[#allocation2 + $0x1d0] sm:$0xff]
      %v425 = vld [vmem:[#allocation2 + $0x1e8] sm:$0xff]
      %v426 = vld [vmem:[#allocation2 + $0x1f0] sm:$0xff]
      %v427 = vld [vmem:[#allocation2 + $0x9] sm:$0xff]
      %v428 = vld [vmem:[#allocation2 + $0x11] sm:$0xff]
      %v429 = vld [vmem:[#allocation2 + $0x29] sm:$0xff]
      %v430 = vld [vmem:[#allocation2 + $0x31] sm:$0xff]
      %v431 = vld [vmem:[#allocation2 + $0x49] sm:$0xff]
      %v432 = vld [vmem:[#allocation2 + $0x51] sm:$0xff]
      %v433 = vld [vmem:[#allocation2 + $0x69] sm:$0xff]
      %v434 = vld [vmem:[#allocation2 + $0x71] sm:$0xff]
      %v435 = vld [vmem:[#allocation2 + $0x89] sm:$0xff]
      %v436 = vld [vmem:[#allocation2 + $0x91] sm:$0xff]
      %v437 = vld [vmem:[#allocation2 + $0xa9] sm:$0xff]
      %v438 = vld [vmem:[#allocation2 + $0xb1] sm:$0xff]
      %v439 = vld [vmem:[#allocation2 + $0xc9] sm:$0xff]
      %v440 = vld [vmem:[#allocation2 + $0xd1] sm:$0xff]
      %v441 = vld [vmem:[#allocation2 + $0xe9] sm:$0xff]
      %v442 = vld [vmem:[#allocation2 + $0xf1] sm:$0xff]
      %v443 = vld [vmem:[#allocation2 + $0x109] sm:$0xff]
      %v444 = vld [vmem:[#allocation2 + $0x111] sm:$0xff]
      %v445 = vld [vmem:[#allocation2 + $0x129] sm:$0xff]
      %v446 = vld [vmem:[#allocation2 + $0x131] sm:$0xff]
      %v447 = vld [vmem:[#allocation2 + $0x149] sm:$0xff]
      %v448 = vld [vmem:[#allocation2 + $0x151] sm:$0xff]
      %v449 = vld [vmem:[#allocation2 + $0x169] sm:$0xff]
      %v450 = vld [vmem:[#allocation2 + $0x171] sm:$0xff]
      %v451 = vld [vmem:[#allocation2 + $0x189] sm:$0xff]
      %v452 = vld [vmem:[#allocation2 + $0x191] sm:$0xff]
      %v453 = vld [vmem:[#allocation2 + $0x1a9] sm:$0xff]
      %v454 = vld [vmem:[#allocation2 + $0x1b1] sm:$0xff]
      %v455 = vld [vmem:[#allocation2 + $0x1c9] sm:$0xff]
      %v456 = vld [vmem:[#allocation2 + $0x1d1] sm:$0xff]
      %v457 = vld [vmem:[#allocation2 + $0x1e9] sm:$0xff]
      %v458 = vld [vmem:[#allocation2 + $0x1f1] sm:$0xff]
      %v459 = vld [vmem:[%s330 + $0x7] sm:$0xff]
      %v460 = vld [vmem:[%s330 + $0xf] sm:$0xff]
      %v461 = vld [vmem:[%s330 + $0x27] sm:$0xff]
      %v462 = vld [vmem:[%s330 + $0x2f] sm:$0xff]
      %v463 = vld [vmem:[%s330 + $0x47] sm:$0xff]
      %v464 = vld [vmem:[%s330 + $0x4f] sm:$0xff]
      %v465 = vld [vmem:[%s330 + $0x67] sm:$0xff]
      %v466 = vld [vmem:[%s330 + $0x6f] sm:$0xff]
      %v467 = vld [vmem:[%s330 + $0x87] sm:$0xff]
      %v468 = vld [vmem:[%s330 + $0x8f] sm:$0xff]
      %v469 = vld [vmem:[%s330 + $0xa7] sm:$0xff]
      %v470 = vld [vmem:[%s330 + $0xaf] sm:$0xff]
      %v471 = vld [vmem:[%s330 + $0xc7] sm:$0xff]
      %v472 = vld [vmem:[%s330 + $0xcf] sm:$0xff]
      %v473 = vld [vmem:[%s330 + $0xe7] sm:$0xff]
      %v474 = vld [vmem:[%s330 + $0xef] sm:$0xff]
      %v475 = vld [vmem:[%s330 + $0x107] sm:$0xff]
      %v476 = vld [vmem:[%s330 + $0x10f] sm:$0xff]
      %v477 = vld [vmem:[%s330 + $0x127] sm:$0xff]
      %v478 = vld [vmem:[%s330 + $0x12f] sm:$0xff]
      %v479 = vld [vmem:[%s330 + $0x147] sm:$0xff]
      %v480 = vld [vmem:[%s330 + $0x14f] sm:$0xff]
      %v481 = vld [vmem:[%s330 + $0x167] sm:$0xff]
      %v482 = vld [vmem:[%s330 + $0x16f] sm:$0xff]
      %v483 = vld [vmem:[%s330 + $0x187] sm:$0xff]
      %v484 = vld [vmem:[%s330 + $0x18f] sm:$0xff]
      %v485 = vld [vmem:[%s330 + $0x1a7] sm:$0xff]
      %v486 = vld [vmem:[%s330 + $0x1af] sm:$0xff]
      %v487 = vld [vmem:[%s330 + $0x1c7] sm:$0xff]
      %v488 = vld [vmem:[%s330 + $0x1cf] sm:$0xff]
      %v489 = vld [vmem:[%s330 + $0x1e7] sm:$0xff]
      %v490 = vld [vmem:[%s330 + $0x1ef] sm:$0xff]
      %v491 = vld [vmem:[%s330 + $0x8] sm:$0xff]
      %v492 = vld [vmem:[%s330 + $0x10] sm:$0xff]
      %v493 = vld [vmem:[%s330 + $0x28] sm:$0xff]
      %v494 = vld [vmem:[%s330 + $0x30] sm:$0xff]
      %v495 = vld [vmem:[%s330 + $0x48] sm:$0xff]
      %v496 = vld [vmem:[%s330 + $0x50] sm:$0xff]
      %v497 = vld [vmem:[%s330 + $0x68] sm:$0xff]
      %v498 = vld [vmem:[%s330 + $0x70] sm:$0xff]
      %v499 = vld [vmem:[%s330 + $0x88] sm:$0xff]
      %v500 = vld [vmem:[%s330 + $0x90] sm:$0xff]
      %v501 = vld [vmem:[%s330 + $0xa8] sm:$0xff]
      %v502 = vld [vmem:[%s330 + $0xb0] sm:$0xff]
      %v503 = vld [vmem:[%s330 + $0xc8] sm:$0xff]
      %v504 = vld [vmem:[%s330 + $0xd0] sm:$0xff]
      %v505 = vld [vmem:[%s330 + $0xe8] sm:$0xff]
      %v506 = vld [vmem:[%s330 + $0xf0] sm:$0xff]
      %v507 = vld [vmem:[%s330 + $0x108] sm:$0xff]
      %v508 = vld [vmem:[%s330 + $0x110] sm:$0xff]
      %v509 = vld [vmem:[%s330 + $0x128] sm:$0xff]
      %v510 = vld [vmem:[%s330 + $0x130] sm:$0xff]
      %v511 = vld [vmem:[%s330 + $0x148] sm:$0xff]
      %v512 = vld [vmem:[%s330 + $0x150] sm:$0xff]
      %v513 = vld [vmem:[%s330 + $0x168] sm:$0xff]
      %v514 = vld [vmem:[%s330 + $0x170] sm:$0xff]
      %v515 = vld [vmem:[%s330 + $0x188] sm:$0xff]
      %v516 = vld [vmem:[%s330 + $0x190] sm:$0xff]
      %v517 = vld [vmem:[%s330 + $0x1a8] sm:$0xff]
      %v518 = vld [vmem:[%s330 + $0x1b0] sm:$0xff]
      %v519 = vld [vmem:[%s330 + $0x1c8] sm:$0xff]
      %v520 = vld [vmem:[%s330 + $0x1d0] sm:$0xff]
      %v521 = vld [vmem:[%s330 + $0x1e8] sm:$0xff]
      %v522 = vld [vmem:[%s330 + $0x1f0] sm:$0xff]
      %v523 = vld [vmem:[%s330 + $0x9] sm:$0xff]
      %v524 = vld [vmem:[%s330 + $0x11] sm:$0xff]
      %v525 = vld [vmem:[%s330 + $0x29] sm:$0xff]
      %v526 = vld [vmem:[%s330 + $0x31] sm:$0xff]
      %v527 = vld [vmem:[%s330 + $0x49] sm:$0xff]
      %v528 = vld [vmem:[%s330 + $0x51] sm:$0xff]
      %v529 = vld [vmem:[%s330 + $0x69] sm:$0xff]
      %v530 = vld [vmem:[%s330 + $0x71] sm:$0xff]
      %v531 = vld [vmem:[%s330 + $0x89] sm:$0xff]
      %v532 = vld [vmem:[%s330 + $0x91] sm:$0xff]
      %v533 = vld [vmem:[%s330 + $0xa9] sm:$0xff]
      %v534 = vld [vmem:[%s330 + $0xb1] sm:$0xff]
      %v535 = vld [vmem:[%s330 + $0xc9] sm:$0xff]
      %v536 = vld [vmem:[%s330 + $0xd1] sm:$0xff]
      %v537 = vld [vmem:[%s330 + $0xe9] sm:$0xff]
      %v538 = vld [vmem:[%s330 + $0xf1] sm:$0xff]
      %v539 = vld [vmem:[%s330 + $0x109] sm:$0xff]
      %v540 = vld [vmem:[%s330 + $0x111] sm:$0xff]
      %v541 = vld [vmem:[%s330 + $0x129] sm:$0xff]
      %v542 = vld [vmem:[%s330 + $0x131] sm:$0xff]
      %v543 = vld [vmem:[%s330 + $0x149] sm:$0xff]
      %v544 = vld [vmem:[%s330 + $0x151] sm:$0xff]
      %v545 = vld [vmem:[%s330 + $0x169] sm:$0xff]
      %v546 = vld [vmem:[%s330 + $0x171] sm:$0xff]
      %v547 = vld [vmem:[%s330 + $0x189] sm:$0xff]
      %v548 = vld [vmem:[%s330 + $0x191] sm:$0xff]
      %v549 = vld [vmem:[%s330 + $0x1a9] sm:$0xff]
      %v550 = vld [vmem:[%s330 + $0x1b1] sm:$0xff]
      %v551 = vld [vmem:[%s330 + $0x1c9] sm:$0xff]
      %v552 = vld [vmem:[%s330 + $0x1d1] sm:$0xff]
      %v553 = vld [vmem:[%s330 + $0x1e9] sm:$0xff]
      %v554 = vld [vmem:[%s330 + $0x1f1] sm:$0xff]
      %s555 = scalar_lea.vmem [#allocation2], 64
      %v556 = vld [vmem:[%s555 + $0x7] sm:$0xff]
      %v557 = vld [vmem:[%s555 + $0xf] sm:$0xff]
      %v558 = vld [vmem:[%s555 + $0x27] sm:$0xff]
      %v559 = vld [vmem:[%s555 + $0x2f] sm:$0xff]
      %v560 = vld [vmem:[%s555 + $0x47] sm:$0xff]
      %v561 = vld [vmem:[%s555 + $0x4f] sm:$0xff]
      %v562 = vld [vmem:[%s555 + $0x67] sm:$0xff]
      %v563 = vld [vmem:[%s555 + $0x6f] sm:$0xff]
      %v564 = vld [vmem:[%s555 + $0x87] sm:$0xff]
      %v565 = vld [vmem:[%s555 + $0x8f] sm:$0xff]
      %v566 = vld [vmem:[%s555 + $0xa7] sm:$0xff]
      %v567 = vld [vmem:[%s555 + $0xaf] sm:$0xff]
      %v568 = vld [vmem:[%s555 + $0xc7] sm:$0xff]
      %v569 = vld [vmem:[%s555 + $0xcf] sm:$0xff]
      %v570 = vld [vmem:[%s555 + $0xe7] sm:$0xff]
      %v571 = vld [vmem:[%s555 + $0xef] sm:$0xff]
      %v572 = vld [vmem:[%s555 + $0x107] sm:$0xff]
      %v573 = vld [vmem:[%s555 + $0x10f] sm:$0xff]
      %v574 = vld [vmem:[%s555 + $0x127] sm:$0xff]
      %v575 = vld [vmem:[%s555 + $0x12f] sm:$0xff]
      %v576 = vld [vmem:[%s555 + $0x147] sm:$0xff]
      %v577 = vld [vmem:[%s555 + $0x14f] sm:$0xff]
      %v578 = vld [vmem:[%s555 + $0x167] sm:$0xff]
      %v579 = vld [vmem:[%s555 + $0x16f] sm:$0xff]
      %v580 = vld [vmem:[%s555 + $0x187] sm:$0xff]
      %v581 = vld [vmem:[%s555 + $0x18f] sm:$0xff]
      %v582 = vld [vmem:[%s555 + $0x1a7] sm:$0xff]
      %v583 = vld [vmem:[%s555 + $0x1af] sm:$0xff]
      %v584 = vld [vmem:[%s555 + $0x1c7] sm:$0xff]
      %v585 = vld [vmem:[%s555 + $0x1cf] sm:$0xff]
      %v586 = vld [vmem:[%s555 + $0x1e7] sm:$0xff]
      %v587 = vld [vmem:[%s555 + $0x1ef] sm:$0xff]
      %v588 = vld [vmem:[%s555 + $0x8] sm:$0xff]
      %v589 = vld [vmem:[%s555 + $0x10] sm:$0xff]
      %v590 = vld [vmem:[%s555 + $0x28] sm:$0xff]
      %v591 = vld [vmem:[%s555 + $0x30] sm:$0xff]
      %v592 = vld [vmem:[%s555 + $0x48] sm:$0xff]
      %v593 = vld [vmem:[%s555 + $0x50] sm:$0xff]
      %v594 = vld [vmem:[%s555 + $0x68] sm:$0xff]
      %v595 = vld [vmem:[%s555 + $0x70] sm:$0xff]
      %v596 = vld [vmem:[%s555 + $0x88] sm:$0xff]
      %v597 = vld [vmem:[%s555 + $0x90] sm:$0xff]
      %v598 = vld [vmem:[%s555 + $0xa8] sm:$0xff]
      %v599 = vld [vmem:[%s555 + $0xb0] sm:$0xff]
      %v600 = vld [vmem:[%s555 + $0xc8] sm:$0xff]
      %v601 = vld [vmem:[%s555 + $0xd0] sm:$0xff]
      %v602 = vld [vmem:[%s555 + $0xe8] sm:$0xff]
      %v603 = vld [vmem:[%s555 + $0xf0] sm:$0xff]
      %v604 = vld [vmem:[%s555 + $0x108] sm:$0xff]
      %v605 = vld [vmem:[%s555 + $0x110] sm:$0xff]
      %v606 = vld [vmem:[%s555 + $0x128] sm:$0xff]
      %v607 = vld [vmem:[%s555 + $0x130] sm:$0xff]
      %v608 = vld [vmem:[%s555 + $0x148] sm:$0xff]
      %v609 = vld [vmem:[%s555 + $0x150] sm:$0xff]
      %v610 = vld [vmem:[%s555 + $0x168] sm:$0xff]
      %v611 = vld [vmem:[%s555 + $0x170] sm:$0xff]
      %v612 = vld [vmem:[%s555 + $0x188] sm:$0xff]
      %v613 = vld [vmem:[%s555 + $0x190] sm:$0xff]
      %v614 = vld [vmem:[%s555 + $0x1a8] sm:$0xff]
      %v615 = vld [vmem:[%s555 + $0x1b0] sm:$0xff]
      %v616 = vld [vmem:[%s555 + $0x1c8] sm:$0xff]
      %v617 = vld [vmem:[%s555 + $0x1d0] sm:$0xff]
      %v618 = vld [vmem:[%s555 + $0x1e8] sm:$0xff]
      %v619 = vld [vmem:[%s555 + $0x1f0] sm:$0xff]
      %v620 = vld [vmem:[%s555 + $0x9] sm:$0xff]
      %v621 = vld [vmem:[%s555 + $0x11] sm:$0xff]
      %v622 = vld [vmem:[%s555 + $0x29] sm:$0xff]
      %v623 = vld [vmem:[%s555 + $0x31] sm:$0xff]
      %v624 = vld [vmem:[%s555 + $0x49] sm:$0xff]
      %v625 = vld [vmem:[%s555 + $0x51] sm:$0xff]
      %v626 = vld [vmem:[%s555 + $0x69] sm:$0xff]
      %v627 = vld [vmem:[%s555 + $0x71] sm:$0xff]
      %v628 = vld [vmem:[%s555 + $0x89] sm:$0xff]
      %v629 = vld [vmem:[%s555 + $0x91] sm:$0xff]
      %v630 = vld [vmem:[%s555 + $0xa9] sm:$0xff]
      %v631 = vld [vmem:[%s555 + $0xb1] sm:$0xff]
      %v632 = vld [vmem:[%s555 + $0xc9] sm:$0xff]
      %v633 = vld [vmem:[%s555 + $0xd1] sm:$0xff]
      %v634 = vld [vmem:[%s555 + $0xe9] sm:$0xff]
      %v635 = vld [vmem:[%s555 + $0xf1] sm:$0xff]
      %v636 = vld [vmem:[%s555 + $0x109] sm:$0xff]
      %v637 = vld [vmem:[%s555 + $0x111] sm:$0xff]
      %v638 = vld [vmem:[%s555 + $0x129] sm:$0xff]
      %v639 = vld [vmem:[%s555 + $0x131] sm:$0xff]
      %v640 = vld [vmem:[%s555 + $0x149] sm:$0xff]
      %v641 = vld [vmem:[%s555 + $0x151] sm:$0xff]
      %v642 = vld [vmem:[%s555 + $0x169] sm:$0xff]
      %v643 = vld [vmem:[%s555 + $0x171] sm:$0xff]
      %v644 = vld [vmem:[%s555 + $0x189] sm:$0xff]
      %v645 = vld [vmem:[%s555 + $0x191] sm:$0xff]
      %v646 = vld [vmem:[%s555 + $0x1a9] sm:$0xff]
      %v647 = vld [vmem:[%s555 + $0x1b1] sm:$0xff]
      %v648 = vld [vmem:[%s555 + $0x1c9] sm:$0xff]
      %v649 = vld [vmem:[%s555 + $0x1d1] sm:$0xff]
      %v650 = vld [vmem:[%s555 + $0x1e9] sm:$0xff]
      %v651 = vld [vmem:[%s555 + $0x1f1] sm:$0xff]
      %684 = vrot.lane.b32.xlu0 %v395, 4
      %v685 = vpop.permute.xlu0 %684
      %686 = vrot.lane.b32.xlu0 %v396, 4
      %v687 = vpop.permute.xlu0 %686
      %688 = vrot.lane.b32.xlu0 %v397, 4
      %v689 = vpop.permute.xlu0 %688
      %690 = vrot.lane.b32.xlu0 %v398, 4
      %v691 = vpop.permute.xlu0 %690
      %692 = vrot.lane.b32.xlu0 %v399, 4
      %v693 = vpop.permute.xlu0 %692
      %694 = vrot.lane.b32.xlu0 %v400, 4
      %v695 = vpop.permute.xlu0 %694
      %696 = vrot.lane.b32.xlu0 %v401, 4
      %v697 = vpop.permute.xlu0 %696
      %698 = vrot.lane.b32.xlu0 %v402, 4
      %v699 = vpop.permute.xlu0 %698
      %700 = vrot.lane.b32.xlu0 %v403, 4
      %v701 = vpop.permute.xlu0 %700
      %702 = vrot.lane.b32.xlu0 %v404, 4
      %v703 = vpop.permute.xlu0 %702
      %704 = vrot.lane.b32.xlu0 %v405, 4
      %v705 = vpop.permute.xlu0 %704
      %706 = vrot.lane.b32.xlu0 %v406, 4
      %v707 = vpop.permute.xlu0 %706
      %708 = vrot.lane.b32.xlu0 %v407, 4
      %v709 = vpop.permute.xlu0 %708
      %710 = vrot.lane.b32.xlu0 %v408, 4
      %v711 = vpop.permute.xlu0 %710
      %712 = vrot.lane.b32.xlu0 %v409, 4
      %v713 = vpop.permute.xlu0 %712
      %714 = vrot.lane.b32.xlu0 %v410, 4
      %v715 = vpop.permute.xlu0 %714
      %716 = vrot.lane.b32.xlu0 %v411, 4
      %v717 = vpop.permute.xlu0 %716
      %718 = vrot.lane.b32.xlu0 %v412, 4
      %v719 = vpop.permute.xlu0 %718
      %720 = vrot.lane.b32.xlu0 %v413, 4
      %v721 = vpop.permute.xlu0 %720
      %722 = vrot.lane.b32.xlu0 %v414, 4
      %v723 = vpop.permute.xlu0 %722
      %724 = vrot.lane.b32.xlu0 %v415, 4
      %v725 = vpop.permute.xlu0 %724
      %726 = vrot.lane.b32.xlu0 %v416, 4
      %v727 = vpop.permute.xlu0 %726
      %728 = vrot.lane.b32.xlu0 %v417, 4
      %v729 = vpop.permute.xlu0 %728
      %730 = vrot.lane.b32.xlu0 %v418, 4
      %v731 = vpop.permute.xlu0 %730
      %732 = vrot.lane.b32.xlu0 %v419, 4
      %v733 = vpop.permute.xlu0 %732
      %734 = vrot.lane.b32.xlu0 %v420, 4
      %v735 = vpop.permute.xlu0 %734
      %736 = vrot.lane.b32.xlu0 %v421, 4
      %v737 = vpop.permute.xlu0 %736
      %738 = vrot.lane.b32.xlu0 %v422, 4
      %v739 = vpop.permute.xlu0 %738
      %740 = vrot.lane.b32.xlu0 %v423, 4
      %v741 = vpop.permute.xlu0 %740
      %742 = vrot.lane.b32.xlu0 %v424, 4
      %v743 = vpop.permute.xlu0 %742
      %744 = vrot.lane.b32.xlu0 %v425, 4
      %v745 = vpop.permute.xlu0 %744
      %746 = vrot.lane.b32.xlu0 %v426, 4
      %v747 = vpop.permute.xlu0 %746
      %812 = vrot.lane.b32.xlu0 %v427, 8
      %v813 = vpop.permute.xlu0 %812
      %814 = vrot.lane.b32.xlu0 %v428, 8
      %v815 = vpop.permute.xlu0 %814
      %816 = vrot.lane.b32.xlu0 %v429, 8
      %v817 = vpop.permute.xlu0 %816
      %818 = vrot.lane.b32.xlu0 %v430, 8
      %v819 = vpop.permute.xlu0 %818
      %820 = vrot.lane.b32.xlu0 %v431, 8
      %v821 = vpop.permute.xlu0 %820
      %822 = vrot.lane.b32.xlu0 %v432, 8
      %v823 = vpop.permute.xlu0 %822
      %824 = vrot.lane.b32.xlu0 %v433, 8
      %v825 = vpop.permute.xlu0 %824
      %826 = vrot.lane.b32.xlu0 %v434, 8
      %v827 = vpop.permute.xlu0 %826
      %828 = vrot.lane.b32.xlu0 %v435, 8
      %v829 = vpop.permute.xlu0 %828
      %830 = vrot.lane.b32.xlu0 %v436, 8
      %v831 = vpop.permute.xlu0 %830
      %832 = vrot.lane.b32.xlu0 %v437, 8
      %v833 = vpop.permute.xlu0 %832
      %834 = vrot.lane.b32.xlu0 %v438, 8
      %v835 = vpop.permute.xlu0 %834
      %836 = vrot.lane.b32.xlu0 %v439, 8
      %v837 = vpop.permute.xlu0 %836
      %838 = vrot.lane.b32.xlu0 %v440, 8
      %v839 = vpop.permute.xlu0 %838
      %840 = vrot.lane.b32.xlu0 %v441, 8
      %v841 = vpop.permute.xlu0 %840
      %842 = vrot.lane.b32.xlu0 %v442, 8
      %v843 = vpop.permute.xlu0 %842
      %844 = vrot.lane.b32.xlu0 %v443, 8
      %v845 = vpop.permute.xlu0 %844
      %846 = vrot.lane.b32.xlu0 %v444, 8
      %v847 = vpop.permute.xlu0 %846
      %848 = vrot.lane.b32.xlu0 %v445, 8
      %v849 = vpop.permute.xlu0 %848
      %850 = vrot.lane.b32.xlu0 %v446, 8
      %v851 = vpop.permute.xlu0 %850
      %852 = vrot.lane.b32.xlu0 %v447, 8
      %v853 = vpop.permute.xlu0 %852
      %854 = vrot.lane.b32.xlu0 %v448, 8
      %v855 = vpop.permute.xlu0 %854
      %856 = vrot.lane.b32.xlu0 %v449, 8
      %v857 = vpop.permute.xlu0 %856
      %858 = vrot.lane.b32.xlu0 %v450, 8
      %v859 = vpop.permute.xlu0 %858
      %860 = vrot.lane.b32.xlu0 %v451, 8
      %v861 = vpop.permute.xlu0 %860
      %862 = vrot.lane.b32.xlu0 %v452, 8
      %v863 = vpop.permute.xlu0 %862
      %864 = vrot.lane.b32.xlu0 %v453, 8
      %v865 = vpop.permute.xlu0 %864
      %866 = vrot.lane.b32.xlu0 %v454, 8
      %v867 = vpop.permute.xlu0 %866
      %868 = vrot.lane.b32.xlu0 %v455, 8
      %v869 = vpop.permute.xlu0 %868
      %870 = vrot.lane.b32.xlu0 %v456, 8
      %v871 = vpop.permute.xlu0 %870
      %872 = vrot.lane.b32.xlu0 %v457, 8
      %v873 = vpop.permute.xlu0 %872
      %874 = vrot.lane.b32.xlu0 %v458, 8
      %v875 = vpop.permute.xlu0 %874
      %940 = vrot.lane.b32.xlu0 %v459, 12
      %v941 = vpop.permute.xlu0 %940
      %942 = vrot.lane.b32.xlu0 %v460, 12
      %v943 = vpop.permute.xlu0 %942
      %944 = vrot.lane.b32.xlu0 %v461, 12
      %v945 = vpop.permute.xlu0 %944
      %946 = vrot.lane.b32.xlu0 %v462, 12
      %v947 = vpop.permute.xlu0 %946
      %948 = vrot.lane.b32.xlu0 %v463, 12
      %v949 = vpop.permute.xlu0 %948
      %950 = vrot.lane.b32.xlu0 %v464, 12
      %v951 = vpop.permute.xlu0 %950
      %952 = vrot.lane.b32.xlu0 %v465, 12
      %v953 = vpop.permute.xlu0 %952
      %954 = vrot.lane.b32.xlu0 %v466, 12
      %v955 = vpop.permute.xlu0 %954
      %956 = vrot.lane.b32.xlu0 %v467, 12
      %v957 = vpop.permute.xlu0 %956
      %958 = vrot.lane.b32.xlu0 %v468, 12
      %v959 = vpop.permute.xlu0 %958
      %960 = vrot.lane.b32.xlu0 %v469, 12
      %v961 = vpop.permute.xlu0 %960
      %962 = vrot.lane.b32.xlu0 %v470, 12
      %v963 = vpop.permute.xlu0 %962
      %964 = vrot.lane.b32.xlu0 %v471, 12
      %v965 = vpop.permute.xlu0 %964
      %966 = vrot.lane.b32.xlu0 %v472, 12
      %v967 = vpop.permute.xlu0 %966
      %968 = vrot.lane.b32.xlu0 %v473, 12
      %v969 = vpop.permute.xlu0 %968
      %970 = vrot.lane.b32.xlu0 %v474, 12
      %v971 = vpop.permute.xlu0 %970
      %972 = vrot.lane.b32.xlu0 %v475, 12
      %v973 = vpop.permute.xlu0 %972
      %974 = vrot.lane.b32.xlu0 %v476, 12
      %v975 = vpop.permute.xlu0 %974
      %976 = vrot.lane.b32.xlu0 %v477, 12
      %v977 = vpop.permute.xlu0 %976
      %978 = vrot.lane.b32.xlu0 %v478, 12
      %v979 = vpop.permute.xlu0 %978
      %980 = vrot.lane.b32.xlu0 %v479, 12
      %v981 = vpop.permute.xlu0 %980
      %982 = vrot.lane.b32.xlu0 %v480, 12
      %v983 = vpop.permute.xlu0 %982
      %984 = vrot.lane.b32.xlu0 %v481, 12
      %v985 = vpop.permute.xlu0 %984
      %986 = vrot.lane.b32.xlu0 %v482, 12
      %v987 = vpop.permute.xlu0 %986
      %988 = vrot.lane.b32.xlu0 %v483, 12
      %v989 = vpop.permute.xlu0 %988
      %990 = vrot.lane.b32.xlu0 %v484, 12
      %v991 = vpop.permute.xlu0 %990
      %992 = vrot.lane.b32.xlu0 %v485, 12
      %v993 = vpop.permute.xlu0 %992
      %994 = vrot.lane.b32.xlu0 %v486, 12
      %v995 = vpop.permute.xlu0 %994
      %996 = vrot.lane.b32.xlu0 %v487, 12
      %v997 = vpop.permute.xlu0 %996
      %998 = vrot.lane.b32.xlu0 %v488, 12
      %v999 = vpop.permute.xlu0 %998
      %1000 = vrot.lane.b32.xlu0 %v489, 12
      %v1001 = vpop.permute.xlu0 %1000
      %1002 = vrot.lane.b32.xlu0 %v490, 12
      %v1003 = vpop.permute.xlu0 %1002
      %1068 = vrot.lane.b32.xlu0 %v491, 16
      %v1069 = vpop.permute.xlu0 %1068
      %1070 = vrot.lane.b32.xlu0 %v492, 16
      %v1071 = vpop.permute.xlu0 %1070
      %1072 = vrot.lane.b32.xlu0 %v493, 16
      %v1073 = vpop.permute.xlu0 %1072
      %1074 = vrot.lane.b32.xlu0 %v494, 16
      %v1075 = vpop.permute.xlu0 %1074
      %1076 = vrot.lane.b32.xlu0 %v495, 16
      %v1077 = vpop.permute.xlu0 %1076
      %1078 = vrot.lane.b32.xlu0 %v496, 16
      %v1079 = vpop.permute.xlu0 %1078
      %1080 = vrot.lane.b32.xlu0 %v497, 16
      %v1081 = vpop.permute.xlu0 %1080
      %1082 = vrot.lane.b32.xlu0 %v498, 16
      %v1083 = vpop.permute.xlu0 %1082
      %1084 = vrot.lane.b32.xlu0 %v499, 16
      %v1085 = vpop.permute.xlu0 %1084
      %1086 = vrot.lane.b32.xlu0 %v500, 16
      %v1087 = vpop.permute.xlu0 %1086
      %1088 = vrot.lane.b32.xlu0 %v501, 16
      %v1089 = vpop.permute.xlu0 %1088
      %1090 = vrot.lane.b32.xlu0 %v502, 16
      %v1091 = vpop.permute.xlu0 %1090
      %1092 = vrot.lane.b32.xlu0 %v503, 16
      %v1093 = vpop.permute.xlu0 %1092
      %1094 = vrot.lane.b32.xlu0 %v504, 16
      %v1095 = vpop.permute.xlu0 %1094
      %1096 = vrot.lane.b32.xlu0 %v505, 16
      %v1097 = vpop.permute.xlu0 %1096
      %1098 = vrot.lane.b32.xlu0 %v506, 16
      %v1099 = vpop.permute.xlu0 %1098
      %1100 = vrot.lane.b32.xlu0 %v507, 16
      %v1101 = vpop.permute.xlu0 %1100
      %1102 = vrot.lane.b32.xlu0 %v508, 16
      %v1103 = vpop.permute.xlu0 %1102
      %1104 = vrot.lane.b32.xlu0 %v509, 16
      %v1105 = vpop.permute.xlu0 %1104
      %1106 = vrot.lane.b32.xlu0 %v510, 16
      %v1107 = vpop.permute.xlu0 %1106
      %1108 = vrot.lane.b32.xlu0 %v511, 16
      %v1109 = vpop.permute.xlu0 %1108
      %1110 = vrot.lane.b32.xlu0 %v512, 16
      %v1111 = vpop.permute.xlu0 %1110
      %1112 = vrot.lane.b32.xlu0 %v513, 16
      %v1113 = vpop.permute.xlu0 %1112
      %1114 = vrot.lane.b32.xlu0 %v514, 16
      %v1115 = vpop.permute.xlu0 %1114
      %1116 = vrot.lane.b32.xlu0 %v515, 16
      %v1117 = vpop.permute.xlu0 %1116
      %1118 = vrot.lane.b32.xlu0 %v516, 16
      %v1119 = vpop.permute.xlu0 %1118
      %1120 = vrot.lane.b32.xlu0 %v517, 16
      %v1121 = vpop.permute.xlu0 %1120
      %1122 = vrot.lane.b32.xlu0 %v518, 16
      %v1123 = vpop.permute.xlu0 %1122
      %1124 = vrot.lane.b32.xlu0 %v519, 16
      %v1125 = vpop.permute.xlu0 %1124
      %1126 = vrot.lane.b32.xlu0 %v520, 16
      %v1127 = vpop.permute.xlu0 %1126
      %1128 = vrot.lane.b32.xlu0 %v521, 16
      %v1129 = vpop.permute.xlu0 %1128
      %1130 = vrot.lane.b32.xlu0 %v522, 16
      %v1131 = vpop.permute.xlu0 %1130
      %1196 = vrot.lane.b32.xlu0 %v523, 20
      %v1197 = vpop.permute.xlu0 %1196
      %1198 = vrot.lane.b32.xlu0 %v524, 20
      %v1199 = vpop.permute.xlu0 %1198
      %1200 = vrot.lane.b32.xlu0 %v525, 20
      %v1201 = vpop.permute.xlu0 %1200
      %1202 = vrot.lane.b32.xlu0 %v526, 20
      %v1203 = vpop.permute.xlu0 %1202
      %1204 = vrot.lane.b32.xlu0 %v527, 20
      %v1205 = vpop.permute.xlu0 %1204
      %1206 = vrot.lane.b32.xlu0 %v528, 20
      %v1207 = vpop.permute.xlu0 %1206
      %1208 = vrot.lane.b32.xlu0 %v529, 20
      %v1209 = vpop.permute.xlu0 %1208
      %1210 = vrot.lane.b32.xlu0 %v530, 20
      %v1211 = vpop.permute.xlu0 %1210
      %1212 = vrot.lane.b32.xlu0 %v531, 20
      %v1213 = vpop.permute.xlu0 %1212
      %1214 = vrot.lane.b32.xlu0 %v532, 20
      %v1215 = vpop.permute.xlu0 %1214
      %1216 = vrot.lane.b32.xlu0 %v533, 20
      %v1217 = vpop.permute.xlu0 %1216
      %1218 = vrot.lane.b32.xlu0 %v534, 20
      %v1219 = vpop.permute.xlu0 %1218
      %1220 = vrot.lane.b32.xlu0 %v535, 20
      %v1221 = vpop.permute.xlu0 %1220
      %1222 = vrot.lane.b32.xlu0 %v536, 20
      %v1223 = vpop.permute.xlu0 %1222
      %1224 = vrot.lane.b32.xlu0 %v537, 20
      %v1225 = vpop.permute.xlu0 %1224
      %1226 = vrot.lane.b32.xlu0 %v538, 20
      %v1227 = vpop.permute.xlu0 %1226
      %1228 = vrot.lane.b32.xlu0 %v539, 20
      %v1229 = vpop.permute.xlu0 %1228
      %1230 = vrot.lane.b32.xlu0 %v540, 20
      %v1231 = vpop.permute.xlu0 %1230
      %1232 = vrot.lane.b32.xlu0 %v541, 20
      %v1233 = vpop.permute.xlu0 %1232
      %1234 = vrot.lane.b32.xlu0 %v542, 20
      %v1235 = vpop.permute.xlu0 %1234
      %1236 = vrot.lane.b32.xlu0 %v543, 20
      %v1237 = vpop.permute.xlu0 %1236
      %1238 = vrot.lane.b32.xlu0 %v544, 20
      %v1239 = vpop.permute.xlu0 %1238
      %1240 = vrot.lane.b32.xlu0 %v545, 20
      %v1241 = vpop.permute.xlu0 %1240
      %1242 = vrot.lane.b32.xlu0 %v546, 20
      %v1243 = vpop.permute.xlu0 %1242
      %1244 = vrot.lane.b32.xlu0 %v547, 20
      %v1245 = vpop.permute.xlu0 %1244
      %1246 = vrot.lane.b32.xlu0 %v548, 20
      %v1247 = vpop.permute.xlu0 %1246
      %1248 = vrot.lane.b32.xlu0 %v549, 20
      %v1249 = vpop.permute.xlu0 %1248
      %1250 = vrot.lane.b32.xlu0 %v550, 20
      %v1251 = vpop.permute.xlu0 %1250
      %1252 = vrot.lane.b32.xlu0 %v551, 20
      %v1253 = vpop.permute.xlu0 %1252
      %1254 = vrot.lane.b32.xlu0 %v552, 20
      %v1255 = vpop.permute.xlu0 %1254
      %1256 = vrot.lane.b32.xlu0 %v553, 20
      %v1257 = vpop.permute.xlu0 %1256
      %1258 = vrot.lane.b32.xlu0 %v554, 20
      %v1259 = vpop.permute.xlu0 %1258
      %1324 = vrot.lane.b32.xlu0 %v556, 24
      %v1325 = vpop.permute.xlu0 %1324
      %1326 = vrot.lane.b32.xlu0 %v557, 24
      %v1327 = vpop.permute.xlu0 %1326
      %1328 = vrot.lane.b32.xlu0 %v558, 24
      %v1329 = vpop.permute.xlu0 %1328
      %1330 = vrot.lane.b32.xlu0 %v559, 24
      %v1331 = vpop.permute.xlu0 %1330
      %1332 = vrot.lane.b32.xlu0 %v560, 24
      %v1333 = vpop.permute.xlu0 %1332
      %1334 = vrot.lane.b32.xlu0 %v561, 24
      %v1335 = vpop.permute.xlu0 %1334
      %1336 = vrot.lane.b32.xlu0 %v562, 24
      %v1337 = vpop.permute.xlu0 %1336
      %1338 = vrot.lane.b32.xlu0 %v563, 24
      %v1339 = vpop.permute.xlu0 %1338
      %1340 = vrot.lane.b32.xlu0 %v564, 24
      %v1341 = vpop.permute.xlu0 %1340
      %1342 = vrot.lane.b32.xlu0 %v565, 24
      %v1343 = vpop.permute.xlu0 %1342
      %1344 = vrot.lane.b32.xlu0 %v566, 24
      %v1345 = vpop.permute.xlu0 %1344
      %1346 = vrot.lane.b32.xlu0 %v567, 24
      %v1347 = vpop.permute.xlu0 %1346
      %1348 = vrot.lane.b32.xlu0 %v568, 24
      %v1349 = vpop.permute.xlu0 %1348
      %1350 = vrot.lane.b32.xlu0 %v569, 24
      %v1351 = vpop.permute.xlu0 %1350
      %1352 = vrot.lane.b32.xlu0 %v570, 24
      %v1353 = vpop.permute.xlu0 %1352
      %1354 = vrot.lane.b32.xlu0 %v571, 24
      %v1355 = vpop.permute.xlu0 %1354
      %1356 = vrot.lane.b32.xlu0 %v572, 24
      %v1357 = vpop.permute.xlu0 %1356
      %1358 = vrot.lane.b32.xlu0 %v573, 24
      %v1359 = vpop.permute.xlu0 %1358
      %1360 = vrot.lane.b32.xlu0 %v574, 24
      %v1361 = vpop.permute.xlu0 %1360
      %1362 = vrot.lane.b32.xlu0 %v575, 24
      %v1363 = vpop.permute.xlu0 %1362
      %1364 = vrot.lane.b32.xlu0 %v576, 24
      %v1365 = vpop.permute.xlu0 %1364
      %1366 = vrot.lane.b32.xlu0 %v577, 24
      %v1367 = vpop.permute.xlu0 %1366
      %1368 = vrot.lane.b32.xlu0 %v578, 24
      %v1369 = vpop.permute.xlu0 %1368
      %1370 = vrot.lane.b32.xlu0 %v579, 24
      %v1371 = vpop.permute.xlu0 %1370
      %1372 = vrot.lane.b32.xlu0 %v580, 24
      %v1373 = vpop.permute.xlu0 %1372
      %1374 = vrot.lane.b32.xlu0 %v581, 24
      %v1375 = vpop.permute.xlu0 %1374
      %1376 = vrot.lane.b32.xlu0 %v582, 24
      %v1377 = vpop.permute.xlu0 %1376
      %1378 = vrot.lane.b32.xlu0 %v583, 24
      %v1379 = vpop.permute.xlu0 %1378
      %1380 = vrot.lane.b32.xlu0 %v584, 24
      %v1381 = vpop.permute.xlu0 %1380
      %1382 = vrot.lane.b32.xlu0 %v585, 24
      %v1383 = vpop.permute.xlu0 %1382
      %1384 = vrot.lane.b32.xlu0 %v586, 24
      %v1385 = vpop.permute.xlu0 %1384
      %1386 = vrot.lane.b32.xlu0 %v587, 24
      %v1387 = vpop.permute.xlu0 %1386
      %1452 = vrot.lane.b32.xlu0 %v588, 28
      %v1453 = vpop.permute.xlu0 %1452
      %1454 = vrot.lane.b32.xlu0 %v589, 28
      %v1455 = vpop.permute.xlu0 %1454
      %1456 = vrot.lane.b32.xlu0 %v590, 28
      %v1457 = vpop.permute.xlu0 %1456
      %1458 = vrot.lane.b32.xlu0 %v591, 28
      %v1459 = vpop.permute.xlu0 %1458
      %1460 = vrot.lane.b32.xlu0 %v592, 28
      %v1461 = vpop.permute.xlu0 %1460
      %1462 = vrot.lane.b32.xlu0 %v593, 28
      %v1463 = vpop.permute.xlu0 %1462
      %1464 = vrot.lane.b32.xlu0 %v594, 28
      %v1465 = vpop.permute.xlu0 %1464
      %1466 = vrot.lane.b32.xlu0 %v595, 28
      %v1467 = vpop.permute.xlu0 %1466
      %1468 = vrot.lane.b32.xlu0 %v596, 28
      %v1469 = vpop.permute.xlu0 %1468
      %1470 = vrot.lane.b32.xlu0 %v597, 28
      %v1471 = vpop.permute.xlu0 %1470
      %1472 = vrot.lane.b32.xlu0 %v598, 28
      %v1473 = vpop.permute.xlu0 %1472
      %1474 = vrot.lane.b32.xlu0 %v599, 28
      %v1475 = vpop.permute.xlu0 %1474
      %1476 = vrot.lane.b32.xlu0 %v600, 28
      %v1477 = vpop.permute.xlu0 %1476
      %1478 = vrot.lane.b32.xlu0 %v601, 28
      %v1479 = vpop.permute.xlu0 %1478
      %1480 = vrot.lane.b32.xlu0 %v602, 28
      %v1481 = vpop.permute.xlu0 %1480
      %1482 = vrot.lane.b32.xlu0 %v603, 28
      %v1483 = vpop.permute.xlu0 %1482
      %1484 = vrot.lane.b32.xlu0 %v604, 28
      %v1485 = vpop.permute.xlu0 %1484
      %1486 = vrot.lane.b32.xlu0 %v605, 28
      %v1487 = vpop.permute.xlu0 %1486
      %1488 = vrot.lane.b32.xlu0 %v606, 28
      %v1489 = vpop.permute.xlu0 %1488
      %1490 = vrot.lane.b32.xlu0 %v607, 28
      %v1491 = vpop.permute.xlu0 %1490
      %1492 = vrot.lane.b32.xlu0 %v608, 28
      %v1493 = vpop.permute.xlu0 %1492
      %1494 = vrot.lane.b32.xlu0 %v609, 28
      %v1495 = vpop.permute.xlu0 %1494
      %1496 = vrot.lane.b32.xlu0 %v610, 28
      %v1497 = vpop.permute.xlu0 %1496
      %1498 = vrot.lane.b32.xlu0 %v611, 28
      %v1499 = vpop.permute.xlu0 %1498
      %1500 = vrot.lane.b32.xlu0 %v612, 28
      %v1501 = vpop.permute.xlu0 %1500
      %1502 = vrot.lane.b32.xlu0 %v613, 28
      %v1503 = vpop.permute.xlu0 %1502
      %1504 = vrot.lane.b32.xlu0 %v614, 28
      %v1505 = vpop.permute.xlu0 %1504
      %1506 = vrot.lane.b32.xlu0 %v615, 28
      %v1507 = vpop.permute.xlu0 %1506
      %1508 = vrot.lane.b32.xlu0 %v616, 28
      %v1509 = vpop.permute.xlu0 %1508
      %1510 = vrot.lane.b32.xlu0 %v617, 28
      %v1511 = vpop.permute.xlu0 %1510
      %1512 = vrot.lane.b32.xlu0 %v618, 28
      %v1513 = vpop.permute.xlu0 %1512
      %1514 = vrot.lane.b32.xlu0 %v619, 28
      %v1515 = vpop.permute.xlu0 %1514
      %1580 = vrot.lane.b32.xlu0 %v620, 32
      %v1581 = vpop.permute.xlu0 %1580
      %1582 = vrot.lane.b32.xlu0 %v621, 32
      %v1583 = vpop.permute.xlu0 %1582
      %1584 = vrot.lane.b32.xlu0 %v622, 32
      %v1585 = vpop.permute.xlu0 %1584
      %1586 = vrot.lane.b32.xlu0 %v623, 32
      %v1587 = vpop.permute.xlu0 %1586
      %1588 = vrot.lane.b32.xlu0 %v624, 32
      %v1589 = vpop.permute.xlu0 %1588
      %1590 = vrot.lane.b32.xlu0 %v625, 32
      %v1591 = vpop.permute.xlu0 %1590
      %1592 = vrot.lane.b32.xlu0 %v626, 32
      %v1593 = vpop.permute.xlu0 %1592
      %1594 = vrot.lane.b32.xlu0 %v627, 32
      %v1595 = vpop.permute.xlu0 %1594
      %1596 = vrot.lane.b32.xlu0 %v628, 32
      %v1597 = vpop.permute.xlu0 %1596
      %1598 = vrot.lane.b32.xlu0 %v629, 32
      %v1599 = vpop.permute.xlu0 %1598
      %1600 = vrot.lane.b32.xlu0 %v630, 32
      %v1601 = vpop.permute.xlu0 %1600
      %1602 = vrot.lane.b32.xlu0 %v631, 32
      %v1603 = vpop.permute.xlu0 %1602
      %1604 = vrot.lane.b32.xlu0 %v632, 32
      %v1605 = vpop.permute.xlu0 %1604
      %1606 = vrot.lane.b32.xlu0 %v633, 32
      %v1607 = vpop.permute.xlu0 %1606
      %1608 = vrot.lane.b32.xlu0 %v634, 32
      %v1609 = vpop.permute.xlu0 %1608
      %1610 = vrot.lane.b32.xlu0 %v635, 32
      %v1611 = vpop.permute.xlu0 %1610
      %1612 = vrot.lane.b32.xlu0 %v636, 32
      %v1613 = vpop.permute.xlu0 %1612
      %1614 = vrot.lane.b32.xlu0 %v637, 32
      %v1615 = vpop.permute.xlu0 %1614
      %1616 = vrot.lane.b32.xlu0 %v638, 32
      %v1617 = vpop.permute.xlu0 %1616
      %1618 = vrot.lane.b32.xlu0 %v639, 32
      %v1619 = vpop.permute.xlu0 %1618
      %1620 = vrot.lane.b32.xlu0 %v640, 32
      %v1621 = vpop.permute.xlu0 %1620
      %1622 = vrot.lane.b32.xlu0 %v641, 32
      %v1623 = vpop.permute.xlu0 %1622
      %1624 = vrot.lane.b32.xlu0 %v642, 32
      %v1625 = vpop.permute.xlu0 %1624
      %1626 = vrot.lane.b32.xlu0 %v643, 32
      %v1627 = vpop.permute.xlu0 %1626
      %1628 = vrot.lane.b32.xlu0 %v644, 32
      %v1629 = vpop.permute.xlu0 %1628
      %1630 = vrot.lane.b32.xlu0 %v645, 32
      %v1631 = vpop.permute.xlu0 %1630
      %1632 = vrot.lane.b32.xlu0 %v646, 32
      %v1633 = vpop.permute.xlu0 %1632
      %1634 = vrot.lane.b32.xlu0 %v647, 32
      %v1635 = vpop.permute.xlu0 %1634
      %1636 = vrot.lane.b32.xlu0 %v648, 32
      %v1637 = vpop.permute.xlu0 %1636
      %1638 = vrot.lane.b32.xlu0 %v649, 32
      %v1639 = vpop.permute.xlu0 %1638
      %1640 = vrot.lane.b32.xlu0 %v650, 32
      %v1641 = vpop.permute.xlu0 %1640
      %1642 = vrot.lane.b32.xlu0 %v651, 32
      %v1643 = vpop.permute.xlu0 %1642
      %v1676 = vsel %vm225, %v363, %v685
      %v1677 = vsel %vm225, %v364, %v687
      %v1678 = vsel %vm225, %v365, %v689
      %v1679 = vsel %vm225, %v366, %v691
      %v1680 = vsel %vm225, %v367, %v693
      %v1681 = vsel %vm225, %v368, %v695
      %v1682 = vsel %vm225, %v369, %v697
      %v1683 = vsel %vm225, %v370, %v699
      %v1684 = vsel %vm225, %v371, %v701
      %v1685 = vsel %vm225, %v372, %v703
      %v1686 = vsel %vm225, %v373, %v705
      %v1687 = vsel %vm225, %v374, %v707
      %v1688 = vsel %vm225, %v375, %v709
      %v1689 = vsel %vm225, %v376, %v711
      %v1690 = vsel %vm225, %v377, %v713
      %v1691 = vsel %vm225, %v378, %v715
      %v1692 = vsel %vm225, %v379, %v717
      %v1693 = vsel %vm225, %v380, %v719
      %v1694 = vsel %vm225, %v381, %v721
      %v1695 = vsel %vm225, %v382, %v723
      %v1696 = vsel %vm225, %v383, %v725
      %v1697 = vsel %vm225, %v384, %v727
      %v1698 = vsel %vm225, %v385, %v729
      %v1699 = vsel %vm225, %v386, %v731
      %v1700 = vsel %vm225, %v387, %v733
      %v1701 = vsel %vm225, %v388, %v735
      %v1702 = vsel %vm225, %v389, %v737
      %v1703 = vsel %vm225, %v390, %v739
      %v1704 = vsel %vm225, %v391, %v741
      %v1705 = vsel %vm225, %v392, %v743
      %v1706 = vsel %vm225, %v393, %v745
      %v1707 = vsel %vm225, %v394, %v747
      %vm1708 = vcmask 64512
      %v1709 = vsel %vm1708, %v1676, %v813
      %v1710 = vsel %vm1708, %v1677, %v815
      %v1711 = vsel %vm1708, %v1678, %v817
      %v1712 = vsel %vm1708, %v1679, %v819
      %v1713 = vsel %vm1708, %v1680, %v821
      %v1714 = vsel %vm1708, %v1681, %v823
      %v1715 = vsel %vm1708, %v1682, %v825
      %v1716 = vsel %vm1708, %v1683, %v827
      %v1717 = vsel %vm1708, %v1684, %v829
      %v1718 = vsel %vm1708, %v1685, %v831
      %v1719 = vsel %vm1708, %v1686, %v833
      %v1720 = vsel %vm1708, %v1687, %v835
      %v1721 = vsel %vm1708, %v1688, %v837
      %v1722 = vsel %vm1708, %v1689, %v839
      %v1723 = vsel %vm1708, %v1690, %v841
      %v1724 = vsel %vm1708, %v1691, %v843
      %v1725 = vsel %vm1708, %v1692, %v845
      %v1726 = vsel %vm1708, %v1693, %v847
      %v1727 = vsel %vm1708, %v1694, %v849
      %v1728 = vsel %vm1708, %v1695, %v851
      %v1729 = vsel %vm1708, %v1696, %v853
      %v1730 = vsel %vm1708, %v1697, %v855
      %v1731 = vsel %vm1708, %v1698, %v857
      %v1732 = vsel %vm1708, %v1699, %v859
      %v1733 = vsel %vm1708, %v1700, %v861
      %v1734 = vsel %vm1708, %v1701, %v863
      %v1735 = vsel %vm1708, %v1702, %v865
      %v1736 = vsel %vm1708, %v1703, %v867
      %v1737 = vsel %vm1708, %v1704, %v869
      %v1738 = vsel %vm1708, %v1705, %v871
      %v1739 = vsel %vm1708, %v1706, %v873
      %v1740 = vsel %vm1708, %v1707, %v875
      %vm1741 = vcmask 97280
      %v1742 = vsel %vm1741, %v1709, %v941
      %v1743 = vsel %vm1741, %v1710, %v943
      %v1744 = vsel %vm1741, %v1711, %v945
      %v1745 = vsel %vm1741, %v1712, %v947
      %v1746 = vsel %vm1741, %v1713, %v949
      %v1747 = vsel %vm1741, %v1714, %v951
      %v1748 = vsel %vm1741, %v1715, %v953
      %v1749 = vsel %vm1741, %v1716, %v955
      %v1750 = vsel %vm1741, %v1717, %v957
      %v1751 = vsel %vm1741, %v1718, %v959
      %v1752 = vsel %vm1741, %v1719, %v961
      %v1753 = vsel %vm1741, %v1720, %v963
      %v1754 = vsel %vm1741, %v1721, %v965
      %v1755 = vsel %vm1741, %v1722, %v967
      %v1756 = vsel %vm1741, %v1723, %v969
      %v1757 = vsel %vm1741, %v1724, %v971
      %v1758 = vsel %vm1741, %v1725, %v973
      %v1759 = vsel %vm1741, %v1726, %v975
      %v1760 = vsel %vm1741, %v1727, %v977
      %v1761 = vsel %vm1741, %v1728, %v979
      %v1762 = vsel %vm1741, %v1729, %v981
      %v1763 = vsel %vm1741, %v1730, %v983
      %v1764 = vsel %vm1741, %v1731, %v985
      %v1765 = vsel %vm1741, %v1732, %v987
      %v1766 = vsel %vm1741, %v1733, %v989
      %v1767 = vsel %vm1741, %v1734, %v991
      %v1768 = vsel %vm1741, %v1735, %v993
      %v1769 = vsel %vm1741, %v1736, %v995
      %v1770 = vsel %vm1741, %v1737, %v997
      %v1771 = vsel %vm1741, %v1738, %v999
      %v1772 = vsel %vm1741, %v1739, %v1001
      %v1773 = vsel %vm1741, %v1740, %v1003
      %vm1774 = vcmask 130048
      %v1775 = vsel %vm1774, %v1742, %v1069
      %v1776 = vsel %vm1774, %v1743, %v1071
      %v1777 = vsel %vm1774, %v1744, %v1073
      %v1778 = vsel %vm1774, %v1745, %v1075
      %v1779 = vsel %vm1774, %v1746, %v1077
      %v1780 = vsel %vm1774, %v1747, %v1079
      %v1781 = vsel %vm1774, %v1748, %v1081
      %v1782 = vsel %vm1774, %v1749, %v1083
      %v1783 = vsel %vm1774, %v1750, %v1085
      %v1784 = vsel %vm1774, %v1751, %v1087
      %v1785 = vsel %vm1774, %v1752, %v1089
      %v1786 = vsel %vm1774, %v1753, %v1091
      %v1787 = vsel %vm1774, %v1754, %v1093
      %v1788 = vsel %vm1774, %v1755, %v1095
      %v1789 = vsel %vm1774, %v1756, %v1097
      %v1790 = vsel %vm1774, %v1757, %v1099
      %v1791 = vsel %vm1774, %v1758, %v1101
      %v1792 = vsel %vm1774, %v1759, %v1103
      %v1793 = vsel %vm1774, %v1760, %v1105
      %v1794 = vsel %vm1774, %v1761, %v1107
      %v1795 = vsel %vm1774, %v1762, %v1109
      %v1796 = vsel %vm1774, %v1763, %v1111
      %v1797 = vsel %vm1774, %v1764, %v1113
      %v1798 = vsel %vm1774, %v1765, %v1115
      %v1799 = vsel %vm1774, %v1766, %v1117
      %v1800 = vsel %vm1774, %v1767, %v1119
      %v1801 = vsel %vm1774, %v1768, %v1121
      %v1802 = vsel %vm1774, %v1769, %v1123
      %v1803 = vsel %vm1774, %v1770, %v1125
      %v1804 = vsel %vm1774, %v1771, %v1127
      %v1805 = vsel %vm1774, %v1772, %v1129
      %v1806 = vsel %vm1774, %v1773, %v1131
      %vm1807 = vcmask 162816
      %v1808 = vsel %vm1807, %v1775, %v1197
      %v1809 = vsel %vm1807, %v1776, %v1199
      %v1810 = vsel %vm1807, %v1777, %v1201
      %v1811 = vsel %vm1807, %v1778, %v1203
      %v1812 = vsel %vm1807, %v1779, %v1205
      %v1813 = vsel %vm1807, %v1780, %v1207
      %v1814 = vsel %vm1807, %v1781, %v1209
      %v1815 = vsel %vm1807, %v1782, %v1211
      %v1816 = vsel %vm1807, %v1783, %v1213
      %v1817 = vsel %vm1807, %v1784, %v1215
      %v1818 = vsel %vm1807, %v1785, %v1217
      %v1819 = vsel %vm1807, %v1786, %v1219
      %v1820 = vsel %vm1807, %v1787, %v1221
      %v1821 = vsel %vm1807, %v1788, %v1223
      %v1822 = vsel %vm1807, %v1789, %v1225
      %v1823 = vsel %vm1807, %v1790, %v1227
      %v1824 = vsel %vm1807, %v1791, %v1229
      %v1825 = vsel %vm1807, %v1792, %v1231
      %v1826 = vsel %vm1807, %v1793, %v1233
      %v1827 = vsel %vm1807, %v1794, %v1235
      %v1828 = vsel %vm1807, %v1795, %v1237
      %v1829 = vsel %vm1807, %v1796, %v1239
      %v1830 = vsel %vm1807, %v1797, %v1241
      %v1831 = vsel %vm1807, %v1798, %v1243
      %v1832 = vsel %vm1807, %v1799, %v1245
      %v1833 = vsel %vm1807, %v1800, %v1247
      %v1834 = vsel %vm1807, %v1801, %v1249
      %v1835 = vsel %vm1807, %v1802, %v1251
      %v1836 = vsel %vm1807, %v1803, %v1253
      %v1837 = vsel %vm1807, %v1804, %v1255
      %v1838 = vsel %vm1807, %v1805, %v1257
      %v1839 = vsel %vm1807, %v1806, %v1259
      %vm1840 = vcmask 195584
      %v1841 = vsel %vm1840, %v1808, %v1325
      %v1842 = vsel %vm1840, %v1809, %v1327
      %v1843 = vsel %vm1840, %v1810, %v1329
      %v1844 = vsel %vm1840, %v1811, %v1331
      %v1845 = vsel %vm1840, %v1812, %v1333
      %v1846 = vsel %vm1840, %v1813, %v1335
      %v1847 = vsel %vm1840, %v1814, %v1337
      %v1848 = vsel %vm1840, %v1815, %v1339
      %v1849 = vsel %vm1840, %v1816, %v1341
      %v1850 = vsel %vm1840, %v1817, %v1343
      %v1851 = vsel %vm1840, %v1818, %v1345
      %v1852 = vsel %vm1840, %v1819, %v1347
      %v1853 = vsel %vm1840, %v1820, %v1349
      %v1854 = vsel %vm1840, %v1821, %v1351
      %v1855 = vsel %vm1840, %v1822, %v1353
      %v1856 = vsel %vm1840, %v1823, %v1355
      %v1857 = vsel %vm1840, %v1824, %v1357
      %v1858 = vsel %vm1840, %v1825, %v1359
      %v1859 = vsel %vm1840, %v1826, %v1361
      %v1860 = vsel %vm1840, %v1827, %v1363
      %v1861 = vsel %vm1840, %v1828, %v1365
      %v1862 = vsel %vm1840, %v1829, %v1367
      %v1863 = vsel %vm1840, %v1830, %v1369
      %v1864 = vsel %vm1840, %v1831, %v1371
      %v1865 = vsel %vm1840, %v1832, %v1373
      %v1866 = vsel %vm1840, %v1833, %v1375
      %v1867 = vsel %vm1840, %v1834, %v1377
      %v1868 = vsel %vm1840, %v1835, %v1379
      %v1869 = vsel %vm1840, %v1836, %v1381
      %v1870 = vsel %vm1840, %v1837, %v1383
      %v1871 = vsel %vm1840, %v1838, %v1385
      %v1872 = vsel %vm1840, %v1839, %v1387
      %vm1873 = vcmask 228352
      %v1874 = vsel %vm1873, %v1841, %v1453
      %v1875 = vsel %vm1873, %v1842, %v1455
      %v1876 = vsel %vm1873, %v1843, %v1457
      %v1877 = vsel %vm1873, %v1844, %v1459
      %v1878 = vsel %vm1873, %v1845, %v1461
      %v1879 = vsel %vm1873, %v1846, %v1463
      %v1880 = vsel %vm1873, %v1847, %v1465
      %v1881 = vsel %vm1873, %v1848, %v1467
      %v1882 = vsel %vm1873, %v1849, %v1469
      %v1883 = vsel %vm1873, %v1850, %v1471
      %v1884 = vsel %vm1873, %v1851, %v1473
      %v1885 = vsel %vm1873, %v1852, %v1475
      %v1886 = vsel %vm1873, %v1853, %v1477
      %v1887 = vsel %vm1873, %v1854, %v1479
      %v1888 = vsel %vm1873, %v1855, %v1481
      %v1889 = vsel %vm1873, %v1856, %v1483
      %v1890 = vsel %vm1873, %v1857, %v1485
      %v1891 = vsel %vm1873, %v1858, %v1487
      %v1892 = vsel %vm1873, %v1859, %v1489
      %v1893 = vsel %vm1873, %v1860, %v1491
      %v1894 = vsel %vm1873, %v1861, %v1493
      %v1895 = vsel %vm1873, %v1862, %v1495
      %v1896 = vsel %vm1873, %v1863, %v1497
      %v1897 = vsel %vm1873, %v1864, %v1499
      %v1898 = vsel %vm1873, %v1865, %v1501
      %v1899 = vsel %vm1873, %v1866, %v1503
      %v1900 = vsel %vm1873, %v1867, %v1505
      %v1901 = vsel %vm1873, %v1868, %v1507
      %v1902 = vsel %vm1873, %v1869, %v1509
      %v1903 = vsel %vm1873, %v1870, %v1511
      %v1904 = vsel %vm1873, %v1871, %v1513
      %v1905 = vsel %vm1873, %v1872, %v1515
      %vm1906 = vcmask 261120
      %v1907 = vsel %vm1906, %v1874, %v1581
      %v1908 = vsel %vm1906, %v1875, %v1583
      %v1909 = vsel %vm1906, %v1876, %v1585
      %v1910 = vsel %vm1906, %v1877, %v1587
      %v1911 = vsel %vm1906, %v1878, %v1589
      %v1912 = vsel %vm1906, %v1879, %v1591
      %v1913 = vsel %vm1906, %v1880, %v1593
      %v1914 = vsel %vm1906, %v1881, %v1595
      %v1915 = vsel %vm1906, %v1882, %v1597
      %v1916 = vsel %vm1906, %v1883, %v1599
      %v1917 = vsel %vm1906, %v1884, %v1601
      %v1918 = vsel %vm1906, %v1885, %v1603
      %v1919 = vsel %vm1906, %v1886, %v1605
      %v1920 = vsel %vm1906, %v1887, %v1607
      %v1921 = vsel %vm1906, %v1888, %v1609
      %v1922 = vsel %vm1906, %v1889, %v1611
      %v1923 = vsel %vm1906, %v1890, %v1613
      %v1924 = vsel %vm1906, %v1891, %v1615
      %v1925 = vsel %vm1906, %v1892, %v1617
      %v1926 = vsel %vm1906, %v1893, %v1619
      %v1927 = vsel %vm1906, %v1894, %v1621
      %v1928 = vsel %vm1906, %v1895, %v1623
      %v1929 = vsel %vm1906, %v1896, %v1625
      %v1930 = vsel %vm1906, %v1897, %v1627
      %v1931 = vsel %vm1906, %v1898, %v1629
      %v1932 = vsel %vm1906, %v1899, %v1631
      %v1933 = vsel %vm1906, %v1900, %v1633
      %v1934 = vsel %vm1906, %v1901, %v1635
      %v1935 = vsel %vm1906, %v1902, %v1637
      %v1936 = vsel %vm1906, %v1903, %v1639
      %v1937 = vsel %vm1906, %v1904, %v1641
      %v1938 = vsel %vm1906, %v1905, %v1643
      %v1939 = vld [vmem:[%s1] sm:$0xff]
      %v1940 = vld [vmem:[%s1 + $0x8] sm:$0xff]
      %v1941 = vld [vmem:[%s1 + $0x10] sm:$0xff]
      %v1942 = vld [vmem:[%s1 + $0x18] sm:$0xff]
      %v1943 = vld [vmem:[%s1 + $0x20] sm:$0xf]
      %v1944 = vld [vmem:[%s2] sm:$0x1]
      %v1946 = vperm.slane %v1944, 0
      %vm1948 = vcmask 293888
      %v1950 = vsel %vm1948, %v1907, 0
      %v1953 = vsel %vm1948, %v1908, 0
      %v1956 = vsel %vm1948, %v1909, 0
      %v1959 = vsel %vm1948, %v1910, 0
      %v1962 = vsel %vm1948, %v1911, 0
      %v1965 = vsel %vm1948, %v1912, 0
      %v1968 = vsel %vm1948, %v1913, 0
      %v1971 = vsel %vm1948, %v1914, 0
      %v1974 = vsel %vm1948, %v1915, 0
      %v1977 = vsel %vm1948, %v1916, 0
      %v1980 = vsel %vm1948, %v1917, 0
      %v1983 = vsel %vm1948, %v1918, 0
      %v1986 = vsel %vm1948, %v1919, 0
      %v1989 = vsel %vm1948, %v1920, 0
      %v1992 = vsel %vm1948, %v1921, 0
      %v1995 = vsel %vm1948, %v1922, 0
      %v1998 = vsel %vm1948, %v1923, 0
      %v2001 = vsel %vm1948, %v1924, 0
      %v2004 = vsel %vm1948, %v1925, 0
      %v2007 = vsel %vm1948, %v1926, 0
      %v2010 = vsel %vm1948, %v1927, 0
      %v2013 = vsel %vm1948, %v1928, 0
      %v2016 = vsel %vm1948, %v1929, 0
      %v2019 = vsel %vm1948, %v1930, 0
      %v2022 = vsel %vm1948, %v1931, 0
      %v2025 = vsel %vm1948, %v1932, 0
      %v2028 = vsel %vm1948, %v1933, 0
      %v2031 = vsel %vm1948, %v1934, 0
      %v2034 = vsel %vm1948, %v1935, 0
      %v2037 = vsel %vm1948, %v1936, 0
      %v2040 = vsel %vm1948, %v1937, 0
      %v2043 = vsel %vm1948, %v1938, 0
      %vm2045 = vcmask 1043456
      %v2047 = vsel %vm2045, %v1943, 0
      %2049 = vmatpush.msra.mxu0 0.0
      %2050 = vmatpush.msra.mxu0 0.0
      %2051 = vmatpush.msra.mxu0 0.0
      %2052 = vmatpush.msra.mxu0 0.0
      %2053 = vmatpush.msra.mxu0 0.0
      %2054 = vmatpush.msra.mxu0 0.0
      %2055 = vmatpush.msra.mxu0 0.0
      %2056 = vmatpush.msra.mxu0 0.0
      %2057 = vmatpush.msra.mxu0 0.0
      %2058 = vmatpush.msra.mxu0 0.0
      %2059 = vmatpush.msra.mxu0 0.0
      %2060 = vmatpush.msra.mxu0 %v2047
      %2061 = vmatpush.msra.mxu0 %v1942
      %2062 = vmatpush.msra.mxu0 %v1941
      %2063 = vmatpush.msra.mxu0 %v1940
      %2064 = vmatpush.msra.mxu0 %v1939
      %2065 = vmatmul.f32.gmra.mxu0 %v1950
      %v2066 = vpop.f32.mrf.mxu0
      %v2067 = vadd.f32 %v1946, %v2066
      %2068 = vmatmul.f32.gmra.mxu0 %v1953
      %v2069 = vpop.f32.mrf.mxu0
      %v2070 = vadd.f32 %v1946, %v2069
      %2071 = vmatmul.f32.gmra.mxu0 %v1956
      %v2072 = vpop.f32.mrf.mxu0
      %v2073 = vadd.f32 %v1946, %v2072
      %2074 = vmatmul.f32.gmra.mxu0 %v1959
      %v2075 = vpop.f32.mrf.mxu0
      %v2076 = vadd.f32 %v1946, %v2075
      %2077 = vmatmul.f32.gmra.mxu0 %v1962
      %v2078 = vpop.f32.mrf.mxu0
      %v2079 = vadd.f32 %v1946, %v2078
      %2080 = vmatmul.f32.gmra.mxu0 %v1965
      %v2081 = vpop.f32.mrf.mxu0
      %v2082 = vadd.f32 %v1946, %v2081
      %2083 = vmatmul.f32.gmra.mxu0 %v1968
      %v2084 = vpop.f32.mrf.mxu0
      %v2085 = vadd.f32 %v1946, %v2084
      %2086 = vmatmul.f32.gmra.mxu0 %v1971
      %v2087 = vpop.f32.mrf.mxu0
      %v2088 = vadd.f32 %v1946, %v2087
      %2089 = vmatmul.f32.gmra.mxu0 %v1974
      %v2090 = vpop.f32.mrf.mxu0
      %v2091 = vadd.f32 %v1946, %v2090
      %2092 = vmatmul.f32.gmra.mxu0 %v1977
      %v2093 = vpop.f32.mrf.mxu0
      %v2094 = vadd.f32 %v1946, %v2093
      %2095 = vmatmul.f32.gmra.mxu0 %v1980
      %v2096 = vpop.f32.mrf.mxu0
      %v2097 = vadd.f32 %v1946, %v2096
      %2098 = vmatmul.f32.gmra.mxu0 %v1983
      %v2099 = vpop.f32.mrf.mxu0
      %v2100 = vadd.f32 %v1946, %v2099
      %2101 = vmatmul.f32.gmra.mxu0 %v1986
      %v2102 = vpop.f32.mrf.mxu0
      %v2103 = vadd.f32 %v1946, %v2102
      %2104 = vmatmul.f32.gmra.mxu0 %v1989
      %v2105 = vpop.f32.mrf.mxu0
      %v2106 = vadd.f32 %v1946, %v2105
      %2107 = vmatmul.f32.gmra.mxu0 %v1992
      %v2108 = vpop.f32.mrf.mxu0
      %v2109 = vadd.f32 %v1946, %v2108
      %2110 = vmatmul.f32.gmra.mxu0 %v1995
      %v2111 = vpop.f32.mrf.mxu0
      %v2112 = vadd.f32 %v1946, %v2111
      %2113 = vmatmul.f32.gmra.mxu0 %v1998
      %v2114 = vpop.f32.mrf.mxu0
      %v2115 = vadd.f32 %v1946, %v2114
      %2116 = vmatmul.f32.gmra.mxu0 %v2001
      %v2117 = vpop.f32.mrf.mxu0
      %v2118 = vadd.f32 %v1946, %v2117
      %2119 = vmatmul.f32.gmra.mxu0 %v2004
      %v2120 = vpop.f32.mrf.mxu0
      %v2121 = vadd.f32 %v1946, %v2120
      %2122 = vmatmul.f32.gmra.mxu0 %v2007
      %v2123 = vpop.f32.mrf.mxu0
      %v2124 = vadd.f32 %v1946, %v2123
      %2125 = vmatmul.f32.gmra.mxu0 %v2010
      %v2126 = vpop.f32.mrf.mxu0
      %v2127 = vadd.f32 %v1946, %v2126
      %2128 = vmatmul.f32.gmra.mxu0 %v2013
      %v2129 = vpop.f32.mrf.mxu0
      %v2130 = vadd.f32 %v1946, %v2129
      %2131 = vmatmul.f32.gmra.mxu0 %v2016
      %v2132 = vpop.f32.mrf.mxu0
      %v2133 = vadd.f32 %v1946, %v2132
      %2134 = vmatmul.f32.gmra.mxu0 %v2019
      %v2135 = vpop.f32.mrf.mxu0
      %v2136 = vadd.f32 %v1946, %v2135
      %2137 = vmatmul.f32.gmra.mxu0 %v2022
      %v2138 = vpop.f32.mrf.mxu0
      %v2139 = vadd.f32 %v1946, %v2138
      %2140 = vmatmul.f32.gmra.mxu0 %v2025
      %v2141 = vpop.f32.mrf.mxu0
      %v2142 = vadd.f32 %v1946, %v2141
      %2143 = vmatmul.f32.gmra.mxu0 %v2028
      %v2144 = vpop.f32.mrf.mxu0
      %v2145 = vadd.f32 %v1946, %v2144
      %2146 = vmatmul.f32.gmra.mxu0 %v2031
      %v2147 = vpop.f32.mrf.mxu0
      %v2148 = vadd.f32 %v1946, %v2147
      %2149 = vmatmul.f32.gmra.mxu0 %v2034
      %v2150 = vpop.f32.mrf.mxu0
      %v2151 = vadd.f32 %v1946, %v2150
      %2152 = vmatmul.f32.gmra.mxu0 %v2037
      %v2153 = vpop.f32.mrf.mxu0
      %v2154 = vadd.f32 %v1946, %v2153
      %2155 = vmatmul.f32.gmra.mxu0 %v2040
      %v2156 = vpop.f32.mrf.mxu0
      %v2157 = vadd.f32 %v1946, %v2156
      %2158 = vmatmul.f32.gmra.mxu0 %v2043
      %v2159 = vpop.f32.mrf.mxu0
      %v2160 = vadd.f32 %v1946, %v2159
      %2161 = vdwg.mxu0
      %v2162 = vmax.f32 %v2067, 0.0
      %v2163 = vmax.f32 %v2070, 0.0
      %v2164 = vmax.f32 %v2073, 0.0
      %v2165 = vmax.f32 %v2076, 0.0
      %v2166 = vmax.f32 %v2079, 0.0
      %v2167 = vmax.f32 %v2082, 0.0
      %v2168 = vmax.f32 %v2085, 0.0
      %v2169 = vmax.f32 %v2088, 0.0
      %v2170 = vmax.f32 %v2091, 0.0
      %v2171 = vmax.f32 %v2094, 0.0
      %v2172 = vmax.f32 %v2097, 0.0
      %v2173 = vmax.f32 %v2100, 0.0
      %v2174 = vmax.f32 %v2103, 0.0
      %v2175 = vmax.f32 %v2106, 0.0
      %v2176 = vmax.f32 %v2109, 0.0
      %v2177 = vmax.f32 %v2112, 0.0
      %v2178 = vmax.f32 %v2115, 0.0
      %v2179 = vmax.f32 %v2118, 0.0
      %v2180 = vmax.f32 %v2121, 0.0
      %v2181 = vmax.f32 %v2124, 0.0
      %v2182 = vmax.f32 %v2127, 0.0
      %v2183 = vmax.f32 %v2130, 0.0
      %v2184 = vmax.f32 %v2133, 0.0
      %v2185 = vmax.f32 %v2136, 0.0
      %v2186 = vmax.f32 %v2139, 0.0
      %v2187 = vmax.f32 %v2142, 0.0
      %v2188 = vmax.f32 %v2145, 0.0
      %v2189 = vmax.f32 %v2148, 0.0
      %v2190 = vmax.f32 %v2151, 0.0
      %v2191 = vmax.f32 %v2154, 0.0
      %v2192 = vmax.f32 %v2157, 0.0
      %v2193 = vmax.f32 %v2160, 0.0
      %2194 = vst.msk [vmem:[#allocation3] sm:$0xff] %vm1708, 0.0
      %2195 = vst.msk [vmem:[#allocation3 + $0x8] sm:$0xff] %vm1708, 0.0
      %2196 = vst.msk [vmem:[#allocation3 + $0x10] sm:$0xff] %vm1708, 0.0
      %2197 = vst.msk [vmem:[#allocation3 + $0x18] sm:$0xff] %vm1708, 0.0
      %2198 = vst.msk [vmem:[#allocation3 + $0x20] sm:$0xff] %vm1708, 0.0
      %2199 = vst.msk [vmem:[#allocation3 + $0x28] sm:$0xff] %vm1708, 0.0
      %2200 = vst.msk [vmem:[#allocation3 + $0x30] sm:$0xff] %vm1708, 0.0
      %2201 = vst.msk [vmem:[#allocation3 + $0x38] sm:$0xff] %vm1708, 0.0
      %2202 = vst.msk [vmem:[#allocation3 + $0x40] sm:$0xff] %vm1708, 0.0
      %2203 = vst.msk [vmem:[#allocation3 + $0x48] sm:$0xff] %vm1708, 0.0
      %2204 = vst.msk [vmem:[#allocation3 + $0x50] sm:$0xff] %vm1708, 0.0
      %2205 = vst.msk [vmem:[#allocation3 + $0x58] sm:$0xff] %vm1708, 0.0
      %2206 = vst.msk [vmem:[#allocation3 + $0x60] sm:$0xff] %vm1708, 0.0
      %2207 = vst.msk [vmem:[#allocation3 + $0x68] sm:$0xff] %vm1708, 0.0
      %2208 = vst.msk [vmem:[#allocation3 + $0x70] sm:$0xff] %vm1708, 0.0
      %2209 = vst.msk [vmem:[#allocation3 + $0x78] sm:$0xff] %vm1708, 0.0
      %2210 = vst.msk [vmem:[#allocation3 + $0x80] sm:$0xff] %vm1708, 0.0
      %2211 = vst.msk [vmem:[#allocation3 + $0x88] sm:$0xff] %vm1708, 0.0
      %2212 = vst.msk [vmem:[#allocation3 + $0x90] sm:$0xff] %vm1708, 0.0
      %2213 = vst.msk [vmem:[#allocation3 + $0x98] sm:$0xff] %vm1708, 0.0
      %2214 = vst.msk [vmem:[#allocation3 + $0xa0] sm:$0xff] %vm1708, 0.0
      %2215 = vst.msk [vmem:[#allocation3 + $0xa8] sm:$0xff] %vm1708, 0.0
      %2216 = vst.msk [vmem:[#allocation3 + $0xb0] sm:$0xff] %vm1708, 0.0
      %2217 = vst.msk [vmem:[#allocation3 + $0xb8] sm:$0xff] %vm1708, 0.0
      %2218 = vst.msk [vmem:[#allocation3 + $0xc0] sm:$0xff] %vm1708, 0.0
      %2219 = vst.msk [vmem:[#allocation3 + $0xc8] sm:$0xff] %vm1708, 0.0
      %2220 = vst.msk [vmem:[#allocation3 + $0xd0] sm:$0xff] %vm1708, 0.0
      %2221 = vst.msk [vmem:[#allocation3 + $0xd8] sm:$0xff] %vm1708, 0.0
      %2222 = vst.msk [vmem:[#allocation3 + $0xe0] sm:$0xff] %vm1708, 0.0
      %2223 = vst.msk [vmem:[#allocation3 + $0xe8] sm:$0xff] %vm1708, 0.0
      %2224 = vst.msk [vmem:[#allocation3 + $0xf0] sm:$0xff] %vm1708, 0.0
      %2225 = vst.msk [vmem:[#allocation3 + $0xf8] sm:$0xff] %vm1708, 0.0
      %2226 = vst.msk [vmem:[#allocation3 + $0x100] sm:$0xff] %vm1708, 0.0
      %2227 = vst.msk [vmem:[#allocation3 + $0x108] sm:$0xff] %vm1708, 0.0
      %2228 = vst.msk [vmem:[#allocation3 + $0x110] sm:$0xff] %vm1708, 0.0
      %2229 = vst.msk [vmem:[#allocation3 + $0x118] sm:$0xff] %vm1708, 0.0
      %2230 = vst.msk [vmem:[#allocation3 + $0x120] sm:$0xff] %vm1708, 0.0
      %2231 = vst.msk [vmem:[#allocation3 + $0x128] sm:$0xff] %vm1708, 0.0
      %2232 = vst.msk [vmem:[#allocation3 + $0x130] sm:$0xff] %vm1708, 0.0
      %2233 = vst.msk [vmem:[#allocation3 + $0x138] sm:$0xff] %vm1708, 0.0
      %2234 = vst.msk [vmem:[#allocation3 + $0x140] sm:$0xff] %vm1708, 0.0
      %2235 = vst.msk [vmem:[#allocation3 + $0x148] sm:$0xff] %vm1708, 0.0
      %2236 = vst.msk [vmem:[#allocation3 + $0x150] sm:$0xff] %vm1708, 0.0
      %2237 = vst.msk [vmem:[#allocation3 + $0x158] sm:$0xff] %vm1708, 0.0
      %2238 = vst.msk [vmem:[#allocation3 + $0x160] sm:$0xff] %vm1708, 0.0
      %2239 = vst.msk [vmem:[#allocation3 + $0x168] sm:$0xff] %vm1708, 0.0
      %2240 = vst.msk [vmem:[#allocation3 + $0x170] sm:$0xff] %vm1708, 0.0
      %2241 = vst.msk [vmem:[#allocation3 + $0x178] sm:$0xff] %vm1708, 0.0
      %2242 = vst.msk [vmem:[#allocation3 + $0x180] sm:$0xff] %vm1708, 0.0
      %2243 = vst.msk [vmem:[#allocation3 + $0x188] sm:$0xff] %vm1708, 0.0
      %2244 = vst.msk [vmem:[#allocation3 + $0x190] sm:$0xff] %vm1708, 0.0
      %2245 = vst.msk [vmem:[#allocation3 + $0x198] sm:$0xff] %vm1708, 0.0
      %2246 = vst.msk [vmem:[#allocation3 + $0x1a0] sm:$0xff] %vm1708, 0.0
      %2247 = vst.msk [vmem:[#allocation3 + $0x1a8] sm:$0xff] %vm1708, 0.0
      %2248 = vst.msk [vmem:[#allocation3 + $0x1b0] sm:$0xff] %vm1708, 0.0
      %2249 = vst.msk [vmem:[#allocation3 + $0x1b8] sm:$0xff] %vm1708, 0.0
      %2250 = vst.msk [vmem:[#allocation3 + $0x1c0] sm:$0xff] %vm1708, 0.0
      %2251 = vst.msk [vmem:[#allocation3 + $0x1c8] sm:$0xff] %vm1708, 0.0
      %2252 = vst.msk [vmem:[#allocation3 + $0x1d0] sm:$0xff] %vm1708, 0.0
      %2253 = vst.msk [vmem:[#allocation3 + $0x1d8] sm:$0xff] %vm1708, 0.0
      %2254 = vst.msk [vmem:[#allocation3 + $0x1e0] sm:$0xff] %vm1708, 0.0
      %2255 = vst.msk [vmem:[#allocation3 + $0x1e8] sm:$0xff] %vm1708, 0.0
      %2256 = vst.msk [vmem:[#allocation3 + $0x1f0] sm:$0xff] %vm1708, 0.0
      %2257 = vst.msk [vmem:[#allocation3 + $0x1f8] sm:$0xff] %vm1708, 0.0
      %2258 = vst.msk [vmem:[#allocation3 + $0x200] sm:$0xff] %vm1708, 0.0
      %2259 = vst.msk [vmem:[#allocation3 + $0x208] sm:$0xff] %vm1708, 0.0
      %2260 = vst.msk [vmem:[#allocation3 + $0x210] sm:$0xff] %vm1708, 0.0
      %2261 = vst.msk [vmem:[#allocation3 + $0x218] sm:$0xff] %vm1708, 0.0
      %2262 = vst.msk [vmem:[#allocation3 + $0x220] sm:$0xff] %vm1708, 0.0
      %2263 = vst.msk [vmem:[#allocation3 + $0x228] sm:$0xff] %vm1708, 0.0
      %2264 = vst.msk [vmem:[#allocation3 + $0x230] sm:$0xff] %vm1708, 0.0
      %2265 = vst.msk [vmem:[#allocation3 + $0x238] sm:$0xff] %vm1708, 0.0
      %s2266 = scalar_lea.vmem [#allocation3], 32
      %2267 = vst.msk [vmem:[%s2266 + $0x8] sm:$0xff] %vm1708, %v2162
      %2268 = vst.msk [vmem:[%s2266 + $0x10] sm:$0xff] %vm1708, %v2163
      %2269 = vst.msk [vmem:[%s2266 + $0x28] sm:$0xff] %vm1708, %v2164
      %2270 = vst.msk [vmem:[%s2266 + $0x30] sm:$0xff] %vm1708, %v2165
      %2271 = vst.msk [vmem:[%s2266 + $0x48] sm:$0xff] %vm1708, %v2166
      %2272 = vst.msk [vmem:[%s2266 + $0x50] sm:$0xff] %vm1708, %v2167
      %2273 = vst.msk [vmem:[%s2266 + $0x68] sm:$0xff] %vm1708, %v2168
      %2274 = vst.msk [vmem:[%s2266 + $0x70] sm:$0xff] %vm1708, %v2169
      %2275 = vst.msk [vmem:[%s2266 + $0x88] sm:$0xff] %vm1708, %v2170
      %2276 = vst.msk [vmem:[%s2266 + $0x90] sm:$0xff] %vm1708, %v2171
      %2277 = vst.msk [vmem:[%s2266 + $0xa8] sm:$0xff] %vm1708, %v2172
      %2278 = vst.msk [vmem:[%s2266 + $0xb0] sm:$0xff] %vm1708, %v2173
      %2279 = vst.msk [vmem:[%s2266 + $0xc8] sm:$0xff] %vm1708, %v2174
      %2280 = vst.msk [vmem:[%s2266 + $0xd0] sm:$0xff] %vm1708, %v2175
      %2281 = vst.msk [vmem:[%s2266 + $0xe8] sm:$0xff] %vm1708, %v2176
      %2282 = vst.msk [vmem:[%s2266 + $0xf0] sm:$0xff] %vm1708, %v2177
      %2283 = vst.msk [vmem:[%s2266 + $0x108] sm:$0xff] %vm1708, %v2178
      %2284 = vst.msk [vmem:[%s2266 + $0x110] sm:$0xff] %vm1708, %v2179
      %2285 = vst.msk [vmem:[%s2266 + $0x128] sm:$0xff] %vm1708, %v2180
      %2286 = vst.msk [vmem:[%s2266 + $0x130] sm:$0xff] %vm1708, %v2181
      %2287 = vst.msk [vmem:[%s2266 + $0x148] sm:$0xff] %vm1708, %v2182
      %2288 = vst.msk [vmem:[%s2266 + $0x150] sm:$0xff] %vm1708, %v2183
      %2289 = vst.msk [vmem:[%s2266 + $0x168] sm:$0xff] %vm1708, %v2184
      %2290 = vst.msk [vmem:[%s2266 + $0x170] sm:$0xff] %vm1708, %v2185
      %2291 = vst.msk [vmem:[%s2266 + $0x188] sm:$0xff] %vm1708, %v2186
      %2292 = vst.msk [vmem:[%s2266 + $0x190] sm:$0xff] %vm1708, %v2187
      %2293 = vst.msk [vmem:[%s2266 + $0x1a8] sm:$0xff] %vm1708, %v2188
      %2294 = vst.msk [vmem:[%s2266 + $0x1b0] sm:$0xff] %vm1708, %v2189
      %2295 = vst.msk [vmem:[%s2266 + $0x1c8] sm:$0xff] %vm1708, %v2190
      %2296 = vst.msk [vmem:[%s2266 + $0x1d0] sm:$0xff] %vm1708, %v2191
      %2297 = vst.msk [vmem:[%s2266 + $0x1e8] sm:$0xff] %vm1708, %v2192
      %2298 = vst.msk [vmem:[%s2266 + $0x1f0] sm:$0xff] %vm1708, %v2193
      %v2299 = vld [vmem:[#allocation3 + $0x7] sm:$0xff]
      %v2300 = vld [vmem:[#allocation3 + $0xf] sm:$0xff]
      %v2301 = vld [vmem:[#allocation3 + $0x27] sm:$0xff]
      %v2302 = vld [vmem:[#allocation3 + $0x2f] sm:$0xff]
      %v2303 = vld [vmem:[#allocation3 + $0x47] sm:$0xff]
      %v2304 = vld [vmem:[#allocation3 + $0x4f] sm:$0xff]
      %v2305 = vld [vmem:[#allocation3 + $0x67] sm:$0xff]
      %v2306 = vld [vmem:[#allocation3 + $0x6f] sm:$0xff]
      %v2307 = vld [vmem:[#allocation3 + $0x87] sm:$0xff]
      %v2308 = vld [vmem:[#allocation3 + $0x8f] sm:$0xff]
      %v2309 = vld [vmem:[#allocation3 + $0xa7] sm:$0xff]
      %v2310 = vld [vmem:[#allocation3 + $0xaf] sm:$0xff]
      %v2311 = vld [vmem:[#allocation3 + $0xc7] sm:$0xff]
      %v2312 = vld [vmem:[#allocation3 + $0xcf] sm:$0xff]
      %v2313 = vld [vmem:[#allocation3 + $0xe7] sm:$0xff]
      %v2314 = vld [vmem:[#allocation3 + $0xef] sm:$0xff]
      %v2315 = vld [vmem:[#allocation3 + $0x107] sm:$0xff]
      %v2316 = vld [vmem:[#allocation3 + $0x10f] sm:$0xff]
      %v2317 = vld [vmem:[#allocation3 + $0x127] sm:$0xff]
      %v2318 = vld [vmem:[#allocation3 + $0x12f] sm:$0xff]
      %v2319 = vld [vmem:[#allocation3 + $0x147] sm:$0xff]
      %v2320 = vld [vmem:[#allocation3 + $0x14f] sm:$0xff]
      %v2321 = vld [vmem:[#allocation3 + $0x167] sm:$0xff]
      %v2322 = vld [vmem:[#allocation3 + $0x16f] sm:$0xff]
      %v2323 = vld [vmem:[#allocation3 + $0x187] sm:$0xff]
      %v2324 = vld [vmem:[#allocation3 + $0x18f] sm:$0xff]
      %v2325 = vld [vmem:[#allocation3 + $0x1a7] sm:$0xff]
      %v2326 = vld [vmem:[#allocation3 + $0x1af] sm:$0xff]
      %v2327 = vld [vmem:[#allocation3 + $0x1c7] sm:$0xff]
      %v2328 = vld [vmem:[#allocation3 + $0x1cf] sm:$0xff]
      %v2329 = vld [vmem:[#allocation3 + $0x1e7] sm:$0xff]
      %v2330 = vld [vmem:[#allocation3 + $0x1ef] sm:$0xff]
      %v2331 = vld [vmem:[#allocation3 + $0x8] sm:$0xff]
      %v2332 = vld [vmem:[#allocation3 + $0x10] sm:$0xff]
      %v2333 = vld [vmem:[#allocation3 + $0x28] sm:$0xff]
      %v2334 = vld [vmem:[#allocation3 + $0x30] sm:$0xff]
      %v2335 = vld [vmem:[#allocation3 + $0x48] sm:$0xff]
      %v2336 = vld [vmem:[#allocation3 + $0x50] sm:$0xff]
      %v2337 = vld [vmem:[#allocation3 + $0x68] sm:$0xff]
      %v2338 = vld [vmem:[#allocation3 + $0x70] sm:$0xff]
      %v2339 = vld [vmem:[#allocation3 + $0x88] sm:$0xff]
      %v2340 = vld [vmem:[#allocation3 + $0x90] sm:$0xff]
      %v2341 = vld [vmem:[#allocation3 + $0xa8] sm:$0xff]
      %v2342 = vld [vmem:[#allocation3 + $0xb0] sm:$0xff]
      %v2343 = vld [vmem:[#allocation3 + $0xc8] sm:$0xff]
      %v2344 = vld [vmem:[#allocation3 + $0xd0] sm:$0xff]
      %v2345 = vld [vmem:[#allocation3 + $0xe8] sm:$0xff]
      %v2346 = vld [vmem:[#allocation3 + $0xf0] sm:$0xff]
      %v2347 = vld [vmem:[#allocation3 + $0x108] sm:$0xff]
      %v2348 = vld [vmem:[#allocation3 + $0x110] sm:$0xff]
      %v2349 = vld [vmem:[#allocation3 + $0x128] sm:$0xff]
      %v2350 = vld [vmem:[#allocation3 + $0x130] sm:$0xff]
      %v2351 = vld [vmem:[#allocation3 + $0x148] sm:$0xff]
      %v2352 = vld [vmem:[#allocation3 + $0x150] sm:$0xff]
      %v2353 = vld [vmem:[#allocation3 + $0x168] sm:$0xff]
      %v2354 = vld [vmem:[#allocation3 + $0x170] sm:$0xff]
      %v2355 = vld [vmem:[#allocation3 + $0x188] sm:$0xff]
      %v2356 = vld [vmem:[#allocation3 + $0x190] sm:$0xff]
      %v2357 = vld [vmem:[#allocation3 + $0x1a8] sm:$0xff]
      %v2358 = vld [vmem:[#allocation3 + $0x1b0] sm:$0xff]
      %v2359 = vld [vmem:[#allocation3 + $0x1c8] sm:$0xff]
      %v2360 = vld [vmem:[#allocation3 + $0x1d0] sm:$0xff]
      %v2361 = vld [vmem:[#allocation3 + $0x1e8] sm:$0xff]
      %v2362 = vld [vmem:[#allocation3 + $0x1f0] sm:$0xff]
      %v2363 = vld [vmem:[#allocation3 + $0x9] sm:$0xff]
      %v2364 = vld [vmem:[#allocation3 + $0x11] sm:$0xff]
      %v2365 = vld [vmem:[#allocation3 + $0x29] sm:$0xff]
      %v2366 = vld [vmem:[#allocation3 + $0x31] sm:$0xff]
      %v2367 = vld [vmem:[#allocation3 + $0x49] sm:$0xff]
      %v2368 = vld [vmem:[#allocation3 + $0x51] sm:$0xff]
      %v2369 = vld [vmem:[#allocation3 + $0x69] sm:$0xff]
      %v2370 = vld [vmem:[#allocation3 + $0x71] sm:$0xff]
      %v2371 = vld [vmem:[#allocation3 + $0x89] sm:$0xff]
      %v2372 = vld [vmem:[#allocation3 + $0x91] sm:$0xff]
      %v2373 = vld [vmem:[#allocation3 + $0xa9] sm:$0xff]
      %v2374 = vld [vmem:[#allocation3 + $0xb1] sm:$0xff]
      %v2375 = vld [vmem:[#allocation3 + $0xc9] sm:$0xff]
      %v2376 = vld [vmem:[#allocation3 + $0xd1] sm:$0xff]
      %v2377 = vld [vmem:[#allocation3 + $0xe9] sm:$0xff]
      %v2378 = vld [vmem:[#allocation3 + $0xf1] sm:$0xff]
      %v2379 = vld [vmem:[#allocation3 + $0x109] sm:$0xff]
      %v2380 = vld [vmem:[#allocation3 + $0x111] sm:$0xff]
      %v2381 = vld [vmem:[#allocation3 + $0x129] sm:$0xff]
      %v2382 = vld [vmem:[#allocation3 + $0x131] sm:$0xff]
      %v2383 = vld [vmem:[#allocation3 + $0x149] sm:$0xff]
      %v2384 = vld [vmem:[#allocation3 + $0x151] sm:$0xff]
      %v2385 = vld [vmem:[#allocation3 + $0x169] sm:$0xff]
      %v2386 = vld [vmem:[#allocation3 + $0x171] sm:$0xff]
      %v2387 = vld [vmem:[#allocation3 + $0x189] sm:$0xff]
      %v2388 = vld [vmem:[#allocation3 + $0x191] sm:$0xff]
      %v2389 = vld [vmem:[#allocation3 + $0x1a9] sm:$0xff]
      %v2390 = vld [vmem:[#allocation3 + $0x1b1] sm:$0xff]
      %v2391 = vld [vmem:[#allocation3 + $0x1c9] sm:$0xff]
      %v2392 = vld [vmem:[#allocation3 + $0x1d1] sm:$0xff]
      %v2393 = vld [vmem:[#allocation3 + $0x1e9] sm:$0xff]
      %v2394 = vld [vmem:[#allocation3 + $0x1f1] sm:$0xff]
      %v2395 = vld [vmem:[%s2266 + $0x7] sm:$0xff]
      %v2396 = vld [vmem:[%s2266 + $0xf] sm:$0xff]
      %v2397 = vld [vmem:[%s2266 + $0x27] sm:$0xff]
      %v2398 = vld [vmem:[%s2266 + $0x2f] sm:$0xff]
      %v2399 = vld [vmem:[%s2266 + $0x47] sm:$0xff]
      %v2400 = vld [vmem:[%s2266 + $0x4f] sm:$0xff]
      %v2401 = vld [vmem:[%s2266 + $0x67] sm:$0xff]
      %v2402 = vld [vmem:[%s2266 + $0x6f] sm:$0xff]
      %v2403 = vld [vmem:[%s2266 + $0x87] sm:$0xff]
      %v2404 = vld [vmem:[%s2266 + $0x8f] sm:$0xff]
      %v2405 = vld [vmem:[%s2266 + $0xa7] sm:$0xff]
      %v2406 = vld [vmem:[%s2266 + $0xaf] sm:$0xff]
      %v2407 = vld [vmem:[%s2266 + $0xc7] sm:$0xff]
      %v2408 = vld [vmem:[%s2266 + $0xcf] sm:$0xff]
      %v2409 = vld [vmem:[%s2266 + $0xe7] sm:$0xff]
      %v2410 = vld [vmem:[%s2266 + $0xef] sm:$0xff]
      %v2411 = vld [vmem:[%s2266 + $0x107] sm:$0xff]
      %v2412 = vld [vmem:[%s2266 + $0x10f] sm:$0xff]
      %v2413 = vld [vmem:[%s2266 + $0x127] sm:$0xff]
      %v2414 = vld [vmem:[%s2266 + $0x12f] sm:$0xff]
      %v2415 = vld [vmem:[%s2266 + $0x147] sm:$0xff]
      %v2416 = vld [vmem:[%s2266 + $0x14f] sm:$0xff]
      %v2417 = vld [vmem:[%s2266 + $0x167] sm:$0xff]
      %v2418 = vld [vmem:[%s2266 + $0x16f] sm:$0xff]
      %v2419 = vld [vmem:[%s2266 + $0x187] sm:$0xff]
      %v2420 = vld [vmem:[%s2266 + $0x18f] sm:$0xff]
      %v2421 = vld [vmem:[%s2266 + $0x1a7] sm:$0xff]
      %v2422 = vld [vmem:[%s2266 + $0x1af] sm:$0xff]
      %v2423 = vld [vmem:[%s2266 + $0x1c7] sm:$0xff]
      %v2424 = vld [vmem:[%s2266 + $0x1cf] sm:$0xff]
      %v2425 = vld [vmem:[%s2266 + $0x1e7] sm:$0xff]
      %v2426 = vld [vmem:[%s2266 + $0x1ef] sm:$0xff]
      %v2427 = vld [vmem:[%s2266 + $0x8] sm:$0xff]
      %v2428 = vld [vmem:[%s2266 + $0x10] sm:$0xff]
      %v2429 = vld [vmem:[%s2266 + $0x28] sm:$0xff]
      %v2430 = vld [vmem:[%s2266 + $0x30] sm:$0xff]
      %v2431 = vld [vmem:[%s2266 + $0x48] sm:$0xff]
      %v2432 = vld [vmem:[%s2266 + $0x50] sm:$0xff]
      %v2433 = vld [vmem:[%s2266 + $0x68] sm:$0xff]
      %v2434 = vld [vmem:[%s2266 + $0x70] sm:$0xff]
      %v2435 = vld [vmem:[%s2266 + $0x88] sm:$0xff]
      %v2436 = vld [vmem:[%s2266 + $0x90] sm:$0xff]
      %v2437 = vld [vmem:[%s2266 + $0xa8] sm:$0xff]
      %v2438 = vld [vmem:[%s2266 + $0xb0] sm:$0xff]
      %v2439 = vld [vmem:[%s2266 + $0xc8] sm:$0xff]
      %v2440 = vld [vmem:[%s2266 + $0xd0] sm:$0xff]
      %v2441 = vld [vmem:[%s2266 + $0xe8] sm:$0xff]
      %v2442 = vld [vmem:[%s2266 + $0xf0] sm:$0xff]
      %v2443 = vld [vmem:[%s2266 + $0x108] sm:$0xff]
      %v2444 = vld [vmem:[%s2266 + $0x110] sm:$0xff]
      %v2445 = vld [vmem:[%s2266 + $0x128] sm:$0xff]
      %v2446 = vld [vmem:[%s2266 + $0x130] sm:$0xff]
      %v2447 = vld [vmem:[%s2266 + $0x148] sm:$0xff]
      %v2448 = vld [vmem:[%s2266 + $0x150] sm:$0xff]
      %v2449 = vld [vmem:[%s2266 + $0x168] sm:$0xff]
      %v2450 = vld [vmem:[%s2266 + $0x170] sm:$0xff]
      %v2451 = vld [vmem:[%s2266 + $0x188] sm:$0xff]
      %v2452 = vld [vmem:[%s2266 + $0x190] sm:$0xff]
      %v2453 = vld [vmem:[%s2266 + $0x1a8] sm:$0xff]
      %v2454 = vld [vmem:[%s2266 + $0x1b0] sm:$0xff]
      %v2455 = vld [vmem:[%s2266 + $0x1c8] sm:$0xff]
      %v2456 = vld [vmem:[%s2266 + $0x1d0] sm:$0xff]
      %v2457 = vld [vmem:[%s2266 + $0x1e8] sm:$0xff]
      %v2458 = vld [vmem:[%s2266 + $0x1f0] sm:$0xff]
      %v2459 = vld [vmem:[%s2266 + $0x9] sm:$0xff]
      %v2460 = vld [vmem:[%s2266 + $0x11] sm:$0xff]
      %v2461 = vld [vmem:[%s2266 + $0x29] sm:$0xff]
      %v2462 = vld [vmem:[%s2266 + $0x31] sm:$0xff]
      %v2463 = vld [vmem:[%s2266 + $0x49] sm:$0xff]
      %v2464 = vld [vmem:[%s2266 + $0x51] sm:$0xff]
      %v2465 = vld [vmem:[%s2266 + $0x69] sm:$0xff]
      %v2466 = vld [vmem:[%s2266 + $0x71] sm:$0xff]
      %v2467 = vld [vmem:[%s2266 + $0x89] sm:$0xff]
      %v2468 = vld [vmem:[%s2266 + $0x91] sm:$0xff]
      %v2469 = vld [vmem:[%s2266 + $0xa9] sm:$0xff]
      %v2470 = vld [vmem:[%s2266 + $0xb1] sm:$0xff]
      %v2471 = vld [vmem:[%s2266 + $0xc9] sm:$0xff]
      %v2472 = vld [vmem:[%s2266 + $0xd1] sm:$0xff]
      %v2473 = vld [vmem:[%s2266 + $0xe9] sm:$0xff]
      %v2474 = vld [vmem:[%s2266 + $0xf1] sm:$0xff]
      %v2475 = vld [vmem:[%s2266 + $0x109] sm:$0xff]
      %v2476 = vld [vmem:[%s2266 + $0x111] sm:$0xff]
      %v2477 = vld [vmem:[%s2266 + $0x129] sm:$0xff]
      %v2478 = vld [vmem:[%s2266 + $0x131] sm:$0xff]
      %v2479 = vld [vmem:[%s2266 + $0x149] sm:$0xff]
      %v2480 = vld [vmem:[%s2266 + $0x151] sm:$0xff]
      %v2481 = vld [vmem:[%s2266 + $0x169] sm:$0xff]
      %v2482 = vld [vmem:[%s2266 + $0x171] sm:$0xff]
      %v2483 = vld [vmem:[%s2266 + $0x189] sm:$0xff]
      %v2484 = vld [vmem:[%s2266 + $0x191] sm:$0xff]
      %v2485 = vld [vmem:[%s2266 + $0x1a9] sm:$0xff]
      %v2486 = vld [vmem:[%s2266 + $0x1b1] sm:$0xff]
      %v2487 = vld [vmem:[%s2266 + $0x1c9] sm:$0xff]
      %v2488 = vld [vmem:[%s2266 + $0x1d1] sm:$0xff]
      %v2489 = vld [vmem:[%s2266 + $0x1e9] sm:$0xff]
      %v2490 = vld [vmem:[%s2266 + $0x1f1] sm:$0xff]
      %s2491 = scalar_lea.vmem [#allocation3], 64
      %v2492 = vld [vmem:[%s2491 + $0x7] sm:$0xff]
      %v2493 = vld [vmem:[%s2491 + $0xf] sm:$0xff]
      %v2494 = vld [vmem:[%s2491 + $0x27] sm:$0xff]
      %v2495 = vld [vmem:[%s2491 + $0x2f] sm:$0xff]
      %v2496 = vld [vmem:[%s2491 + $0x47] sm:$0xff]
      %v2497 = vld [vmem:[%s2491 + $0x4f] sm:$0xff]
      %v2498 = vld [vmem:[%s2491 + $0x67] sm:$0xff]
      %v2499 = vld [vmem:[%s2491 + $0x6f] sm:$0xff]
      %v2500 = vld [vmem:[%s2491 + $0x87] sm:$0xff]
      %v2501 = vld [vmem:[%s2491 + $0x8f] sm:$0xff]
      %v2502 = vld [vmem:[%s2491 + $0xa7] sm:$0xff]
      %v2503 = vld [vmem:[%s2491 + $0xaf] sm:$0xff]
      %v2504 = vld [vmem:[%s2491 + $0xc7] sm:$0xff]
      %v2505 = vld [vmem:[%s2491 + $0xcf] sm:$0xff]
      %v2506 = vld [vmem:[%s2491 + $0xe7] sm:$0xff]
      %v2507 = vld [vmem:[%s2491 + $0xef] sm:$0xff]
      %v2508 = vld [vmem:[%s2491 + $0x107] sm:$0xff]
      %v2509 = vld [vmem:[%s2491 + $0x10f] sm:$0xff]
      %v2510 = vld [vmem:[%s2491 + $0x127] sm:$0xff]
      %v2511 = vld [vmem:[%s2491 + $0x12f] sm:$0xff]
      %v2512 = vld [vmem:[%s2491 + $0x147] sm:$0xff]
      %v2513 = vld [vmem:[%s2491 + $0x14f] sm:$0xff]
      %v2514 = vld [vmem:[%s2491 + $0x167] sm:$0xff]
      %v2515 = vld [vmem:[%s2491 + $0x16f] sm:$0xff]
      %v2516 = vld [vmem:[%s2491 + $0x187] sm:$0xff]
      %v2517 = vld [vmem:[%s2491 + $0x18f] sm:$0xff]
      %v2518 = vld [vmem:[%s2491 + $0x1a7] sm:$0xff]
      %v2519 = vld [vmem:[%s2491 + $0x1af] sm:$0xff]
      %v2520 = vld [vmem:[%s2491 + $0x1c7] sm:$0xff]
      %v2521 = vld [vmem:[%s2491 + $0x1cf] sm:$0xff]
      %v2522 = vld [vmem:[%s2491 + $0x1e7] sm:$0xff]
      %v2523 = vld [vmem:[%s2491 + $0x1ef] sm:$0xff]
      %v2524 = vld [vmem:[%s2491 + $0x8] sm:$0xff]
      %v2525 = vld [vmem:[%s2491 + $0x10] sm:$0xff]
      %v2526 = vld [vmem:[%s2491 + $0x28] sm:$0xff]
      %v2527 = vld [vmem:[%s2491 + $0x30] sm:$0xff]
      %v2528 = vld [vmem:[%s2491 + $0x48] sm:$0xff]
      %v2529 = vld [vmem:[%s2491 + $0x50] sm:$0xff]
      %v2530 = vld [vmem:[%s2491 + $0x68] sm:$0xff]
      %v2531 = vld [vmem:[%s2491 + $0x70] sm:$0xff]
      %v2532 = vld [vmem:[%s2491 + $0x88] sm:$0xff]
      %v2533 = vld [vmem:[%s2491 + $0x90] sm:$0xff]
      %v2534 = vld [vmem:[%s2491 + $0xa8] sm:$0xff]
      %v2535 = vld [vmem:[%s2491 + $0xb0] sm:$0xff]
      %v2536 = vld [vmem:[%s2491 + $0xc8] sm:$0xff]
      %v2537 = vld [vmem:[%s2491 + $0xd0] sm:$0xff]
      %v2538 = vld [vmem:[%s2491 + $0xe8] sm:$0xff]
      %v2539 = vld [vmem:[%s2491 + $0xf0] sm:$0xff]
      %v2540 = vld [vmem:[%s2491 + $0x108] sm:$0xff]
      %v2541 = vld [vmem:[%s2491 + $0x110] sm:$0xff]
      %v2542 = vld [vmem:[%s2491 + $0x128] sm:$0xff]
      %v2543 = vld [vmem:[%s2491 + $0x130] sm:$0xff]
      %v2544 = vld [vmem:[%s2491 + $0x148] sm:$0xff]
      %v2545 = vld [vmem:[%s2491 + $0x150] sm:$0xff]
      %v2546 = vld [vmem:[%s2491 + $0x168] sm:$0xff]
      %v2547 = vld [vmem:[%s2491 + $0x170] sm:$0xff]
      %v2548 = vld [vmem:[%s2491 + $0x188] sm:$0xff]
      %v2549 = vld [vmem:[%s2491 + $0x190] sm:$0xff]
      %v2550 = vld [vmem:[%s2491 + $0x1a8] sm:$0xff]
      %v2551 = vld [vmem:[%s2491 + $0x1b0] sm:$0xff]
      %v2552 = vld [vmem:[%s2491 + $0x1c8] sm:$0xff]
      %v2553 = vld [vmem:[%s2491 + $0x1d0] sm:$0xff]
      %v2554 = vld [vmem:[%s2491 + $0x1e8] sm:$0xff]
      %v2555 = vld [vmem:[%s2491 + $0x1f0] sm:$0xff]
      %v2556 = vld [vmem:[%s2491 + $0x9] sm:$0xff]
      %v2557 = vld [vmem:[%s2491 + $0x11] sm:$0xff]
      %v2558 = vld [vmem:[%s2491 + $0x29] sm:$0xff]
      %v2559 = vld [vmem:[%s2491 + $0x31] sm:$0xff]
      %v2560 = vld [vmem:[%s2491 + $0x49] sm:$0xff]
      %v2561 = vld [vmem:[%s2491 + $0x51] sm:$0xff]
      %v2562 = vld [vmem:[%s2491 + $0x69] sm:$0xff]
      %v2563 = vld [vmem:[%s2491 + $0x71] sm:$0xff]
      %v2564 = vld [vmem:[%s2491 + $0x89] sm:$0xff]
      %v2565 = vld [vmem:[%s2491 + $0x91] sm:$0xff]
      %v2566 = vld [vmem:[%s2491 + $0xa9] sm:$0xff]
      %v2567 = vld [vmem:[%s2491 + $0xb1] sm:$0xff]
      %v2568 = vld [vmem:[%s2491 + $0xc9] sm:$0xff]
      %v2569 = vld [vmem:[%s2491 + $0xd1] sm:$0xff]
      %v2570 = vld [vmem:[%s2491 + $0xe9] sm:$0xff]
      %v2571 = vld [vmem:[%s2491 + $0xf1] sm:$0xff]
      %v2572 = vld [vmem:[%s2491 + $0x109] sm:$0xff]
      %v2573 = vld [vmem:[%s2491 + $0x111] sm:$0xff]
      %v2574 = vld [vmem:[%s2491 + $0x129] sm:$0xff]
      %v2575 = vld [vmem:[%s2491 + $0x131] sm:$0xff]
      %v2576 = vld [vmem:[%s2491 + $0x149] sm:$0xff]
      %v2577 = vld [vmem:[%s2491 + $0x151] sm:$0xff]
      %v2578 = vld [vmem:[%s2491 + $0x169] sm:$0xff]
      %v2579 = vld [vmem:[%s2491 + $0x171] sm:$0xff]
      %v2580 = vld [vmem:[%s2491 + $0x189] sm:$0xff]
      %v2581 = vld [vmem:[%s2491 + $0x191] sm:$0xff]
      %v2582 = vld [vmem:[%s2491 + $0x1a9] sm:$0xff]
      %v2583 = vld [vmem:[%s2491 + $0x1b1] sm:$0xff]
      %v2584 = vld [vmem:[%s2491 + $0x1c9] sm:$0xff]
      %v2585 = vld [vmem:[%s2491 + $0x1d1] sm:$0xff]
      %v2586 = vld [vmem:[%s2491 + $0x1e9] sm:$0xff]
      %v2587 = vld [vmem:[%s2491 + $0x1f1] sm:$0xff]
      %2620 = vrot.lane.b32.xlu0 %v2331, 8
      %v2621 = vpop.permute.xlu0 %2620
      %2622 = vrot.lane.b32.xlu0 %v2332, 8
      %v2623 = vpop.permute.xlu0 %2622
      %2624 = vrot.lane.b32.xlu0 %v2333, 8
      %v2625 = vpop.permute.xlu0 %2624
      %2626 = vrot.lane.b32.xlu0 %v2334, 8
      %v2627 = vpop.permute.xlu0 %2626
      %2628 = vrot.lane.b32.xlu0 %v2335, 8
      %v2629 = vpop.permute.xlu0 %2628
      %2630 = vrot.lane.b32.xlu0 %v2336, 8
      %v2631 = vpop.permute.xlu0 %2630
      %2632 = vrot.lane.b32.xlu0 %v2337, 8
      %v2633 = vpop.permute.xlu0 %2632
      %2634 = vrot.lane.b32.xlu0 %v2338, 8
      %v2635 = vpop.permute.xlu0 %2634
      %2636 = vrot.lane.b32.xlu0 %v2339, 8
      %v2637 = vpop.permute.xlu0 %2636
      %2638 = vrot.lane.b32.xlu0 %v2340, 8
      %v2639 = vpop.permute.xlu0 %2638
      %2640 = vrot.lane.b32.xlu0 %v2341, 8
      %v2641 = vpop.permute.xlu0 %2640
      %2642 = vrot.lane.b32.xlu0 %v2342, 8
      %v2643 = vpop.permute.xlu0 %2642
      %2644 = vrot.lane.b32.xlu0 %v2343, 8
      %v2645 = vpop.permute.xlu0 %2644
      %2646 = vrot.lane.b32.xlu0 %v2344, 8
      %v2647 = vpop.permute.xlu0 %2646
      %2648 = vrot.lane.b32.xlu0 %v2345, 8
      %v2649 = vpop.permute.xlu0 %2648
      %2650 = vrot.lane.b32.xlu0 %v2346, 8
      %v2651 = vpop.permute.xlu0 %2650
      %2652 = vrot.lane.b32.xlu0 %v2347, 8
      %v2653 = vpop.permute.xlu0 %2652
      %2654 = vrot.lane.b32.xlu0 %v2348, 8
      %v2655 = vpop.permute.xlu0 %2654
      %2656 = vrot.lane.b32.xlu0 %v2349, 8
      %v2657 = vpop.permute.xlu0 %2656
      %2658 = vrot.lane.b32.xlu0 %v2350, 8
      %v2659 = vpop.permute.xlu0 %2658
      %2660 = vrot.lane.b32.xlu0 %v2351, 8
      %v2661 = vpop.permute.xlu0 %2660
      %2662 = vrot.lane.b32.xlu0 %v2352, 8
      %v2663 = vpop.permute.xlu0 %2662
      %2664 = vrot.lane.b32.xlu0 %v2353, 8
      %v2665 = vpop.permute.xlu0 %2664
      %2666 = vrot.lane.b32.xlu0 %v2354, 8
      %v2667 = vpop.permute.xlu0 %2666
      %2668 = vrot.lane.b32.xlu0 %v2355, 8
      %v2669 = vpop.permute.xlu0 %2668
      %2670 = vrot.lane.b32.xlu0 %v2356, 8
      %v2671 = vpop.permute.xlu0 %2670
      %2672 = vrot.lane.b32.xlu0 %v2357, 8
      %v2673 = vpop.permute.xlu0 %2672
      %2674 = vrot.lane.b32.xlu0 %v2358, 8
      %v2675 = vpop.permute.xlu0 %2674
      %2676 = vrot.lane.b32.xlu0 %v2359, 8
      %v2677 = vpop.permute.xlu0 %2676
      %2678 = vrot.lane.b32.xlu0 %v2360, 8
      %v2679 = vpop.permute.xlu0 %2678
      %2680 = vrot.lane.b32.xlu0 %v2361, 8
      %v2681 = vpop.permute.xlu0 %2680
      %2682 = vrot.lane.b32.xlu0 %v2362, 8
      %v2683 = vpop.permute.xlu0 %2682
      %2748 = vrot.lane.b32.xlu0 %v2363, 16
      %v2749 = vpop.permute.xlu0 %2748
      %2750 = vrot.lane.b32.xlu0 %v2364, 16
      %v2751 = vpop.permute.xlu0 %2750
      %2752 = vrot.lane.b32.xlu0 %v2365, 16
      %v2753 = vpop.permute.xlu0 %2752
      %2754 = vrot.lane.b32.xlu0 %v2366, 16
      %v2755 = vpop.permute.xlu0 %2754
      %2756 = vrot.lane.b32.xlu0 %v2367, 16
      %v2757 = vpop.permute.xlu0 %2756
      %2758 = vrot.lane.b32.xlu0 %v2368, 16
      %v2759 = vpop.permute.xlu0 %2758
      %2760 = vrot.lane.b32.xlu0 %v2369, 16
      %v2761 = vpop.permute.xlu0 %2760
      %2762 = vrot.lane.b32.xlu0 %v2370, 16
      %v2763 = vpop.permute.xlu0 %2762
      %2764 = vrot.lane.b32.xlu0 %v2371, 16
      %v2765 = vpop.permute.xlu0 %2764
      %2766 = vrot.lane.b32.xlu0 %v2372, 16
      %v2767 = vpop.permute.xlu0 %2766
      %2768 = vrot.lane.b32.xlu0 %v2373, 16
      %v2769 = vpop.permute.xlu0 %2768
      %2770 = vrot.lane.b32.xlu0 %v2374, 16
      %v2771 = vpop.permute.xlu0 %2770
      %2772 = vrot.lane.b32.xlu0 %v2375, 16
      %v2773 = vpop.permute.xlu0 %2772
      %2774 = vrot.lane.b32.xlu0 %v2376, 16
      %v2775 = vpop.permute.xlu0 %2774
      %2776 = vrot.lane.b32.xlu0 %v2377, 16
      %v2777 = vpop.permute.xlu0 %2776
      %2778 = vrot.lane.b32.xlu0 %v2378, 16
      %v2779 = vpop.permute.xlu0 %2778
      %2780 = vrot.lane.b32.xlu0 %v2379, 16
      %v2781 = vpop.permute.xlu0 %2780
      %2782 = vrot.lane.b32.xlu0 %v2380, 16
      %v2783 = vpop.permute.xlu0 %2782
      %2784 = vrot.lane.b32.xlu0 %v2381, 16
      %v2785 = vpop.permute.xlu0 %2784
      %2786 = vrot.lane.b32.xlu0 %v2382, 16
      %v2787 = vpop.permute.xlu0 %2786
      %2788 = vrot.lane.b32.xlu0 %v2383, 16
      %v2789 = vpop.permute.xlu0 %2788
      %2790 = vrot.lane.b32.xlu0 %v2384, 16
      %v2791 = vpop.permute.xlu0 %2790
      %2792 = vrot.lane.b32.xlu0 %v2385, 16
      %v2793 = vpop.permute.xlu0 %2792
      %2794 = vrot.lane.b32.xlu0 %v2386, 16
      %v2795 = vpop.permute.xlu0 %2794
      %2796 = vrot.lane.b32.xlu0 %v2387, 16
      %v2797 = vpop.permute.xlu0 %2796
      %2798 = vrot.lane.b32.xlu0 %v2388, 16
      %v2799 = vpop.permute.xlu0 %2798
      %2800 = vrot.lane.b32.xlu0 %v2389, 16
      %v2801 = vpop.permute.xlu0 %2800
      %2802 = vrot.lane.b32.xlu0 %v2390, 16
      %v2803 = vpop.permute.xlu0 %2802
      %2804 = vrot.lane.b32.xlu0 %v2391, 16
      %v2805 = vpop.permute.xlu0 %2804
      %2806 = vrot.lane.b32.xlu0 %v2392, 16
      %v2807 = vpop.permute.xlu0 %2806
      %2808 = vrot.lane.b32.xlu0 %v2393, 16
      %v2809 = vpop.permute.xlu0 %2808
      %2810 = vrot.lane.b32.xlu0 %v2394, 16
      %v2811 = vpop.permute.xlu0 %2810
      %2876 = vrot.lane.b32.xlu0 %v2395, 24
      %v2877 = vpop.permute.xlu0 %2876
      %2878 = vrot.lane.b32.xlu0 %v2396, 24
      %v2879 = vpop.permute.xlu0 %2878
      %2880 = vrot.lane.b32.xlu0 %v2397, 24
      %v2881 = vpop.permute.xlu0 %2880
      %2882 = vrot.lane.b32.xlu0 %v2398, 24
      %v2883 = vpop.permute.xlu0 %2882
      %2884 = vrot.lane.b32.xlu0 %v2399, 24
      %v2885 = vpop.permute.xlu0 %2884
      %2886 = vrot.lane.b32.xlu0 %v2400, 24
      %v2887 = vpop.permute.xlu0 %2886
      %2888 = vrot.lane.b32.xlu0 %v2401, 24
      %v2889 = vpop.permute.xlu0 %2888
      %2890 = vrot.lane.b32.xlu0 %v2402, 24
      %v2891 = vpop.permute.xlu0 %2890
      %2892 = vrot.lane.b32.xlu0 %v2403, 24
      %v2893 = vpop.permute.xlu0 %2892
      %2894 = vrot.lane.b32.xlu0 %v2404, 24
      %v2895 = vpop.permute.xlu0 %2894
      %2896 = vrot.lane.b32.xlu0 %v2405, 24
      %v2897 = vpop.permute.xlu0 %2896
      %2898 = vrot.lane.b32.xlu0 %v2406, 24
      %v2899 = vpop.permute.xlu0 %2898
      %2900 = vrot.lane.b32.xlu0 %v2407, 24
      %v2901 = vpop.permute.xlu0 %2900
      %2902 = vrot.lane.b32.xlu0 %v2408, 24
      %v2903 = vpop.permute.xlu0 %2902
      %2904 = vrot.lane.b32.xlu0 %v2409, 24
      %v2905 = vpop.permute.xlu0 %2904
      %2906 = vrot.lane.b32.xlu0 %v2410, 24
      %v2907 = vpop.permute.xlu0 %2906
      %2908 = vrot.lane.b32.xlu0 %v2411, 24
      %v2909 = vpop.permute.xlu0 %2908
      %2910 = vrot.lane.b32.xlu0 %v2412, 24
      %v2911 = vpop.permute.xlu0 %2910
      %2912 = vrot.lane.b32.xlu0 %v2413, 24
      %v2913 = vpop.permute.xlu0 %2912
      %2914 = vrot.lane.b32.xlu0 %v2414, 24
      %v2915 = vpop.permute.xlu0 %2914
      %2916 = vrot.lane.b32.xlu0 %v2415, 24
      %v2917 = vpop.permute.xlu0 %2916
      %2918 = vrot.lane.b32.xlu0 %v2416, 24
      %v2919 = vpop.permute.xlu0 %2918
      %2920 = vrot.lane.b32.xlu0 %v2417, 24
      %v2921 = vpop.permute.xlu0 %2920
      %2922 = vrot.lane.b32.xlu0 %v2418, 24
      %v2923 = vpop.permute.xlu0 %2922
      %2924 = vrot.lane.b32.xlu0 %v2419, 24
      %v2925 = vpop.permute.xlu0 %2924
      %2926 = vrot.lane.b32.xlu0 %v2420, 24
      %v2927 = vpop.permute.xlu0 %2926
      %2928 = vrot.lane.b32.xlu0 %v2421, 24
      %v2929 = vpop.permute.xlu0 %2928
      %2930 = vrot.lane.b32.xlu0 %v2422, 24
      %v2931 = vpop.permute.xlu0 %2930
      %2932 = vrot.lane.b32.xlu0 %v2423, 24
      %v2933 = vpop.permute.xlu0 %2932
      %2934 = vrot.lane.b32.xlu0 %v2424, 24
      %v2935 = vpop.permute.xlu0 %2934
      %2936 = vrot.lane.b32.xlu0 %v2425, 24
      %v2937 = vpop.permute.xlu0 %2936
      %2938 = vrot.lane.b32.xlu0 %v2426, 24
      %v2939 = vpop.permute.xlu0 %2938
      %3004 = vrot.lane.b32.xlu0 %v2427, 32
      %v3005 = vpop.permute.xlu0 %3004
      %3006 = vrot.lane.b32.xlu0 %v2428, 32
      %v3007 = vpop.permute.xlu0 %3006
      %3008 = vrot.lane.b32.xlu0 %v2429, 32
      %v3009 = vpop.permute.xlu0 %3008
      %3010 = vrot.lane.b32.xlu0 %v2430, 32
      %v3011 = vpop.permute.xlu0 %3010
      %3012 = vrot.lane.b32.xlu0 %v2431, 32
      %v3013 = vpop.permute.xlu0 %3012
      %3014 = vrot.lane.b32.xlu0 %v2432, 32
      %v3015 = vpop.permute.xlu0 %3014
      %3016 = vrot.lane.b32.xlu0 %v2433, 32
      %v3017 = vpop.permute.xlu0 %3016
      %3018 = vrot.lane.b32.xlu0 %v2434, 32
      %v3019 = vpop.permute.xlu0 %3018
      %3020 = vrot.lane.b32.xlu0 %v2435, 32
      %v3021 = vpop.permute.xlu0 %3020
      %3022 = vrot.lane.b32.xlu0 %v2436, 32
      %v3023 = vpop.permute.xlu0 %3022
      %3024 = vrot.lane.b32.xlu0 %v2437, 32
      %v3025 = vpop.permute.xlu0 %3024
      %3026 = vrot.lane.b32.xlu0 %v2438, 32
      %v3027 = vpop.permute.xlu0 %3026
      %3028 = vrot.lane.b32.xlu0 %v2439, 32
      %v3029 = vpop.permute.xlu0 %3028
      %3030 = vrot.lane.b32.xlu0 %v2440, 32
      %v3031 = vpop.permute.xlu0 %3030
      %3032 = vrot.lane.b32.xlu0 %v2441, 32
      %v3033 = vpop.permute.xlu0 %3032
      %3034 = vrot.lane.b32.xlu0 %v2442, 32
      %v3035 = vpop.permute.xlu0 %3034
      %3036 = vrot.lane.b32.xlu0 %v2443, 32
      %v3037 = vpop.permute.xlu0 %3036
      %3038 = vrot.lane.b32.xlu0 %v2444, 32
      %v3039 = vpop.permute.xlu0 %3038
      %3040 = vrot.lane.b32.xlu0 %v2445, 32
      %v3041 = vpop.permute.xlu0 %3040
      %3042 = vrot.lane.b32.xlu0 %v2446, 32
      %v3043 = vpop.permute.xlu0 %3042
      %3044 = vrot.lane.b32.xlu0 %v2447, 32
      %v3045 = vpop.permute.xlu0 %3044
      %3046 = vrot.lane.b32.xlu0 %v2448, 32
      %v3047 = vpop.permute.xlu0 %3046
      %3048 = vrot.lane.b32.xlu0 %v2449, 32
      %v3049 = vpop.permute.xlu0 %3048
      %3050 = vrot.lane.b32.xlu0 %v2450, 32
      %v3051 = vpop.permute.xlu0 %3050
      %3052 = vrot.lane.b32.xlu0 %v2451, 32
      %v3053 = vpop.permute.xlu0 %3052
      %3054 = vrot.lane.b32.xlu0 %v2452, 32
      %v3055 = vpop.permute.xlu0 %3054
      %3056 = vrot.lane.b32.xlu0 %v2453, 32
      %v3057 = vpop.permute.xlu0 %3056
      %3058 = vrot.lane.b32.xlu0 %v2454, 32
      %v3059 = vpop.permute.xlu0 %3058
      %3060 = vrot.lane.b32.xlu0 %v2455, 32
      %v3061 = vpop.permute.xlu0 %3060
      %3062 = vrot.lane.b32.xlu0 %v2456, 32
      %v3063 = vpop.permute.xlu0 %3062
      %3064 = vrot.lane.b32.xlu0 %v2457, 32
      %v3065 = vpop.permute.xlu0 %3064
      %3066 = vrot.lane.b32.xlu0 %v2458, 32
      %v3067 = vpop.permute.xlu0 %3066
      %3132 = vrot.lane.b32.xlu0 %v2459, 40
      %v3133 = vpop.permute.xlu0 %3132
      %3134 = vrot.lane.b32.xlu0 %v2460, 40
      %v3135 = vpop.permute.xlu0 %3134
      %3136 = vrot.lane.b32.xlu0 %v2461, 40
      %v3137 = vpop.permute.xlu0 %3136
      %3138 = vrot.lane.b32.xlu0 %v2462, 40
      %v3139 = vpop.permute.xlu0 %3138
      %3140 = vrot.lane.b32.xlu0 %v2463, 40
      %v3141 = vpop.permute.xlu0 %3140
      %3142 = vrot.lane.b32.xlu0 %v2464, 40
      %v3143 = vpop.permute.xlu0 %3142
      %3144 = vrot.lane.b32.xlu0 %v2465, 40
      %v3145 = vpop.permute.xlu0 %3144
      %3146 = vrot.lane.b32.xlu0 %v2466, 40
      %v3147 = vpop.permute.xlu0 %3146
      %3148 = vrot.lane.b32.xlu0 %v2467, 40
      %v3149 = vpop.permute.xlu0 %3148
      %3150 = vrot.lane.b32.xlu0 %v2468, 40
      %v3151 = vpop.permute.xlu0 %3150
      %3152 = vrot.lane.b32.xlu0 %v2469, 40
      %v3153 = vpop.permute.xlu0 %3152
      %3154 = vrot.lane.b32.xlu0 %v2470, 40
      %v3155 = vpop.permute.xlu0 %3154
      %3156 = vrot.lane.b32.xlu0 %v2471, 40
      %v3157 = vpop.permute.xlu0 %3156
      %3158 = vrot.lane.b32.xlu0 %v2472, 40
      %v3159 = vpop.permute.xlu0 %3158
      %3160 = vrot.lane.b32.xlu0 %v2473, 40
      %v3161 = vpop.permute.xlu0 %3160
      %3162 = vrot.lane.b32.xlu0 %v2474, 40
      %v3163 = vpop.permute.xlu0 %3162
      %3164 = vrot.lane.b32.xlu0 %v2475, 40
      %v3165 = vpop.permute.xlu0 %3164
      %3166 = vrot.lane.b32.xlu0 %v2476, 40
      %v3167 = vpop.permute.xlu0 %3166
      %3168 = vrot.lane.b32.xlu0 %v2477, 40
      %v3169 = vpop.permute.xlu0 %3168
      %3170 = vrot.lane.b32.xlu0 %v2478, 40
      %v3171 = vpop.permute.xlu0 %3170
      %3172 = vrot.lane.b32.xlu0 %v2479, 40
      %v3173 = vpop.permute.xlu0 %3172
      %3174 = vrot.lane.b32.xlu0 %v2480, 40
      %v3175 = vpop.permute.xlu0 %3174
      %3176 = vrot.lane.b32.xlu0 %v2481, 40
      %v3177 = vpop.permute.xlu0 %3176
      %3178 = vrot.lane.b32.xlu0 %v2482, 40
      %v3179 = vpop.permute.xlu0 %3178
      %3180 = vrot.lane.b32.xlu0 %v2483, 40
      %v3181 = vpop.permute.xlu0 %3180
      %3182 = vrot.lane.b32.xlu0 %v2484, 40
      %v3183 = vpop.permute.xlu0 %3182
      %3184 = vrot.lane.b32.xlu0 %v2485, 40
      %v3185 = vpop.permute.xlu0 %3184
      %3186 = vrot.lane.b32.xlu0 %v2486, 40
      %v3187 = vpop.permute.xlu0 %3186
      %3188 = vrot.lane.b32.xlu0 %v2487, 40
      %v3189 = vpop.permute.xlu0 %3188
      %3190 = vrot.lane.b32.xlu0 %v2488, 40
      %v3191 = vpop.permute.xlu0 %3190
      %3192 = vrot.lane.b32.xlu0 %v2489, 40
      %v3193 = vpop.permute.xlu0 %3192
      %3194 = vrot.lane.b32.xlu0 %v2490, 40
      %v3195 = vpop.permute.xlu0 %3194
      %3260 = vrot.lane.b32.xlu0 %v2492, 48
      %v3261 = vpop.permute.xlu0 %3260
      %3262 = vrot.lane.b32.xlu0 %v2493, 48
      %v3263 = vpop.permute.xlu0 %3262
      %3264 = vrot.lane.b32.xlu0 %v2494, 48
      %v3265 = vpop.permute.xlu0 %3264
      %3266 = vrot.lane.b32.xlu0 %v2495, 48
      %v3267 = vpop.permute.xlu0 %3266
      %3268 = vrot.lane.b32.xlu0 %v2496, 48
      %v3269 = vpop.permute.xlu0 %3268
      %3270 = vrot.lane.b32.xlu0 %v2497, 48
      %v3271 = vpop.permute.xlu0 %3270
      %3272 = vrot.lane.b32.xlu0 %v2498, 48
      %v3273 = vpop.permute.xlu0 %3272
      %3274 = vrot.lane.b32.xlu0 %v2499, 48
      %v3275 = vpop.permute.xlu0 %3274
      %3276 = vrot.lane.b32.xlu0 %v2500, 48
      %v3277 = vpop.permute.xlu0 %3276
      %3278 = vrot.lane.b32.xlu0 %v2501, 48
      %v3279 = vpop.permute.xlu0 %3278
      %3280 = vrot.lane.b32.xlu0 %v2502, 48
      %v3281 = vpop.permute.xlu0 %3280
      %3282 = vrot.lane.b32.xlu0 %v2503, 48
      %v3283 = vpop.permute.xlu0 %3282
      %3284 = vrot.lane.b32.xlu0 %v2504, 48
      %v3285 = vpop.permute.xlu0 %3284
      %3286 = vrot.lane.b32.xlu0 %v2505, 48
      %v3287 = vpop.permute.xlu0 %3286
      %3288 = vrot.lane.b32.xlu0 %v2506, 48
      %v3289 = vpop.permute.xlu0 %3288
      %3290 = vrot.lane.b32.xlu0 %v2507, 48
      %v3291 = vpop.permute.xlu0 %3290
      %3292 = vrot.lane.b32.xlu0 %v2508, 48
      %v3293 = vpop.permute.xlu0 %3292
      %3294 = vrot.lane.b32.xlu0 %v2509, 48
      %v3295 = vpop.permute.xlu0 %3294
      %3296 = vrot.lane.b32.xlu0 %v2510, 48
      %v3297 = vpop.permute.xlu0 %3296
      %3298 = vrot.lane.b32.xlu0 %v2511, 48
      %v3299 = vpop.permute.xlu0 %3298
      %3300 = vrot.lane.b32.xlu0 %v2512, 48
      %v3301 = vpop.permute.xlu0 %3300
      %3302 = vrot.lane.b32.xlu0 %v2513, 48
      %v3303 = vpop.permute.xlu0 %3302
      %3304 = vrot.lane.b32.xlu0 %v2514, 48
      %v3305 = vpop.permute.xlu0 %3304
      %3306 = vrot.lane.b32.xlu0 %v2515, 48
      %v3307 = vpop.permute.xlu0 %3306
      %3308 = vrot.lane.b32.xlu0 %v2516, 48
      %v3309 = vpop.permute.xlu0 %3308
      %3310 = vrot.lane.b32.xlu0 %v2517, 48
      %v3311 = vpop.permute.xlu0 %3310
      %3312 = vrot.lane.b32.xlu0 %v2518, 48
      %v3313 = vpop.permute.xlu0 %3312
      %3314 = vrot.lane.b32.xlu0 %v2519, 48
      %v3315 = vpop.permute.xlu0 %3314
      %3316 = vrot.lane.b32.xlu0 %v2520, 48
      %v3317 = vpop.permute.xlu0 %3316
      %3318 = vrot.lane.b32.xlu0 %v2521, 48
      %v3319 = vpop.permute.xlu0 %3318
      %3320 = vrot.lane.b32.xlu0 %v2522, 48
      %v3321 = vpop.permute.xlu0 %3320
      %3322 = vrot.lane.b32.xlu0 %v2523, 48
      %v3323 = vpop.permute.xlu0 %3322
      %3388 = vrot.lane.b32.xlu0 %v2524, 56
      %v3389 = vpop.permute.xlu0 %3388
      %3390 = vrot.lane.b32.xlu0 %v2525, 56
      %v3391 = vpop.permute.xlu0 %3390
      %3392 = vrot.lane.b32.xlu0 %v2526, 56
      %v3393 = vpop.permute.xlu0 %3392
      %3394 = vrot.lane.b32.xlu0 %v2527, 56
      %v3395 = vpop.permute.xlu0 %3394
      %3396 = vrot.lane.b32.xlu0 %v2528, 56
      %v3397 = vpop.permute.xlu0 %3396
      %3398 = vrot.lane.b32.xlu0 %v2529, 56
      %v3399 = vpop.permute.xlu0 %3398
      %3400 = vrot.lane.b32.xlu0 %v2530, 56
      %v3401 = vpop.permute.xlu0 %3400
      %3402 = vrot.lane.b32.xlu0 %v2531, 56
      %v3403 = vpop.permute.xlu0 %3402
      %3404 = vrot.lane.b32.xlu0 %v2532, 56
      %v3405 = vpop.permute.xlu0 %3404
      %3406 = vrot.lane.b32.xlu0 %v2533, 56
      %v3407 = vpop.permute.xlu0 %3406
      %3408 = vrot.lane.b32.xlu0 %v2534, 56
      %v3409 = vpop.permute.xlu0 %3408
      %3410 = vrot.lane.b32.xlu0 %v2535, 56
      %v3411 = vpop.permute.xlu0 %3410
      %3412 = vrot.lane.b32.xlu0 %v2536, 56
      %v3413 = vpop.permute.xlu0 %3412
      %3414 = vrot.lane.b32.xlu0 %v2537, 56
      %v3415 = vpop.permute.xlu0 %3414
      %3416 = vrot.lane.b32.xlu0 %v2538, 56
      %v3417 = vpop.permute.xlu0 %3416
      %3418 = vrot.lane.b32.xlu0 %v2539, 56
      %v3419 = vpop.permute.xlu0 %3418
      %3420 = vrot.lane.b32.xlu0 %v2540, 56
      %v3421 = vpop.permute.xlu0 %3420
      %3422 = vrot.lane.b32.xlu0 %v2541, 56
      %v3423 = vpop.permute.xlu0 %3422
      %3424 = vrot.lane.b32.xlu0 %v2542, 56
      %v3425 = vpop.permute.xlu0 %3424
      %3426 = vrot.lane.b32.xlu0 %v2543, 56
      %v3427 = vpop.permute.xlu0 %3426
      %3428 = vrot.lane.b32.xlu0 %v2544, 56
      %v3429 = vpop.permute.xlu0 %3428
      %3430 = vrot.lane.b32.xlu0 %v2545, 56
      %v3431 = vpop.permute.xlu0 %3430
      %3432 = vrot.lane.b32.xlu0 %v2546, 56
      %v3433 = vpop.permute.xlu0 %3432
      %3434 = vrot.lane.b32.xlu0 %v2547, 56
      %v3435 = vpop.permute.xlu0 %3434
      %3436 = vrot.lane.b32.xlu0 %v2548, 56
      %v3437 = vpop.permute.xlu0 %3436
      %3438 = vrot.lane.b32.xlu0 %v2549, 56
      %v3439 = vpop.permute.xlu0 %3438
      %3440 = vrot.lane.b32.xlu0 %v2550, 56
      %v3441 = vpop.permute.xlu0 %3440
      %3442 = vrot.lane.b32.xlu0 %v2551, 56
      %v3443 = vpop.permute.xlu0 %3442
      %3444 = vrot.lane.b32.xlu0 %v2552, 56
      %v3445 = vpop.permute.xlu0 %3444
      %3446 = vrot.lane.b32.xlu0 %v2553, 56
      %v3447 = vpop.permute.xlu0 %3446
      %3448 = vrot.lane.b32.xlu0 %v2554, 56
      %v3449 = vpop.permute.xlu0 %3448
      %3450 = vrot.lane.b32.xlu0 %v2555, 56
      %v3451 = vpop.permute.xlu0 %3450
      %3516 = vrot.lane.b32.xlu0 %v2556, 64
      %v3517 = vpop.permute.xlu0 %3516
      %3518 = vrot.lane.b32.xlu0 %v2557, 64
      %v3519 = vpop.permute.xlu0 %3518
      %3520 = vrot.lane.b32.xlu0 %v2558, 64
      %v3521 = vpop.permute.xlu0 %3520
      %3522 = vrot.lane.b32.xlu0 %v2559, 64
      %v3523 = vpop.permute.xlu0 %3522
      %3524 = vrot.lane.b32.xlu0 %v2560, 64
      %v3525 = vpop.permute.xlu0 %3524
      %3526 = vrot.lane.b32.xlu0 %v2561, 64
      %v3527 = vpop.permute.xlu0 %3526
      %3528 = vrot.lane.b32.xlu0 %v2562, 64
      %v3529 = vpop.permute.xlu0 %3528
      %3530 = vrot.lane.b32.xlu0 %v2563, 64
      %v3531 = vpop.permute.xlu0 %3530
      %3532 = vrot.lane.b32.xlu0 %v2564, 64
      %v3533 = vpop.permute.xlu0 %3532
      %3534 = vrot.lane.b32.xlu0 %v2565, 64
      %v3535 = vpop.permute.xlu0 %3534
      %3536 = vrot.lane.b32.xlu0 %v2566, 64
      %v3537 = vpop.permute.xlu0 %3536
      %3538 = vrot.lane.b32.xlu0 %v2567, 64
      %v3539 = vpop.permute.xlu0 %3538
      %3540 = vrot.lane.b32.xlu0 %v2568, 64
      %v3541 = vpop.permute.xlu0 %3540
      %3542 = vrot.lane.b32.xlu0 %v2569, 64
      %v3543 = vpop.permute.xlu0 %3542
      %3544 = vrot.lane.b32.xlu0 %v2570, 64
      %v3545 = vpop.permute.xlu0 %3544
      %3546 = vrot.lane.b32.xlu0 %v2571, 64
      %v3547 = vpop.permute.xlu0 %3546
      %3548 = vrot.lane.b32.xlu0 %v2572, 64
      %v3549 = vpop.permute.xlu0 %3548
      %3550 = vrot.lane.b32.xlu0 %v2573, 64
      %v3551 = vpop.permute.xlu0 %3550
      %3552 = vrot.lane.b32.xlu0 %v2574, 64
      %v3553 = vpop.permute.xlu0 %3552
      %3554 = vrot.lane.b32.xlu0 %v2575, 64
      %v3555 = vpop.permute.xlu0 %3554
      %3556 = vrot.lane.b32.xlu0 %v2576, 64
      %v3557 = vpop.permute.xlu0 %3556
      %3558 = vrot.lane.b32.xlu0 %v2577, 64
      %v3559 = vpop.permute.xlu0 %3558
      %3560 = vrot.lane.b32.xlu0 %v2578, 64
      %v3561 = vpop.permute.xlu0 %3560
      %3562 = vrot.lane.b32.xlu0 %v2579, 64
      %v3563 = vpop.permute.xlu0 %3562
      %3564 = vrot.lane.b32.xlu0 %v2580, 64
      %v3565 = vpop.permute.xlu0 %3564
      %3566 = vrot.lane.b32.xlu0 %v2581, 64
      %v3567 = vpop.permute.xlu0 %3566
      %3568 = vrot.lane.b32.xlu0 %v2582, 64
      %v3569 = vpop.permute.xlu0 %3568
      %3570 = vrot.lane.b32.xlu0 %v2583, 64
      %v3571 = vpop.permute.xlu0 %3570
      %3572 = vrot.lane.b32.xlu0 %v2584, 64
      %v3573 = vpop.permute.xlu0 %3572
      %3574 = vrot.lane.b32.xlu0 %v2585, 64
      %v3575 = vpop.permute.xlu0 %3574
      %3576 = vrot.lane.b32.xlu0 %v2586, 64
      %v3577 = vpop.permute.xlu0 %3576
      %3578 = vrot.lane.b32.xlu0 %v2587, 64
      %v3579 = vpop.permute.xlu0 %3578
      %v3612 = vsel %vm1708, %v2299, %v2621
      %v3613 = vsel %vm1708, %v2300, %v2623
      %v3614 = vsel %vm1708, %v2301, %v2625
      %v3615 = vsel %vm1708, %v2302, %v2627
      %v3616 = vsel %vm1708, %v2303, %v2629
      %v3617 = vsel %vm1708, %v2304, %v2631
      %v3618 = vsel %vm1708, %v2305, %v2633
      %v3619 = vsel %vm1708, %v2306, %v2635
      %v3620 = vsel %vm1708, %v2307, %v2637
      %v3621 = vsel %vm1708, %v2308, %v2639
      %v3622 = vsel %vm1708, %v2309, %v2641
      %v3623 = vsel %vm1708, %v2310, %v2643
      %v3624 = vsel %vm1708, %v2311, %v2645
      %v3625 = vsel %vm1708, %v2312, %v2647
      %v3626 = vsel %vm1708, %v2313, %v2649
      %v3627 = vsel %vm1708, %v2314, %v2651
      %v3628 = vsel %vm1708, %v2315, %v2653
      %v3629 = vsel %vm1708, %v2316, %v2655
      %v3630 = vsel %vm1708, %v2317, %v2657
      %v3631 = vsel %vm1708, %v2318, %v2659
      %v3632 = vsel %vm1708, %v2319, %v2661
      %v3633 = vsel %vm1708, %v2320, %v2663
      %v3634 = vsel %vm1708, %v2321, %v2665
      %v3635 = vsel %vm1708, %v2322, %v2667
      %v3636 = vsel %vm1708, %v2323, %v2669
      %v3637 = vsel %vm1708, %v2324, %v2671
      %v3638 = vsel %vm1708, %v2325, %v2673
      %v3639 = vsel %vm1708, %v2326, %v2675
      %v3640 = vsel %vm1708, %v2327, %v2677
      %v3641 = vsel %vm1708, %v2328, %v2679
      %v3642 = vsel %vm1708, %v2329, %v2681
      %v3643 = vsel %vm1708, %v2330, %v2683
      %v3644 = vsel %vm1774, %v3612, %v2749
      %v3645 = vsel %vm1774, %v3613, %v2751
      %v3646 = vsel %vm1774, %v3614, %v2753
      %v3647 = vsel %vm1774, %v3615, %v2755
      %v3648 = vsel %vm1774, %v3616, %v2757
      %v3649 = vsel %vm1774, %v3617, %v2759
      %v3650 = vsel %vm1774, %v3618, %v2761
      %v3651 = vsel %vm1774, %v3619, %v2763
      %v3652 = vsel %vm1774, %v3620, %v2765
      %v3653 = vsel %vm1774, %v3621, %v2767
      %v3654 = vsel %vm1774, %v3622, %v2769
      %v3655 = vsel %vm1774, %v3623, %v2771
      %v3656 = vsel %vm1774, %v3624, %v2773
      %v3657 = vsel %vm1774, %v3625, %v2775
      %v3658 = vsel %vm1774, %v3626, %v2777
      %v3659 = vsel %vm1774, %v3627, %v2779
      %v3660 = vsel %vm1774, %v3628, %v2781
      %v3661 = vsel %vm1774, %v3629, %v2783
      %v3662 = vsel %vm1774, %v3630, %v2785
      %v3663 = vsel %vm1774, %v3631, %v2787
      %v3664 = vsel %vm1774, %v3632, %v2789
      %v3665 = vsel %vm1774, %v3633, %v2791
      %v3666 = vsel %vm1774, %v3634, %v2793
      %v3667 = vsel %vm1774, %v3635, %v2795
      %v3668 = vsel %vm1774, %v3636, %v2797
      %v3669 = vsel %vm1774, %v3637, %v2799
      %v3670 = vsel %vm1774, %v3638, %v2801
      %v3671 = vsel %vm1774, %v3639, %v2803
      %v3672 = vsel %vm1774, %v3640, %v2805
      %v3673 = vsel %vm1774, %v3641, %v2807
      %v3674 = vsel %vm1774, %v3642, %v2809
      %v3675 = vsel %vm1774, %v3643, %v2811
      %v3676 = vsel %vm1840, %v3644, %v2877
      %v3677 = vsel %vm1840, %v3645, %v2879
      %v3678 = vsel %vm1840, %v3646, %v2881
      %v3679 = vsel %vm1840, %v3647, %v2883
      %v3680 = vsel %vm1840, %v3648, %v2885
      %v3681 = vsel %vm1840, %v3649, %v2887
      %v3682 = vsel %vm1840, %v3650, %v2889
      %v3683 = vsel %vm1840, %v3651, %v2891
      %v3684 = vsel %vm1840, %v3652, %v2893
      %v3685 = vsel %vm1840, %v3653, %v2895
      %v3686 = vsel %vm1840, %v3654, %v2897
      %v3687 = vsel %vm1840, %v3655, %v2899
      %v3688 = vsel %vm1840, %v3656, %v2901
      %v3689 = vsel %vm1840, %v3657, %v2903
      %v3690 = vsel %vm1840, %v3658, %v2905
      %v3691 = vsel %vm1840, %v3659, %v2907
      %v3692 = vsel %vm1840, %v3660, %v2909
      %v3693 = vsel %vm1840, %v3661, %v2911
      %v3694 = vsel %vm1840, %v3662, %v2913
      %v3695 = vsel %vm1840, %v3663, %v2915
      %v3696 = vsel %vm1840, %v3664, %v2917
      %v3697 = vsel %vm1840, %v3665, %v2919
      %v3698 = vsel %vm1840, %v3666, %v2921
      %v3699 = vsel %vm1840, %v3667, %v2923
      %v3700 = vsel %vm1840, %v3668, %v2925
      %v3701 = vsel %vm1840, %v3669, %v2927
      %v3702 = vsel %vm1840, %v3670, %v2929
      %v3703 = vsel %vm1840, %v3671, %v2931
      %v3704 = vsel %vm1840, %v3672, %v2933
      %v3705 = vsel %vm1840, %v3673, %v2935
      %v3706 = vsel %vm1840, %v3674, %v2937
      %v3707 = vsel %vm1840, %v3675, %v2939
      %v3708 = vsel %vm1906, %v3676, %v3005
      %v3709 = vsel %vm1906, %v3677, %v3007
      %v3710 = vsel %vm1906, %v3678, %v3009
      %v3711 = vsel %vm1906, %v3679, %v3011
      %v3712 = vsel %vm1906, %v3680, %v3013
      %v3713 = vsel %vm1906, %v3681, %v3015
      %v3714 = vsel %vm1906, %v3682, %v3017
      %v3715 = vsel %vm1906, %v3683, %v3019
      %v3716 = vsel %vm1906, %v3684, %v3021
      %v3717 = vsel %vm1906, %v3685, %v3023
      %v3718 = vsel %vm1906, %v3686, %v3025
      %v3719 = vsel %vm1906, %v3687, %v3027
      %v3720 = vsel %vm1906, %v3688, %v3029
      %v3721 = vsel %vm1906, %v3689, %v3031
      %v3722 = vsel %vm1906, %v3690, %v3033
      %v3723 = vsel %vm1906, %v3691, %v3035
      %v3724 = vsel %vm1906, %v3692, %v3037
      %v3725 = vsel %vm1906, %v3693, %v3039
      %v3726 = vsel %vm1906, %v3694, %v3041
      %v3727 = vsel %vm1906, %v3695, %v3043
      %v3728 = vsel %vm1906, %v3696, %v3045
      %v3729 = vsel %vm1906, %v3697, %v3047
      %v3730 = vsel %vm1906, %v3698, %v3049
      %v3731 = vsel %vm1906, %v3699, %v3051
      %v3732 = vsel %vm1906, %v3700, %v3053
      %v3733 = vsel %vm1906, %v3701, %v3055
      %v3734 = vsel %vm1906, %v3702, %v3057
      %v3735 = vsel %vm1906, %v3703, %v3059
      %v3736 = vsel %vm1906, %v3704, %v3061
      %v3737 = vsel %vm1906, %v3705, %v3063
      %v3738 = vsel %vm1906, %v3706, %v3065
      %v3739 = vsel %vm1906, %v3707, %v3067
      %vm3740 = vcmask 326656
      %v3741 = vsel %vm3740, %v3708, %v3133
      %v3742 = vsel %vm3740, %v3709, %v3135
      %v3743 = vsel %vm3740, %v3710, %v3137
      %v3744 = vsel %vm3740, %v3711, %v3139
      %v3745 = vsel %vm3740, %v3712, %v3141
      %v3746 = vsel %vm3740, %v3713, %v3143
      %v3747 = vsel %vm3740, %v3714, %v3145
      %v3748 = vsel %vm3740, %v3715, %v3147
      %v3749 = vsel %vm3740, %v3716, %v3149
      %v3750 = vsel %vm3740, %v3717, %v3151
      %v3751 = vsel %vm3740, %v3718, %v3153
      %v3752 = vsel %vm3740, %v3719, %v3155
      %v3753 = vsel %vm3740, %v3720, %v3157
      %v3754 = vsel %vm3740, %v3721, %v3159
      %v3755 = vsel %vm3740, %v3722, %v3161
      %v3756 = vsel %vm3740, %v3723, %v3163
      %v3757 = vsel %vm3740, %v3724, %v3165
      %v3758 = vsel %vm3740, %v3725, %v3167
      %v3759 = vsel %vm3740, %v3726, %v3169
      %v3760 = vsel %vm3740, %v3727, %v3171
      %v3761 = vsel %vm3740, %v3728, %v3173
      %v3762 = vsel %vm3740, %v3729, %v3175
      %v3763 = vsel %vm3740, %v3730, %v3177
      %v3764 = vsel %vm3740, %v3731, %v3179
      %v3765 = vsel %vm3740, %v3732, %v3181
      %v3766 = vsel %vm3740, %v3733, %v3183
      %v3767 = vsel %vm3740, %v3734, %v3185
      %v3768 = vsel %vm3740, %v3735, %v3187
      %v3769 = vsel %vm3740, %v3736, %v3189
      %v3770 = vsel %vm3740, %v3737, %v3191
      %v3771 = vsel %vm3740, %v3738, %v3193
      %v3772 = vsel %vm3740, %v3739, %v3195
      %vm3773 = vcmask 392192
      %v3774 = vsel %vm3773, %v3741, %v3261
      %v3775 = vsel %vm3773, %v3742, %v3263
      %v3776 = vsel %vm3773, %v3743, %v3265
      %v3777 = vsel %vm3773, %v3744, %v3267
      %v3778 = vsel %vm3773, %v3745, %v3269
      %v3779 = vsel %vm3773, %v3746, %v3271
      %v3780 = vsel %vm3773, %v3747, %v3273
      %v3781 = vsel %vm3773, %v3748, %v3275
      %v3782 = vsel %vm3773, %v3749, %v3277
      %v3783 = vsel %vm3773, %v3750, %v3279
      %v3784 = vsel %vm3773, %v3751, %v3281
      %v3785 = vsel %vm3773, %v3752, %v3283
      %v3786 = vsel %vm3773, %v3753, %v3285
      %v3787 = vsel %vm3773, %v3754, %v3287
      %v3788 = vsel %vm3773, %v3755, %v3289
      %v3789 = vsel %vm3773, %v3756, %v3291
      %v3790 = vsel %vm3773, %v3757, %v3293
      %v3791 = vsel %vm3773, %v3758, %v3295
      %v3792 = vsel %vm3773, %v3759, %v3297
      %v3793 = vsel %vm3773, %v3760, %v3299
      %v3794 = vsel %vm3773, %v3761, %v3301
      %v3795 = vsel %vm3773, %v3762, %v3303
      %v3796 = vsel %vm3773, %v3763, %v3305
      %v3797 = vsel %vm3773, %v3764, %v3307
      %v3798 = vsel %vm3773, %v3765, %v3309
      %v3799 = vsel %vm3773, %v3766, %v3311
      %v3800 = vsel %vm3773, %v3767, %v3313
      %v3801 = vsel %vm3773, %v3768, %v3315
      %v3802 = vsel %vm3773, %v3769, %v3317
      %v3803 = vsel %vm3773, %v3770, %v3319
      %v3804 = vsel %vm3773, %v3771, %v3321
      %v3805 = vsel %vm3773, %v3772, %v3323
      %vm3806 = vcmask 457728
      %v3807 = vsel %vm3806, %v3774, %v3389
      %v3808 = vsel %vm3806, %v3775, %v3391
      %v3809 = vsel %vm3806, %v3776, %v3393
      %v3810 = vsel %vm3806, %v3777, %v3395
      %v3811 = vsel %vm3806, %v3778, %v3397
      %v3812 = vsel %vm3806, %v3779, %v3399
      %v3813 = vsel %vm3806, %v3780, %v3401
      %v3814 = vsel %vm3806, %v3781, %v3403
      %v3815 = vsel %vm3806, %v3782, %v3405
      %v3816 = vsel %vm3806, %v3783, %v3407
      %v3817 = vsel %vm3806, %v3784, %v3409
      %v3818 = vsel %vm3806, %v3785, %v3411
      %v3819 = vsel %vm3806, %v3786, %v3413
      %v3820 = vsel %vm3806, %v3787, %v3415
      %v3821 = vsel %vm3806, %v3788, %v3417
      %v3822 = vsel %vm3806, %v3789, %v3419
      %v3823 = vsel %vm3806, %v3790, %v3421
      %v3824 = vsel %vm3806, %v3791, %v3423
      %v3825 = vsel %vm3806, %v3792, %v3425
      %v3826 = vsel %vm3806, %v3793, %v3427
      %v3827 = vsel %vm3806, %v3794, %v3429
      %v3828 = vsel %vm3806, %v3795, %v3431
      %v3829 = vsel %vm3806, %v3796, %v3433
      %v3830 = vsel %vm3806, %v3797, %v3435
      %v3831 = vsel %vm3806, %v3798, %v3437
      %v3832 = vsel %vm3806, %v3799, %v3439
      %v3833 = vsel %vm3806, %v3800, %v3441
      %v3834 = vsel %vm3806, %v3801, %v3443
      %v3835 = vsel %vm3806, %v3802, %v3445
      %v3836 = vsel %vm3806, %v3803, %v3447
      %v3837 = vsel %vm3806, %v3804, %v3449
      %v3838 = vsel %vm3806, %v3805, %v3451
      %vm3839 = vcmask 523264
      %v3840 = vsel %vm3839, %v3807, %v3517
      %v3841 = vsel %vm3839, %v3808, %v3519
      %v3842 = vsel %vm3839, %v3809, %v3521
      %v3843 = vsel %vm3839, %v3810, %v3523
      %v3844 = vsel %vm3839, %v3811, %v3525
      %v3845 = vsel %vm3839, %v3812, %v3527
      %v3846 = vsel %vm3839, %v3813, %v3529
      %v3847 = vsel %vm3839, %v3814, %v3531
      %v3848 = vsel %vm3839, %v3815, %v3533
      %v3849 = vsel %vm3839, %v3816, %v3535
      %v3850 = vsel %vm3839, %v3817, %v3537
      %v3851 = vsel %vm3839, %v3818, %v3539
      %v3852 = vsel %vm3839, %v3819, %v3541
      %v3853 = vsel %vm3839, %v3820, %v3543
      %v3854 = vsel %vm3839, %v3821, %v3545
      %v3855 = vsel %vm3839, %v3822, %v3547
      %v3856 = vsel %vm3839, %v3823, %v3549
      %v3857 = vsel %vm3839, %v3824, %v3551
      %v3858 = vsel %vm3839, %v3825, %v3553
      %v3859 = vsel %vm3839, %v3826, %v3555
      %v3860 = vsel %vm3839, %v3827, %v3557
      %v3861 = vsel %vm3839, %v3828, %v3559
      %v3862 = vsel %vm3839, %v3829, %v3561
      %v3863 = vsel %vm3839, %v3830, %v3563
      %v3864 = vsel %vm3839, %v3831, %v3565
      %v3865 = vsel %vm3839, %v3832, %v3567
      %v3866 = vsel %vm3839, %v3833, %v3569
      %v3867 = vsel %vm3839, %v3834, %v3571
      %v3868 = vsel %vm3839, %v3835, %v3573
      %v3869 = vsel %vm3839, %v3836, %v3575
      %v3870 = vsel %vm3839, %v3837, %v3577
      %v3871 = vsel %vm3839, %v3838, %v3579
      %v3872 = vld [vmem:[%s3] sm:$0xff]
      %v3873 = vld [vmem:[%s3 + $0x8] sm:$0xff]
      %v3874 = vld [vmem:[%s3 + $0x10] sm:$0xff]
      %v3875 = vld [vmem:[%s3 + $0x18] sm:$0xff]
      %v3876 = vld [vmem:[%s3 + $0x20] sm:$0xff]
      %v3877 = vld [vmem:[%s3 + $0x28] sm:$0xff]
      %v3878 = vld [vmem:[%s3 + $0x30] sm:$0xff]
      %v3879 = vld [vmem:[%s3 + $0x38] sm:$0xff]
      %v3880 = vld [vmem:[%s3 + $0x40] sm:$0xff]
      %v3881 = vld [vmem:[%s4] sm:$0x1]
      %v3883 = vperm.slane %v3881, 0
      %vm3885 = vcmask 588800
      %v3887 = vsel %vm3885, %v3840, 0
      %v3890 = vsel %vm3885, %v3841, 0
      %v3893 = vsel %vm3885, %v3842, 0
      %v3896 = vsel %vm3885, %v3843, 0
      %v3899 = vsel %vm3885, %v3844, 0
      %v3902 = vsel %vm3885, %v3845, 0
      %v3905 = vsel %vm3885, %v3846, 0
      %v3908 = vsel %vm3885, %v3847, 0
      %v3911 = vsel %vm3885, %v3848, 0
      %v3914 = vsel %vm3885, %v3849, 0
      %v3917 = vsel %vm3885, %v3850, 0
      %v3920 = vsel %vm3885, %v3851, 0
      %v3923 = vsel %vm3885, %v3852, 0
      %v3926 = vsel %vm3885, %v3853, 0
      %v3929 = vsel %vm3885, %v3854, 0
      %v3932 = vsel %vm3885, %v3855, 0
      %v3935 = vsel %vm3885, %v3856, 0
      %v3938 = vsel %vm3885, %v3857, 0
      %v3941 = vsel %vm3885, %v3858, 0
      %v3944 = vsel %vm3885, %v3859, 0
      %v3947 = vsel %vm3885, %v3860, 0
      %v3950 = vsel %vm3885, %v3861, 0
      %v3953 = vsel %vm3885, %v3862, 0
      %v3956 = vsel %vm3885, %v3863, 0
      %v3959 = vsel %vm3885, %v3864, 0
      %v3962 = vsel %vm3885, %v3865, 0
      %v3965 = vsel %vm3885, %v3866, 0
      %v3968 = vsel %vm3885, %v3867, 0
      %v3971 = vsel %vm3885, %v3868, 0
      %v3974 = vsel %vm3885, %v3869, 0
      %v3977 = vsel %vm3885, %v3870, 0
      %v3980 = vsel %vm3885, %v3871, 0
      %3982 = vmatpush.msra.mxu0 0.0
      %3983 = vmatpush.msra.mxu0 0.0
      %3984 = vmatpush.msra.mxu0 0.0
      %3985 = vmatpush.msra.mxu0 0.0
      %3986 = vmatpush.msra.mxu0 0.0
      %3987 = vmatpush.msra.mxu0 0.0
      %3988 = vmatpush.msra.mxu0 0.0
      %3989 = vmatpush.msra.mxu0 %v3880
      %3990 = vmatpush.msra.mxu0 %v3879
      %3991 = vmatpush.msra.mxu0 %v3878
      %3992 = vmatpush.msra.mxu0 %v3877
      %3993 = vmatpush.msra.mxu0 %v3876
      %3994 = vmatpush.msra.mxu0 %v3875
      %3995 = vmatpush.msra.mxu0 %v3874
      %3996 = vmatpush.msra.mxu0 %v3873
      %3997 = vmatpush.msra.mxu0 %v3872
      %3998 = vmatmul.f32.gmra.mxu0 %v3887
      %v3999 = vpop.f32.mrf.mxu0
      %v4000 = vadd.f32 %v3883, %v3999
      %4001 = vmatmul.f32.gmra.mxu0 %v3890
      %v4002 = vpop.f32.mrf.mxu0
      %v4003 = vadd.f32 %v3883, %v4002
      %4004 = vmatmul.f32.gmra.mxu0 %v3893
      %v4005 = vpop.f32.mrf.mxu0
      %v4006 = vadd.f32 %v3883, %v4005
      %4007 = vmatmul.f32.gmra.mxu0 %v3896
      %v4008 = vpop.f32.mrf.mxu0
      %v4009 = vadd.f32 %v3883, %v4008
      %4010 = vmatmul.f32.gmra.mxu0 %v3899
      %v4011 = vpop.f32.mrf.mxu0
      %v4012 = vadd.f32 %v3883, %v4011
      %4013 = vmatmul.f32.gmra.mxu0 %v3902
      %v4014 = vpop.f32.mrf.mxu0
      %v4015 = vadd.f32 %v3883, %v4014
      %4016 = vmatmul.f32.gmra.mxu0 %v3905
      %v4017 = vpop.f32.mrf.mxu0
      %v4018 = vadd.f32 %v3883, %v4017
      %4019 = vmatmul.f32.gmra.mxu0 %v3908
      %v4020 = vpop.f32.mrf.mxu0
      %v4021 = vadd.f32 %v3883, %v4020
      %4022 = vmatmul.f32.gmra.mxu0 %v3911
      %v4023 = vpop.f32.mrf.mxu0
      %v4024 = vadd.f32 %v3883, %v4023
      %4025 = vmatmul.f32.gmra.mxu0 %v3914
      %v4026 = vpop.f32.mrf.mxu0
      %v4027 = vadd.f32 %v3883, %v4026
      %4028 = vmatmul.f32.gmra.mxu0 %v3917
      %v4029 = vpop.f32.mrf.mxu0
      %v4030 = vadd.f32 %v3883, %v4029
      %4031 = vmatmul.f32.gmra.mxu0 %v3920
      %v4032 = vpop.f32.mrf.mxu0
      %v4033 = vadd.f32 %v3883, %v4032
      %4034 = vmatmul.f32.gmra.mxu0 %v3923
      %v4035 = vpop.f32.mrf.mxu0
      %v4036 = vadd.f32 %v3883, %v4035
      %4037 = vmatmul.f32.gmra.mxu0 %v3926
      %v4038 = vpop.f32.mrf.mxu0
      %v4039 = vadd.f32 %v3883, %v4038
      %4040 = vmatmul.f32.gmra.mxu0 %v3929
      %v4041 = vpop.f32.mrf.mxu0
      %v4042 = vadd.f32 %v3883, %v4041
      %4043 = vmatmul.f32.gmra.mxu0 %v3932
      %v4044 = vpop.f32.mrf.mxu0
      %v4045 = vadd.f32 %v3883, %v4044
      %4046 = vmatmul.f32.gmra.mxu0 %v3935
      %v4047 = vpop.f32.mrf.mxu0
      %v4048 = vadd.f32 %v3883, %v4047
      %4049 = vmatmul.f32.gmra.mxu0 %v3938
      %v4050 = vpop.f32.mrf.mxu0
      %v4051 = vadd.f32 %v3883, %v4050
      %4052 = vmatmul.f32.gmra.mxu0 %v3941
      %v4053 = vpop.f32.mrf.mxu0
      %v4054 = vadd.f32 %v3883, %v4053
      %4055 = vmatmul.f32.gmra.mxu0 %v3944
      %v4056 = vpop.f32.mrf.mxu0
      %v4057 = vadd.f32 %v3883, %v4056
      %4058 = vmatmul.f32.gmra.mxu0 %v3947
      %v4059 = vpop.f32.mrf.mxu0
      %v4060 = vadd.f32 %v3883, %v4059
      %4061 = vmatmul.f32.gmra.mxu0 %v3950
      %v4062 = vpop.f32.mrf.mxu0
      %v4063 = vadd.f32 %v3883, %v4062
      %4064 = vmatmul.f32.gmra.mxu0 %v3953
      %v4065 = vpop.f32.mrf.mxu0
      %v4066 = vadd.f32 %v3883, %v4065
      %4067 = vmatmul.f32.gmra.mxu0 %v3956
      %v4068 = vpop.f32.mrf.mxu0
      %v4069 = vadd.f32 %v3883, %v4068
      %4070 = vmatmul.f32.gmra.mxu0 %v3959
      %v4071 = vpop.f32.mrf.mxu0
      %v4072 = vadd.f32 %v3883, %v4071
      %4073 = vmatmul.f32.gmra.mxu0 %v3962
      %v4074 = vpop.f32.mrf.mxu0
      %v4075 = vadd.f32 %v3883, %v4074
      %4076 = vmatmul.f32.gmra.mxu0 %v3965
      %v4077 = vpop.f32.mrf.mxu0
      %v4078 = vadd.f32 %v3883, %v4077
      %4079 = vmatmul.f32.gmra.mxu0 %v3968
      %v4080 = vpop.f32.mrf.mxu0
      %v4081 = vadd.f32 %v3883, %v4080
      %4082 = vmatmul.f32.gmra.mxu0 %v3971
      %v4083 = vpop.f32.mrf.mxu0
      %v4084 = vadd.f32 %v3883, %v4083
      %4085 = vmatmul.f32.gmra.mxu0 %v3974
      %v4086 = vpop.f32.mrf.mxu0
      %v4087 = vadd.f32 %v3883, %v4086
      %4088 = vmatmul.f32.gmra.mxu0 %v3977
      %v4089 = vpop.f32.mrf.mxu0
      %v4090 = vadd.f32 %v3883, %v4089
      %4091 = vmatmul.f32.gmra.mxu0 %v3980
      %v4092 = vpop.f32.mrf.mxu0
      %v4093 = vadd.f32 %v3883, %v4092
      %4094 = vdwg.mxu0
      %v4095 = vmax.f32 %v4000, 0.0
      %v4096 = vmax.f32 %v4003, 0.0
      %v4097 = vmax.f32 %v4006, 0.0
      %v4098 = vmax.f32 %v4009, 0.0
      %v4099 = vmax.f32 %v4012, 0.0
      %v4100 = vmax.f32 %v4015, 0.0
      %v4101 = vmax.f32 %v4018, 0.0
      %v4102 = vmax.f32 %v4021, 0.0
      %v4103 = vmax.f32 %v4024, 0.0
      %v4104 = vmax.f32 %v4027, 0.0
      %v4105 = vmax.f32 %v4030, 0.0
      %v4106 = vmax.f32 %v4033, 0.0
      %v4107 = vmax.f32 %v4036, 0.0
      %v4108 = vmax.f32 %v4039, 0.0
      %v4109 = vmax.f32 %v4042, 0.0
      %v4110 = vmax.f32 %v4045, 0.0
      %v4111 = vmax.f32 %v4048, 0.0
      %v4112 = vmax.f32 %v4051, 0.0
      %v4113 = vmax.f32 %v4054, 0.0
      %v4114 = vmax.f32 %v4057, 0.0
      %v4115 = vmax.f32 %v4060, 0.0
      %v4116 = vmax.f32 %v4063, 0.0
      %v4117 = vmax.f32 %v4066, 0.0
      %v4118 = vmax.f32 %v4069, 0.0
      %v4119 = vmax.f32 %v4072, 0.0
      %v4120 = vmax.f32 %v4075, 0.0
      %v4121 = vmax.f32 %v4078, 0.0
      %v4122 = vmax.f32 %v4081, 0.0
      %v4123 = vmax.f32 %v4084, 0.0
      %v4124 = vmax.f32 %v4087, 0.0
      %v4125 = vmax.f32 %v4090, 0.0
      %v4126 = vmax.f32 %v4093, 0.0
      %4127 = vst.msk [vmem:[%s224] sm:$0xff] %vm1708, %v4095
      %4128 = vst.msk [vmem:[%s224 + $0x8] sm:$0xff] %vm1708, %v4096
      %4129 = vst.msk [vmem:[%s224 + $0x10] sm:$0xff] %vm1708, %v4097
      %4130 = vst.msk [vmem:[%s224 + $0x18] sm:$0xff] %vm1708, %v4098
      %4131 = vst.msk [vmem:[%s224 + $0x20] sm:$0xff] %vm1708, %v4099
      %4132 = vst.msk [vmem:[%s224 + $0x28] sm:$0xff] %vm1708, %v4100
      %4133 = vst.msk [vmem:[%s224 + $0x30] sm:$0xff] %vm1708, %v4101
      %4134 = vst.msk [vmem:[%s224 + $0x38] sm:$0xff] %vm1708, %v4102
      %4135 = vst.msk [vmem:[%s224 + $0x40] sm:$0xff] %vm1708, %v4103
      %4136 = vst.msk [vmem:[%s224 + $0x48] sm:$0xff] %vm1708, %v4104
      %4137 = vst.msk [vmem:[%s224 + $0x50] sm:$0xff] %vm1708, %v4105
      %4138 = vst.msk [vmem:[%s224 + $0x58] sm:$0xff] %vm1708, %v4106
      %4139 = vst.msk [vmem:[%s224 + $0x60] sm:$0xff] %vm1708, %v4107
      %4140 = vst.msk [vmem:[%s224 + $0x68] sm:$0xff] %vm1708, %v4108
      %4141 = vst.msk [vmem:[%s224 + $0x70] sm:$0xff] %vm1708, %v4109
      %4142 = vst.msk [vmem:[%s224 + $0x78] sm:$0xff] %vm1708, %v4110
      %4143 = vst.msk [vmem:[%s224 + $0x80] sm:$0xff] %vm1708, %v4111
      %4144 = vst.msk [vmem:[%s224 + $0x88] sm:$0xff] %vm1708, %v4112
      %4145 = vst.msk [vmem:[%s224 + $0x90] sm:$0xff] %vm1708, %v4113
      %4146 = vst.msk [vmem:[%s224 + $0x98] sm:$0xff] %vm1708, %v4114
      %4147 = vst.msk [vmem:[%s224 + $0xa0] sm:$0xff] %vm1708, %v4115
      %4148 = vst.msk [vmem:[%s224 + $0xa8] sm:$0xff] %vm1708, %v4116
      %4149 = vst.msk [vmem:[%s224 + $0xb0] sm:$0xff] %vm1708, %v4117
      %4150 = vst.msk [vmem:[%s224 + $0xb8] sm:$0xff] %vm1708, %v4118
      %4151 = vst.msk [vmem:[%s224 + $0xc0] sm:$0xff] %vm1708, %v4119
      %4152 = vst.msk [vmem:[%s224 + $0xc8] sm:$0xff] %vm1708, %v4120
      %4153 = vst.msk [vmem:[%s224 + $0xd0] sm:$0xff] %vm1708, %v4121
      %4154 = vst.msk [vmem:[%s224 + $0xd8] sm:$0xff] %vm1708, %v4122
      %4155 = vst.msk [vmem:[%s224 + $0xe0] sm:$0xff] %vm1708, %v4123
      %4156 = vst.msk [vmem:[%s224 + $0xe8] sm:$0xff] %vm1708, %v4124
      %4157 = vst.msk [vmem:[%s224 + $0xf0] sm:$0xff] %vm1708, %v4125
      %4158 = vst.msk [vmem:[%s224 + $0xf8] sm:$0xff] %vm1708, %v4126
      %p4159 = scmp.lt.s32.totalorder %s16, 1
      %s4160 = scalar_select %p4159, %s16, 1
      %s4161 = smul.addr %s4160, 32
      %s4162 = smul.addr %s4161, 8
      %s4163 = scalar_lea.vmem %s5, %s4162
      // Predicated region
      $region41: #{conv_block_forward.1} parent=39 // pred_check
        %p4164 = pneg %p144
      $region42: #{conv_block_forward.1} parent=39 // pred_check_branch
        %4166 = sbr.rel (%p4164) target = $region44
      $region43: #{conv_block_forward.1} parent=39 // pred_region
        _
      $region44: #{conv_block_forward.1} parent=39 // pred_fallthru
        _
    $region40: #{conv_block_forward.1} parent=5 // pred_fallthru
      _
    %p4167 = scmp.le.s32.totalorder 2, %s11
    // Predicated region
    $region45: #{conv_block_forward.1} parent=5 // pred_check
      %p4168 = pneg %p4167
    $region46: #{conv_block_forward.1} parent=5 // pred_check_branch
      %4170 = sbr.rel (%p4168) target = $region48
    $region47: #{conv_block_forward.1} parent=5 // pred_region
      %s4171 = ssub.s32 %s11, 2
      // Predicated region
      $region49: #{conv_block_forward.1} parent=47 // pred_check
        %p4172 = pneg %p150
      $region50: #{conv_block_forward.1} parent=47 // pred_check_branch
        %4174 = sbr.rel (%p4172) target = $region52
      $region51: #{conv_block_forward.1} parent=47 // pred_region
        %p4175 = scmp.lt.s32.totalorder %s17, 1
        %s4176 = scalar_select %p4175, %s17, 1
        %s4177 = smul.addr %s4176, 32
        %s4178 = smul.addr %s4177, 8
        %s4179 = scalar_lea.vmem %s5, %s4178
      $region52: #{conv_block_forward.1} parent=47 // pred_fallthru
        _
    $region48: #{conv_block_forward.1} parent=5 // pred_fallthru
      _
  $region6: #{conv_block_forward.1} parent=0 // loop_footer
    %s15 = sadd.s32 1, %s11
  $region7: #{conv_block_forward.1} parent=0 // loop_footer_branch
    %10 = sbr.rel target = $region3
  $region8: #{conv_block_forward.1} parent=0 // loop_exit
    _

</llo_original>
